<compile_context>
chip_gen: v6e
topology: v6e:2x2x1
jax: 0.10.0
libtpu: 0.0.40
codegen_flags: <defaults>
</compile_context>

<pallas_src>
import jax
import jax.numpy as jnp
from jax.experimental import pallas as pl
from jax.experimental.pallas import tpu as pltpu

BN_EPS = 1e-5
LANE = 128
SUBLANE = 8
MAX_ROW_TILE = 512                       # ~85% of HBM roofline at 512-1024
VMEM_LIMIT_BYTES = 48 * 1024 * 1024      # sized under v7x's 64 MiB physical VMEM


def _rup(x, m):
    return (x + m - 1) // m * m


def _pick_row_tile(rows):
    if rows >= MAX_ROW_TILE:
        return MAX_ROW_TILE
    return _rup(rows, SUBLANE)           # small case: single full-extent block


def _mosaic_params():
    return pltpu.CompilerParams(
        dimension_semantics=("parallel", "parallel"),
        vmem_limit_bytes=VMEM_LIMIT_BYTES,
    )


# ----------------------------- Pallas kernels ------------------------------

def _mm_stats_kernel(p_ref, w_ref, y_ref, st_ref):
    """One (phase, row-tile) block: y = patches @ W (bf16 x bf16 -> f32 on the
    MXU) plus per-column partial sum / sum-of-squares for BatchNorm."""
    y = jnp.dot(p_ref[...], w_ref[...], preferred_element_type=jnp.float32)
    y_ref[...] = y
    s0 = jnp.sum(y, axis=0, keepdims=True)
    s1 = jnp.sum(y * y, axis=0, keepdims=True)
    st_ref[...] = jnp.concatenate([s0, s1], axis=0)


def _bn_relu_kernel(y_ref, scale_ref, shift_ref, o_ref):
    """Hoisted per-channel affine fused with ReLU (f32 epilogue)."""
    o_ref[...] = jnp.maximum(
        y_ref[...] * scale_ref[...] + shift_ref[...], 0.0
    ).astype(o_ref.dtype)


def _mm_tanh_kernel(p_ref, w_ref, o_ref):
    y = jnp.dot(p_ref[...], w_ref[...], preferred_element_type=jnp.float32)
    o_ref[...] = jnp.tanh(y)


# ----------------------------- pallas_call wrappers -------------------------

def phase_matmul_stats(patches, weights, row_tile):
    P, Rp, Kp = patches.shape
    Cp = weights.shape[2]
    n_tiles = Rp // row_tile
    return pl.pallas_call(
        _mm_stats_kernel,
        out_shape=(
            jax.ShapeDtypeStruct((P, Rp, Cp), jnp.float32),
            jax.ShapeDtypeStruct((P, n_tiles, 2, Cp), jnp.float32),
        ),
        grid_spec=pltpu.PrefetchScalarGridSpec(
            num_scalar_prefetch=0,
            grid=(P, n_tiles),
            in_specs=[
                pl.BlockSpec((None, row_tile, Kp), lambda p, r: (p, r, 0)),
                pl.BlockSpec((None, Kp, Cp), lambda p, r: (p, 0, 0)),
            ],
            out_specs=(
                pl.BlockSpec((None, row_tile, Cp), lambda p, r: (p, r, 0)),
                pl.BlockSpec((None, None, 2, Cp), lambda p, r: (p, r, 0, 0)),
            ),
        ),
        compiler_params=_mosaic_params(),
    )(patches, weights)


def bn_relu_apply(y, scale, shift, row_tile, out_dtype):
    P, Rp, Cp = y.shape
    n_tiles = Rp // row_tile
    return pl.pallas_call(
        _bn_relu_kernel,
        out_shape=jax.ShapeDtypeStruct((P, Rp, Cp), out_dtype),
        grid_spec=pltpu.PrefetchScalarGridSpec(
            num_scalar_prefetch=0,
            grid=(P, n_tiles),
            in_specs=[
                pl.BlockSpec((None, row_tile, Cp), lambda p, r: (p, r, 0)),
                pl.BlockSpec((1, Cp), lambda p, r: (0, 0)),
                pl.BlockSpec((1, Cp), lambda p, r: (0, 0)),
            ],
            out_specs=pl.BlockSpec((None, row_tile, Cp), lambda p, r: (p, r, 0)),
        ),
        compiler_params=_mosaic_params(),
    )(y, scale, shift)


def phase_matmul_tanh(patches, weights, row_tile):
    P, Rp, Kp = patches.shape
    Cp = weights.shape[2]
    n_tiles = Rp // row_tile
    return pl.pallas_call(
        _mm_tanh_kernel,
        out_shape=jax.ShapeDtypeStruct((P, Rp, Cp), jnp.float32),
        grid_spec=pltpu.PrefetchScalarGridSpec(
            num_scalar_prefetch=0,
            grid=(P, n_tiles),
            in_specs=[
                pl.BlockSpec((None, row_tile, Kp), lambda p, r: (p, r, 0)),
                pl.BlockSpec((None, Kp, Cp), lambda p, r: (p, 0, 0)),
            ],
            out_specs=pl.BlockSpec((None, row_tile, Cp), lambda p, r: (p, r, 0)),
        ),
        compiler_params=_mosaic_params(),
    )(patches, weights)


# ----------------------------- ConvTranspose glue ---------------------------

def _build_phases_1x1(x_nhwc, w):
    """ConvTranspose2d(k, stride=1, padding=0) on a 1x1 spatial input:
    output pixel (oy, ox) = x @ w[:, :, oy, ox]  ->  k*k phases sharing the
    same patch matrix."""
    N = x_nhwc.shape[0]
    cin, cout, k, _ = w.shape
    xf = x_nhwc.reshape(N, cin)
    P = k * k
    patches = jnp.broadcast_to(xf[None], (P, N, cin))
    wm = jnp.transpose(w, (2, 3, 0, 1)).reshape(P, cin, cout)

    def assemble(y):                           # y: (P, N, cout)
        y = y.reshape(k, k, N, cout)
        return jnp.transpose(y, (2, 0, 1, 3))  # (N, k, k, cout)

    return patches, wm, assemble


def _build_phases_stride2(x_nhwc, w):
    """Sub-pixel decomposition of ConvTranspose2d(k=4, stride=2, padding=1):
    each of the 4 output phases (oy%2, ox%2) reads a 2x2 window of real input
    and a 2x2 subset of kernel taps -> 4 matmuls with K = 4*Cin (no zeros)."""
    N, H, W, cin = x_nhwc.shape
    _, cout, k, _ = w.shape
    s, p = 2, 1
    t = k // s                                              # 2 taps per axis
    xp = jnp.pad(x_nhwc, ((0, 0), (p, p), (p, p), (0, 0)))
    patch_list, w_list = [], []
    for py in range(s):
        for px in range(s):
            taps, wtaps = [], []
            for dy in range(t):
                for dx in range(t):
                    taps.append(
                        xp[:, py + dy:py + dy + H, px + dx:px + dx + W, :])
                    ky = (k - 1) - py - s * dy
                    kx = (k - 1) - px - s * dx
                    wtaps.append(w[:, :, ky, kx])
            patch_list.append(
                jnp.concatenate(taps, axis=-1).reshape(N * H * W, t * t * cin))
            w_list.append(jnp.concatenate(wtaps, axis=0))
    patches = jnp.stack(patch_list, axis=0)                 # (4, N*H*W, 4*cin)
    wm = jnp.stack(w_list, axis=0)                          # (4, 4*cin, cout)

    def assemble(y):                                        # y: (4, N*H*W, cout)
        y = y.reshape(s, s, N, H, W, cout)
        y = jnp.transpose(y, (2, 3, 0, 4, 1, 5))            # (N,H,py,W,px,cout)
        return y.reshape(N, s * H, s * W, cout)

    return patches, wm, assemble


def convT_layer(x_nhwc, w, k, s, p, gamma=None, beta=None, final_tanh=False):
    cout = w.shape[1]
    if s == 1 and p == 0 and x_nhwc.shape[1] == 1 and x_nhwc.shape[2] == 1:
        patches, wm, assemble = _build_phases_1x1(x_nhwc, w)
    elif k == 4 and s == 2 and p == 1:
        patches, wm, assemble = _build_phases_stride2(x_nhwc, w)
    else:
        raise NotImplementedError("unsupported ConvTranspose2d config")

    P, R, K = patches.shape
    Kp = _rup(K, LANE)                 # lane-dense contraction (unmasked MXU loads)
    Cp = _rup(cout, LANE)              # lane-dense output (unmasked vst)
    row_tile = _pick_row_tile(R)
    Rp = _rup(R, row_tile)

    patches = jnp.pad(
        patches, ((0, 0), (0, Rp - R), (0, Kp - K))).astype(jnp.bfloat16)
    wm = jnp.pad(wm, ((0, 0), (0, Kp - K), (0, Cp - cout))).astype(jnp.bfloat16)

    if final_tanh:
        y = phase_matmul_tanh(patches, wm, row_tile)
        return assemble(y[:, :R, :cout])

    # Two-pass BatchNorm (training-mode batch stats, biased var, eps=1e-5):
    # pass 1 = matmul + per-block partial stats; zero-padded rows/cols
    # contribute exactly zero, so reducing the partials and dividing by the
    # *real* element count reproduces PyTorch BatchNorm2d batch statistics.
    y, part = phase_matmul_stats(patches, wm, row_tile)
    count = float(P * R)                                    # = N * H_out * W_out
    sums = jnp.sum(part, axis=(0, 1))                       # (2, Cp)
    mean = sums[0] / count
    var = jnp.maximum(sums[1] / count - mean * mean, 0.0)
    gamma_p = jnp.pad(gamma.astype(jnp.float32), (0, Cp - cout))
    beta_p = jnp.pad(beta.astype(jnp.float32), (0, Cp - cout))
    scale = gamma_p * jax.lax.rsqrt(var + BN_EPS)
    shift = beta_p - mean * scale
    act = bn_relu_apply(y, scale[None, :], shift[None, :], row_tile, jnp.bfloat16)
    return assemble(act[:, :R, :cout])


# ----------------------------- NetG ------------------------------------------

def netg_layer_defs(n_d_ft, n_g_ft, n_z_dim, n_classes):
    n_fout_dim = 2 * n_d_ft
    cin = n_fout_dim + n_z_dim + n_classes + 1
    ngf = n_g_ft
    # (Cin, Cout, kernel, stride, padding), same order as the nn.Sequential
    return [
        (cin,      8 * ngf, 2, 1, 0),
        (8 * ngf,  4 * ngf, 4, 2, 1),
        (4 * ngf,  2 * ngf, 4, 2, 1),
        (2 * ngf,  ngf,     4, 2, 1),
        (ngf,      3,       4, 2, 1),
    ]


def init_netg_params(key, layer_defs):
    params = []
    keys = jax.random.split(key, len(layer_defs))
    for kkey, (ci, co, k, s, p) in zip(keys, layer_defs):
        w = 0.02 * jax.random.normal(kkey, (ci, co, k, k), jnp.float32)
        params.append({
            "w": w,
            "gamma": jnp.ones((co,), jnp.float32),   # BatchNorm2d default init
            "beta": jnp.zeros((co,), jnp.float32),
        })
    return params


def netg_forward(params, layer_defs, x, noise):
    """x: (B, n_fout_dim + n_classes + 1) == x.view(-1, C, 1, 1) flattened.
    noise: (B, n_z_dim).  Returns NCHW (B, 3, 32, 32) f32, like PyTorch."""
    h = jnp.concatenate([x, noise], axis=1)[:, None, None, :]   # NHWC (B,1,1,Cin)
    n_layers = len(layer_defs)
    for li, ((_, _, k, s, p), lp) in enumerate(zip(layer_defs, params)):
        final = li == n_layers - 1
        h = convT_layer(h, lp["w"], k, s, p,
                        gamma=lp["gamma"], beta=lp["beta"], final_tanh=final)
    return jnp.transpose(h, (0, 3, 1, 2)).astype(jnp.float32)


if __name__ == "__main__":
    # Small synthetic config (params.n_d_ft=8, n_g_ft=16, n_z_dim=8, n_classes=4)
    n_d_ft, n_g_ft, n_z_dim, n_classes = 8, 16, 8, 4
    batch = 2
    feat = 2 * n_d_ft + n_classes + 1            # 21

    layer_defs = netg_layer_defs(n_d_ft, n_g_ft, n_z_dim, n_classes)

    key = jax.random.PRNGKey(0)
    kp, kx, kn = jax.random.split(key, 3)
    params = init_netg_params(kp, layer_defs)

    x = jax.random.normal(kx, (batch, feat), jnp.float32)
    # torch.randn noise from forward(), generated deterministically here.
    noise = jax.random.normal(kn, (batch, n_z_dim), jnp.float32)

    fwd = jax.jit(lambda prm, xx, nz: netg_forward(prm, layer_defs, xx, nz))
    y = fwd(params, x, noise)
    y = jax.block_until_ready(y)

    assert y.shape == (batch, 3, 32, 32), y.shape
    assert bool(jnp.all(jnp.isfinite(y)))
    assert bool(jnp.all(jnp.abs(y) <= 1.0 + 1e-6))   # tanh output range
    print("KERNEL_OK")
</pallas_src>

<mosaic_0001>
module attributes {stable_mosaic.version = 11 : i64} {
  func.func @_mm_stats_kernel(%arg0: i32, %arg1: i32, %arg2: memref<1x8x128xbf16, #tpu.memory_space<vmem>>, %arg3: memref<1x128x128xbf16, #tpu.memory_space<vmem>>, %arg4: memref<1x8x128xf32, #tpu.memory_space<vmem>>, %arg5: memref<1x1x2x128xf32, #tpu.memory_space<vmem>>) attributes {dimension_semantics = [#tpu.dimension_semantics<parallel>, #tpu.dimension_semantics<parallel>], iteration_bounds = array<i64: 4, 1>, scalar_prefetch = 0 : i64, scratch_operands = 0 : i64, tpu.core_type = #tpu.core_type<tc>, window_params = [{transform_indices = @transform_0, window_bounds = array<i64: 1, 8, 128>}, {transform_indices = @transform_1, window_bounds = array<i64: 1, 128, 128>}, {transform_indices = @transform_2, window_bounds = array<i64: 1, 8, 128>}, {transform_indices = @transform_3, window_bounds = array<i64: 1, 1, 2, 128>}]} {
    %c0 = arith.constant 0 : index
    %c0_0 = arith.constant 0 : index
    %c0_1 = arith.constant 0 : index
    %0 = vector.load %arg2[%c0, %c0_0, %c0_1] : memref<1x8x128xbf16, #tpu.memory_space<vmem>>, vector<1x8x128xbf16>
    %1 = vector.shape_cast %0 : vector<1x8x128xbf16> to vector<8x128xbf16>
    %c0_2 = arith.constant 0 : index
    %c0_3 = arith.constant 0 : index
    %c0_4 = arith.constant 0 : index
    %2 = vector.load %arg3[%c0_2, %c0_3, %c0_4] : memref<1x128x128xbf16, #tpu.memory_space<vmem>>, vector<1x128x128xbf16>
    %3 = vector.shape_cast %2 : vector<1x128x128xbf16> to vector<128x128xbf16>
    %cst = arith.constant dense<0.000000e+00> : vector<8x128xf32>
    %4 = tpu.matmul %1, %3, %cst {dimension_numbers = #tpu.dot_dimension_numbers<[1], [0], [0], [1], [0, 0, 1, 1], [], []>} : vector<8x128xbf16>, vector<128x128xbf16>, vector<8x128xf32> -> vector<8x128xf32>
    %c0_5 = arith.constant 0 : index
    %c0_6 = arith.constant 0 : index
    %c0_7 = arith.constant 0 : index
    %5 = vector.load %arg4[%c0_5, %c0_6, %c0_7] : memref<1x8x128xf32, #tpu.memory_space<vmem>>, vector<1x8x128xf32>
    %6 = vector.shape_cast %5 : vector<1x8x128xf32> to vector<8x128xf32>
    %7 = vector.shape_cast %4 : vector<8x128xf32> to vector<1x8x128xf32>
    tpu.vector_store %arg4[%c0_5, %c0_6, %c0_7], %7 {strides = array<i32>} : memref<1x8x128xf32, #tpu.memory_space<vmem>>, vector<1x8x128xf32>,
    %cst_8 = arith.constant dense<0.000000e+00> : vector<128xf32>
    %8 = vector.multi_reduction <add>, %4, %cst_8 [0] : vector<8x128xf32> to vector<128xf32>
    %9 = vector.shape_cast %8 : vector<128xf32> to vector<1x128xf32>
    %10 = arith.mulf %4, %4 : vector<8x128xf32>
    %cst_9 = arith.constant dense<0.000000e+00> : vector<128xf32>
    %11 = vector.multi_reduction <add>, %10, %cst_9 [0] : vector<8x128xf32> to vector<128xf32>
    %12 = vector.shape_cast %11 : vector<128xf32> to vector<1x128xf32>
    %13 = tpu.concatenate %9, %12 in 0 : vector<1x128xf32>, vector<1x128xf32> -> vector<2x128xf32>
    %c0_10 = arith.constant 0 : index
    %c0_11 = arith.constant 0 : index
    %c0_12 = arith.constant 0 : index
    %c0_13 = arith.constant 0 : index
    %14 = vector.load %arg5[%c0_10, %c0_11, %c0_12, %c0_13] : memref<1x1x2x128xf32, #tpu.memory_space<vmem>>, vector<1x1x2x128xf32>
    %15 = vector.shape_cast %14 : vector<1x1x2x128xf32> to vector<2x128xf32>
    %16 = vector.shape_cast %13 : vector<2x128xf32> to vector<1x1x2x128xf32>
    tpu.vector_store %arg5[%c0_10, %c0_11, %c0_12, %c0_13], %16 {strides = array<i32>} : memref<1x1x2x128xf32, #tpu.memory_space<vmem>>, vector<1x1x2x128xf32>,
    return
  }
  func.func @transform_0(%arg0: i32, %arg1: i32) -> (i32, i32, i32) {
    %c0_i32 = arith.constant 0 : i32
    %c0_i32_0 = arith.constant 0 : i32
    return %arg0, %arg1, %c0_i32 : i32, i32, i32
  }
  func.func @transform_1(%arg0: i32, %arg1: i32) -> (i32, i32, i32) {
    %c0_i32 = arith.constant 0 : i32
    %c0_i32_0 = arith.constant 0 : i32
    %c0_i32_1 = arith.constant 0 : i32
    return %arg0, %c0_i32, %c0_i32_0 : i32, i32, i32
  }
  func.func @transform_2(%arg0: i32, %arg1: i32) -> (i32, i32, i32) {
    %c0_i32 = arith.constant 0 : i32
    %c0_i32_0 = arith.constant 0 : i32
    return %arg0, %arg1, %c0_i32 : i32, i32, i32
  }
  func.func @transform_3(%arg0: i32, %arg1: i32) -> (i32, i32, i32, i32) {
    %c0_i32 = arith.constant 0 : i32
    %c0_i32_0 = arith.constant 0 : i32
    %c0_i32_1 = arith.constant 0 : i32
    return %arg0, %arg1, %c0_i32, %c0_i32_0 : i32, i32, i32, i32
  }
}

module attributes {stable_mosaic.version = 11 : i64} {
  func.func @_bn_relu_kernel(%arg0: i32, %arg1: i32, %arg2: memref<1x8x128xf32, #tpu.memory_space<vmem>>, %arg3: memref<1x128xf32, #tpu.memory_space<vmem>>, %arg4: memref<1x128xf32, #tpu.memory_space<vmem>>, %arg5: memref<1x8x128xbf16, #tpu.memory_space<vmem>>) attributes {dimension_semantics = [#tpu.dimension_semantics<parallel>, #tpu.dimension_semantics<parallel>], iteration_bounds = array<i64: 4, 1>, scalar_prefetch = 0 : i64, scratch_operands = 0 : i64, tpu.core_type = #tpu.core_type<tc>, window_params = [{transform_indices = @transform_0, window_bounds = array<i64: 1, 8, 128>}, {pipeline_mode = #tpu.pipeline_mode<synchronous>, transform_indices = @transform_1, window_bounds = array<i64: 1, 128>}, {pipeline_mode = #tpu.pipeline_mode<synchronous>, transform_indices = @transform_2, window_bounds = array<i64: 1, 128>}, {transform_indices = @transform_3, window_bounds = array<i64: 1, 8, 128>}]} {
    %c0 = arith.constant 0 : index
    %c0_0 = arith.constant 0 : index
    %c0_1 = arith.constant 0 : index
    %0 = vector.load %arg2[%c0, %c0_0, %c0_1] : memref<1x8x128xf32, #tpu.memory_space<vmem>>, vector<1x8x128xf32>
    %1 = vector.shape_cast %0 : vector<1x8x128xf32> to vector<8x128xf32>
    %c0_2 = arith.constant 0 : index
    %c0_3 = arith.constant 0 : index
    %2 = vector.load %arg3[%c0_2, %c0_3] : memref<1x128xf32, #tpu.memory_space<vmem>>, vector<1x128xf32>
    %3 = vector.broadcast %2 : vector<1x128xf32> to vector<8x128xf32>
    %4 = arith.mulf %1, %3 : vector<8x128xf32>
    %c0_4 = arith.constant 0 : index
    %c0_5 = arith.constant 0 : index
    %5 = vector.load %arg4[%c0_4, %c0_5] : memref<1x128xf32, #tpu.memory_space<vmem>>, vector<1x128xf32>
    %6 = vector.broadcast %5 : vector<1x128xf32> to vector<8x128xf32>
    %7 = arith.addf %4, %6 : vector<8x128xf32>
    %cst = arith.constant 0.000000e+00 : f32
    %8 = vector.broadcast %cst : f32 to vector<8x128xf32>
    %9 = arith.maximumf %7, %8 : vector<8x128xf32>
    %10 = arith.truncf %9 : vector<8x128xf32> to vector<8x128xbf16>
    %c0_6 = arith.constant 0 : index
    %c0_7 = arith.constant 0 : index
    %c0_8 = arith.constant 0 : index
    %11 = vector.load %arg5[%c0_6, %c0_7, %c0_8] : memref<1x8x128xbf16, #tpu.memory_space<vmem>>, vector<1x8x128xbf16>
    %12 = vector.shape_cast %11 : vector<1x8x128xbf16> to vector<8x128xbf16>
    %13 = vector.shape_cast %10 : vector<8x128xbf16> to vector<1x8x128xbf16>
    tpu.vector_store %arg5[%c0_6, %c0_7, %c0_8], %13 {strides = array<i32>} : memref<1x8x128xbf16, #tpu.memory_space<vmem>>, vector<1x8x128xbf16>,
    return
  }
  func.func @transform_0(%arg0: i32, %arg1: i32) -> (i32, i32, i32) {
    %c0_i32 = arith.constant 0 : i32
    %c0_i32_0 = arith.constant 0 : i32
    return %arg0, %arg1, %c0_i32 : i32, i32, i32
  }
  func.func @transform_1(%arg0: i32, %arg1: i32) -> (i32, i32) {
    %c0_i32 = arith.constant 0 : i32
    %c0_i32_0 = arith.constant 0 : i32
    %c0_i32_1 = arith.constant 0 : i32
    return %c0_i32, %c0_i32_0 : i32, i32
  }
  func.func @transform_2(%arg0: i32, %arg1: i32) -> (i32, i32) {
    %c0_i32 = arith.constant 0 : i32
    %c0_i32_0 = arith.constant 0 : i32
    %c0_i32_1 = arith.constant 0 : i32
    return %c0_i32, %c0_i32_0 : i32, i32
  }
  func.func @transform_3(%arg0: i32, %arg1: i32) -> (i32, i32, i32) {
    %c0_i32 = arith.constant 0 : i32
    %c0_i32_0 = arith.constant 0 : i32
    return %arg0, %arg1, %c0_i32 : i32, i32, i32
  }
}

module attributes {stable_mosaic.version = 11 : i64} {
  func.func @_mm_stats_kernel(%arg0: i32, %arg1: i32, %arg2: memref<1x8x512xbf16, #tpu.memory_space<vmem>>, %arg3: memref<1x512x128xbf16, #tpu.memory_space<vmem>>, %arg4: memref<1x8x128xf32, #tpu.memory_space<vmem>>, %arg5: memref<1x1x2x128xf32, #tpu.memory_space<vmem>>) attributes {dimension_semantics = [#tpu.dimension_semantics<parallel>, #tpu.dimension_semantics<parallel>], iteration_bounds = array<i64: 4, 1>, scalar_prefetch = 0 : i64, scratch_operands = 0 : i64, tpu.core_type = #tpu.core_type<tc>, window_params = [{transform_indices = @transform_0, window_bounds = array<i64: 1, 8, 512>}, {transform_indices = @transform_1, window_bounds = array<i64: 1, 512, 128>}, {transform_indices = @transform_2, window_bounds = array<i64: 1, 8, 128>}, {transform_indices = @transform_3, window_bounds = array<i64: 1, 1, 2, 128>}]} {
    %c0 = arith.constant 0 : index
    %c0_0 = arith.constant 0 : index
    %c0_1 = arith.constant 0 : index
    %0 = vector.load %arg2[%c0, %c0_0, %c0_1] : memref<1x8x512xbf16, #tpu.memory_space<vmem>>, vector<1x8x512xbf16>
    %1 = vector.shape_cast %0 : vector<1x8x512xbf16> to vector<8x512xbf16>
    %c0_2 = arith.constant 0 : index
    %c0_3 = arith.constant 0 : index
    %c0_4 = arith.constant 0 : index
    %2 = vector.load %arg3[%c0_2, %c0_3, %c0_4] : memref<1x512x128xbf16, #tpu.memory_space<vmem>>, vector<1x512x128xbf16>
    %3 = vector.shape_cast %2 : vector<1x512x128xbf16> to vector<512x128xbf16>
    %cst = arith.constant dense<0.000000e+00> : vector<8x128xf32>
    %4 = tpu.matmul %1, %3, %cst {dimension_numbers = #tpu.dot_dimension_numbers<[1], [0], [0], [1], [0, 0, 1, 1], [], []>} : vector<8x512xbf16>, vector<512x128xbf16>, vector<8x128xf32> -> vector<8x128xf32>
    %c0_5 = arith.constant 0 : index
    %c0_6 = arith.constant 0 : index
    %c0_7 = arith.constant 0 : index
    %5 = vector.load %arg4[%c0_5, %c0_6, %c0_7] : memref<1x8x128xf32, #tpu.memory_space<vmem>>, vector<1x8x128xf32>
    %6 = vector.shape_cast %5 : vector<1x8x128xf32> to vector<8x128xf32>
    %7 = vector.shape_cast %4 : vector<8x128xf32> to vector<1x8x128xf32>
    tpu.vector_store %arg4[%c0_5, %c0_6, %c0_7], %7 {strides = array<i32>} : memref<1x8x128xf32, #tpu.memory_space<vmem>>, vector<1x8x128xf32>,
    %cst_8 = arith.constant dense<0.000000e+00> : vector<128xf32>
    %8 = vector.multi_reduction <add>, %4, %cst_8 [0] : vector<8x128xf32> to vector<128xf32>
    %9 = vector.shape_cast %8 : vector<128xf32> to vector<1x128xf32>
    %10 = arith.mulf %4, %4 : vector<8x128xf32>
    %cst_9 = arith.constant dense<0.000000e+00> : vector<128xf32>
    %11 = vector.multi_reduction <add>, %10, %cst_9 [0] : vector<8x128xf32> to vector<128xf32>
    %12 = vector.shape_cast %11 : vector<128xf32> to vector<1x128xf32>
    %13 = tpu.concatenate %9, %12 in 0 : vector<1x128xf32>, vector<1x128xf32> -> vector<2x128xf32>
    %c0_10 = arith.constant 0 : index
    %c0_11 = arith.constant 0 : index
    %c0_12 = arith.constant 0 : index
    %c0_13 = arith.constant 0 : index
    %14 = vector.load %arg5[%c0_10, %c0_11, %c0_12, %c0_13] : memref<1x1x2x128xf32, #tpu.memory_space<vmem>>, vector<1x1x2x128xf32>
    %15 = vector.shape_cast %14 : vector<1x1x2x128xf32> to vector<2x128xf32>
    %16 = vector.shape_cast %13 : vector<2x128xf32> to vector<1x1x2x128xf32>
    tpu.vector_store %arg5[%c0_10, %c0_11, %c0_12, %c0_13], %16 {strides = array<i32>} : memref<1x1x2x128xf32, #tpu.memory_space<vmem>>, vector<1x1x2x128xf32>,
    return
  }
  func.func @transform_0(%arg0: i32, %arg1: i32) -> (i32, i32, i32) {
    %c0_i32 = arith.constant 0 : i32
    %c0_i32_0 = arith.constant 0 : i32
    return %arg0, %arg1, %c0_i32 : i32, i32, i32
  }
  func.func @transform_1(%arg0: i32, %arg1: i32) -> (i32, i32, i32) {
    %c0_i32 = arith.constant 0 : i32
    %c0_i32_0 = arith.constant 0 : i32
    %c0_i32_1 = arith.constant 0 : i32
    return %arg0, %c0_i32, %c0_i32_0 : i32, i32, i32
  }
  func.func @transform_2(%arg0: i32, %arg1: i32) -> (i32, i32, i32) {
    %c0_i32 = arith.constant 0 : i32
    %c0_i32_0 = arith.constant 0 : i32
    return %arg0, %arg1, %c0_i32 : i32, i32, i32
  }
  func.func @transform_3(%arg0: i32, %arg1: i32) -> (i32, i32, i32, i32) {
    %c0_i32 = arith.constant 0 : i32
    %c0_i32_0 = arith.constant 0 : i32
    %c0_i32_1 = arith.constant 0 : i32
    return %arg0, %arg1, %c0_i32, %c0_i32_0 : i32, i32, i32, i32
  }
}

module attributes {stable_mosaic.version = 11 : i64} {
  func.func @_mm_stats_kernel(%arg0: i32, %arg1: i32, %arg2: memref<1x32x256xbf16, #tpu.memory_space<vmem>>, %arg3: memref<1x256x128xbf16, #tpu.memory_space<vmem>>, %arg4: memref<1x32x128xf32, #tpu.memory_space<vmem>>, %arg5: memref<1x1x2x128xf32, #tpu.memory_space<vmem>>) attributes {dimension_semantics = [#tpu.dimension_semantics<parallel>, #tpu.dimension_semantics<parallel>], iteration_bounds = array<i64: 4, 1>, scalar_prefetch = 0 : i64, scratch_operands = 0 : i64, tpu.core_type = #tpu.core_type<tc>, window_params = [{transform_indices = @transform_0, window_bounds = array<i64: 1, 32, 256>}, {transform_indices = @transform_1, window_bounds = array<i64: 1, 256, 128>}, {transform_indices = @transform_2, window_bounds = array<i64: 1, 32, 128>}, {transform_indices = @transform_3, window_bounds = array<i64: 1, 1, 2, 128>}]} {
    %c0 = arith.constant 0 : index
    %c0_0 = arith.constant 0 : index
    %c0_1 = arith.constant 0 : index
    %0 = vector.load %arg2[%c0, %c0_0, %c0_1] : memref<1x32x256xbf16, #tpu.memory_space<vmem>>, vector<1x32x256xbf16>
    %1 = vector.shape_cast %0 : vector<1x32x256xbf16> to vector<32x256xbf16>
    %c0_2 = arith.constant 0 : index
    %c0_3 = arith.constant 0 : index
    %c0_4 = arith.constant 0 : index
    %2 = vector.load %arg3[%c0_2, %c0_3, %c0_4] : memref<1x256x128xbf16, #tpu.memory_space<vmem>>, vector<1x256x128xbf16>
    %3 = vector.shape_cast %2 : vector<1x256x128xbf16> to vector<256x128xbf16>
    %cst = arith.constant dense<0.000000e+00> : vector<32x128xf32>
    %4 = tpu.matmul %1, %3, %cst {dimension_numbers = #tpu.dot_dimension_numbers<[1], [0], [0], [1], [0, 0, 1, 1], [], []>} : vector<32x256xbf16>, vector<256x128xbf16>, vector<32x128xf32> -> vector<32x128xf32>
    %c0_5 = arith.constant 0 : index
    %c0_6 = arith.constant 0 : index
    %c0_7 = arith.constant 0 : index
    %5 = vector.load %arg4[%c0_5, %c0_6, %c0_7] : memref<1x32x128xf32, #tpu.memory_space<vmem>>, vector<1x32x128xf32>
    %6 = vector.shape_cast %5 : vector<1x32x128xf32> to vector<32x128xf32>
    %7 = vector.shape_cast %4 : vector<32x128xf32> to vector<1x32x128xf32>
    tpu.vector_store %arg4[%c0_5, %c0_6, %c0_7], %7 {strides = array<i32>} : memref<1x32x128xf32, #tpu.memory_space<vmem>>, vector<1x32x128xf32>,
    %cst_8 = arith.constant dense<0.000000e+00> : vector<128xf32>
    %8 = vector.multi_reduction <add>, %4, %cst_8 [0] : vector<32x128xf32> to vector<128xf32>
    %9 = vector.shape_cast %8 : vector<128xf32> to vector<1x128xf32>
    %10 = arith.mulf %4, %4 : vector<32x128xf32>
    %cst_9 = arith.constant dense<0.000000e+00> : vector<128xf32>
    %11 = vector.multi_reduction <add>, %10, %cst_9 [0] : vector<32x128xf32> to vector<128xf32>
    %12 = vector.shape_cast %11 : vector<128xf32> to vector<1x128xf32>
    %13 = tpu.concatenate %9, %12 in 0 : vector<1x128xf32>, vector<1x128xf32> -> vector<2x128xf32>
    %c0_10 = arith.constant 0 : index
    %c0_11 = arith.constant 0 : index
    %c0_12 = arith.constant 0 : index
    %c0_13 = arith.constant 0 : index
    %14 = vector.load %arg5[%c0_10, %c0_11, %c0_12, %c0_13] : memref<1x1x2x128xf32, #tpu.memory_space<vmem>>, vector<1x1x2x128xf32>
    %15 = vector.shape_cast %14 : vector<1x1x2x128xf32> to vector<2x128xf32>
    %16 = vector.shape_cast %13 : vector<2x128xf32> to vector<1x1x2x128xf32>
    tpu.vector_store %arg5[%c0_10, %c0_11, %c0_12, %c0_13], %16 {strides = array<i32>} : memref<1x1x2x128xf32, #tpu.memory_space<vmem>>, vector<1x1x2x128xf32>,
    return
  }
  func.func @transform_0(%arg0: i32, %arg1: i32) -> (i32, i32, i32) {
    %c0_i32 = arith.constant 0 : i32
    %c0_i32_0 = arith.constant 0 : i32
    return %arg0, %arg1, %c0_i32 : i32, i32, i32
  }
  func.func @transform_1(%arg0: i32, %arg1: i32) -> (i32, i32, i32) {
    %c0_i32 = arith.constant 0 : i32
    %c0_i32_0 = arith.constant 0 : i32
    %c0_i32_1 = arith.constant 0 : i32
    return %arg0, %c0_i32, %c0_i32_0 : i32, i32, i32
  }
  func.func @transform_2(%arg0: i32, %arg1: i32) -> (i32, i32, i32) {
    %c0_i32 = arith.constant 0 : i32
    %c0_i32_0 = arith.constant 0 : i32
    return %arg0, %arg1, %c0_i32 : i32, i32, i32
  }
  func.func @transform_3(%arg0: i32, %arg1: i32) -> (i32, i32, i32, i32) {
    %c0_i32 = arith.constant 0 : i32
    %c0_i32_0 = arith.constant 0 : i32
    %c0_i32_1 = arith.constant 0 : i32
    return %arg0, %arg1, %c0_i32, %c0_i32_0 : i32, i32, i32, i32
  }
}

module attributes {stable_mosaic.version = 11 : i64} {
  func.func @_bn_relu_kernel(%arg0: i32, %arg1: i32, %arg2: memref<1x32x128xf32, #tpu.memory_space<vmem>>, %arg3: memref<1x128xf32, #tpu.memory_space<vmem>>, %arg4: memref<1x128xf32, #tpu.memory_space<vmem>>, %arg5: memref<1x32x128xbf16, #tpu.memory_space<vmem>>) attributes {dimension_semantics = [#tpu.dimension_semantics<parallel>, #tpu.dimension_semantics<parallel>], iteration_bounds = array<i64: 4, 1>, scalar_prefetch = 0 : i64, scratch_operands = 0 : i64, tpu.core_type = #tpu.core_type<tc>, window_params = [{transform_indices = @transform_0, window_bounds = array<i64: 1, 32, 128>}, {pipeline_mode = #tpu.pipeline_mode<synchronous>, transform_indices = @transform_1, window_bounds = array<i64: 1, 128>}, {pipeline_mode = #tpu.pipeline_mode<synchronous>, transform_indices = @transform_2, window_bounds = array<i64: 1, 128>}, {transform_indices = @transform_3, window_bounds = array<i64: 1, 32, 128>}]} {
    %c0 = arith.constant 0 : index
    %c0_0 = arith.constant 0 : index
    %c0_1 = arith.constant 0 : index
    %0 = vector.load %arg2[%c0, %c0_0, %c0_1] : memref<1x32x128xf32, #tpu.memory_space<vmem>>, vector<1x32x128xf32>
    %1 = vector.shape_cast %0 : vector<1x32x128xf32> to vector<32x128xf32>
    %c0_2 = arith.constant 0 : index
    %c0_3 = arith.constant 0 : index
    %2 = vector.load %arg3[%c0_2, %c0_3] : memref<1x128xf32, #tpu.memory_space<vmem>>, vector<1x128xf32>
    %3 = vector.broadcast %2 : vector<1x128xf32> to vector<32x128xf32>
    %4 = arith.mulf %1, %3 : vector<32x128xf32>
    %c0_4 = arith.constant 0 : index
    %c0_5 = arith.constant 0 : index
    %5 = vector.load %arg4[%c0_4, %c0_5] : memref<1x128xf32, #tpu.memory_space<vmem>>, vector<1x128xf32>
    %6 = vector.broadcast %5 : vector<1x128xf32> to vector<32x128xf32>
    %7 = arith.addf %4, %6 : vector<32x128xf32>
    %cst = arith.constant 0.000000e+00 : f32
    %8 = vector.broadcast %cst : f32 to vector<32x128xf32>
    %9 = arith.maximumf %7, %8 : vector<32x128xf32>
    %10 = arith.truncf %9 : vector<32x128xf32> to vector<32x128xbf16>
    %c0_6 = arith.constant 0 : index
    %c0_7 = arith.constant 0 : index
    %c0_8 = arith.constant 0 : index
    %11 = vector.load %arg5[%c0_6, %c0_7, %c0_8] : memref<1x32x128xbf16, #tpu.memory_space<vmem>>, vector<1x32x128xbf16>
    %12 = vector.shape_cast %11 : vector<1x32x128xbf16> to vector<32x128xbf16>
    %13 = vector.shape_cast %10 : vector<32x128xbf16> to vector<1x32x128xbf16>
    tpu.vector_store %arg5[%c0_6, %c0_7, %c0_8], %13 {strides = array<i32>} : memref<1x32x128xbf16, #tpu.memory_space<vmem>>, vector<1x32x128xbf16>,
    return
  }
  func.func @transform_0(%arg0: i32, %arg1: i32) -> (i32, i32, i32) {
    %c0_i32 = arith.constant 0 : i32
    %c0_i32_0 = arith.constant 0 : i32
    return %arg0, %arg1, %c0_i32 : i32, i32, i32
  }
  func.func @transform_1(%arg0: i32, %arg1: i32) -> (i32, i32) {
    %c0_i32 = arith.constant 0 : i32
    %c0_i32_0 = arith.constant 0 : i32
    %c0_i32_1 = arith.constant 0 : i32
    return %c0_i32, %c0_i32_0 : i32, i32
  }
  func.func @transform_2(%arg0: i32, %arg1: i32) -> (i32, i32) {
    %c0_i32 = arith.constant 0 : i32
    %c0_i32_0 = arith.constant 0 : i32
    %c0_i32_1 = arith.constant 0 : i32
    return %c0_i32, %c0_i32_0 : i32, i32
  }
  func.func @transform_3(%arg0: i32, %arg1: i32) -> (i32, i32, i32) {
    %c0_i32 = arith.constant 0 : i32
    %c0_i32_0 = arith.constant 0 : i32
    return %arg0, %arg1, %c0_i32 : i32, i32, i32
  }
}

module attributes {stable_mosaic.version = 11 : i64} {
  func.func @_mm_stats_kernel(%arg0: i32, %arg1: i32, %arg2: memref<1x128x128xbf16, #tpu.memory_space<vmem>>, %arg3: memref<1x128x128xbf16, #tpu.memory_space<vmem>>, %arg4: memref<1x128x128xf32, #tpu.memory_space<vmem>>, %arg5: memref<1x1x2x128xf32, #tpu.memory_space<vmem>>) attributes {dimension_semantics = [#tpu.dimension_semantics<parallel>, #tpu.dimension_semantics<parallel>], iteration_bounds = array<i64: 4, 1>, scalar_prefetch = 0 : i64, scratch_operands = 0 : i64, tpu.core_type = #tpu.core_type<tc>, window_params = [{transform_indices = @transform_0, window_bounds = array<i64: 1, 128, 128>}, {transform_indices = @transform_1, window_bounds = array<i64: 1, 128, 128>}, {transform_indices = @transform_2, window_bounds = array<i64: 1, 128, 128>}, {transform_indices = @transform_3, window_bounds = array<i64: 1, 1, 2, 128>}]} {
    %c0 = arith.constant 0 : index
    %c0_0 = arith.constant 0 : index
    %c0_1 = arith.constant 0 : index
    %0 = vector.load %arg2[%c0, %c0_0, %c0_1] : memref<1x128x128xbf16, #tpu.memory_space<vmem>>, vector<1x128x128xbf16>
    %1 = vector.shape_cast %0 : vector<1x128x128xbf16> to vector<128x128xbf16>
    %c0_2 = arith.constant 0 : index
    %c0_3 = arith.constant 0 : index
    %c0_4 = arith.constant 0 : index
    %2 = vector.load %arg3[%c0_2, %c0_3, %c0_4] : memref<1x128x128xbf16, #tpu.memory_space<vmem>>, vector<1x128x128xbf16>
    %3 = vector.shape_cast %2 : vector<1x128x128xbf16> to vector<128x128xbf16>
    %cst = arith.constant dense<0.000000e+00> : vector<128x128xf32>
    %4 = tpu.matmul %1, %3, %cst {dimension_numbers = #tpu.dot_dimension_numbers<[1], [0], [0], [1], [0, 0, 1, 1], [], []>} : vector<128x128xbf16>, vector<128x128xbf16>, vector<128x128xf32> -> vector<128x128xf32>
    %c0_5 = arith.constant 0 : index
    %c0_6 = arith.constant 0 : index
    %c0_7 = arith.constant 0 : index
    %5 = vector.load %arg4[%c0_5, %c0_6, %c0_7] : memref<1x128x128xf32, #tpu.memory_space<vmem>>, vector<1x128x128xf32>
    %6 = vector.shape_cast %5 : vector<1x128x128xf32> to vector<128x128xf32>
    %7 = vector.shape_cast %4 : vector<128x128xf32> to vector<1x128x128xf32>
    tpu.vector_store %arg4[%c0_5, %c0_6, %c0_7], %7 {strides = array<i32>} : memref<1x128x128xf32, #tpu.memory_space<vmem>>, vector<1x128x128xf32>,
    %cst_8 = arith.constant dense<0.000000e+00> : vector<128xf32>
    %8 = vector.multi_reduction <add>, %4, %cst_8 [0] : vector<128x128xf32> to vector<128xf32>
    %9 = vector.shape_cast %8 : vector<128xf32> to vector<1x128xf32>
    %10 = arith.mulf %4, %4 : vector<128x128xf32>
    %cst_9 = arith.constant dense<0.000000e+00> : vector<128xf32>
    %11 = vector.multi_reduction <add>, %10, %cst_9 [0] : vector<128x128xf32> to vector<128xf32>
    %12 = vector.shape_cast %11 : vector<128xf32> to vector<1x128xf32>
    %13 = tpu.concatenate %9, %12 in 0 : vector<1x128xf32>, vector<1x128xf32> -> vector<2x128xf32>
    %c0_10 = arith.constant 0 : index
    %c0_11 = arith.constant 0 : index
    %c0_12 = arith.constant 0 : index
    %c0_13 = arith.constant 0 : index
    %14 = vector.load %arg5[%c0_10, %c0_11, %c0_12, %c0_13] : memref<1x1x2x128xf32, #tpu.memory_space<vmem>>, vector<1x1x2x128xf32>
    %15 = vector.shape_cast %14 : vector<1x1x2x128xf32> to vector<2x128xf32>
    %16 = vector.shape_cast %13 : vector<2x128xf32> to vector<1x1x2x128xf32>
    tpu.vector_store %arg5[%c0_10, %c0_11, %c0_12, %c0_13], %16 {strides = array<i32>} : memref<1x1x2x128xf32, #tpu.memory_space<vmem>>, vector<1x1x2x128xf32>,
    return
  }
  func.func @transform_0(%arg0: i32, %arg1: i32) -> (i32, i32, i32) {
    %c0_i32 = arith.constant 0 : i32
    %c0_i32_0 = arith.constant 0 : i32
    return %arg0, %arg1, %c0_i32 : i32, i32, i32
  }
  func.func @transform_1(%arg0: i32, %arg1: i32) -> (i32, i32, i32) {
    %c0_i32 = arith.constant 0 : i32
    %c0_i32_0 = arith.constant 0 : i32
    %c0_i32_1 = arith.constant 0 : i32
    return %arg0, %c0_i32, %c0_i32_0 : i32, i32, i32
  }
  func.func @transform_2(%arg0: i32, %arg1: i32) -> (i32, i32, i32) {
    %c0_i32 = arith.constant 0 : i32
    %c0_i32_0 = arith.constant 0 : i32
    return %arg0, %arg1, %c0_i32 : i32, i32, i32
  }
  func.func @transform_3(%arg0: i32, %arg1: i32) -> (i32, i32, i32, i32) {
    %c0_i32 = arith.constant 0 : i32
    %c0_i32_0 = arith.constant 0 : i32
    %c0_i32_1 = arith.constant 0 : i32
    return %arg0, %arg1, %c0_i32, %c0_i32_0 : i32, i32, i32, i32
  }
}

module attributes {stable_mosaic.version = 11 : i64} {
  func.func @_bn_relu_kernel(%arg0: i32, %arg1: i32, %arg2: memref<1x128x128xf32, #tpu.memory_space<vmem>>, %arg3: memref<1x128xf32, #tpu.memory_space<vmem>>, %arg4: memref<1x128xf32, #tpu.memory_space<vmem>>, %arg5: memref<1x128x128xbf16, #tpu.memory_space<vmem>>) attributes {dimension_semantics = [#tpu.dimension_semantics<parallel>, #tpu.dimension_semantics<parallel>], iteration_bounds = array<i64: 4, 1>, scalar_prefetch = 0 : i64, scratch_operands = 0 : i64, tpu.core_type = #tpu.core_type<tc>, window_params = [{transform_indices = @transform_0, window_bounds = array<i64: 1, 128, 128>}, {pipeline_mode = #tpu.pipeline_mode<synchronous>, transform_indices = @transform_1, window_bounds = array<i64: 1, 128>}, {pipeline_mode = #tpu.pipeline_mode<synchronous>, transform_indices = @transform_2, window_bounds = array<i64: 1, 128>}, {transform_indices = @transform_3, window_bounds = array<i64: 1, 128, 128>}]} {
    %c0 = arith.constant 0 : index
    %c0_0 = arith.constant 0 : index
    %c0_1 = arith.constant 0 : index
    %0 = vector.load %arg2[%c0, %c0_0, %c0_1] : memref<1x128x128xf32, #tpu.memory_space<vmem>>, vector<1x128x128xf32>
    %1 = vector.shape_cast %0 : vector<1x128x128xf32> to vector<128x128xf32>
    %c0_2 = arith.constant 0 : index
    %c0_3 = arith.constant 0 : index
    %2 = vector.load %arg3[%c0_2, %c0_3] : memref<1x128xf32, #tpu.memory_space<vmem>>, vector<1x128xf32>
    %3 = vector.broadcast %2 : vector<1x128xf32> to vector<128x128xf32>
    %4 = arith.mulf %1, %3 : vector<128x128xf32>
    %c0_4 = arith.constant 0 : index
    %c0_5 = arith.constant 0 : index
    %5 = vector.load %arg4[%c0_4, %c0_5] : memref<1x128xf32, #tpu.memory_space<vmem>>, vector<1x128xf32>
    %6 = vector.broadcast %5 : vector<1x128xf32> to vector<128x128xf32>
    %7 = arith.addf %4, %6 : vector<128x128xf32>
    %cst = arith.constant 0.000000e+00 : f32
    %8 = vector.broadcast %cst : f32 to vector<128x128xf32>
    %9 = arith.maximumf %7, %8 : vector<128x128xf32>
    %10 = arith.truncf %9 : vector<128x128xf32> to vector<128x128xbf16>
    %c0_6 = arith.constant 0 : index
    %c0_7 = arith.constant 0 : index
    %c0_8 = arith.constant 0 : index
    %11 = vector.load %arg5[%c0_6, %c0_7, %c0_8] : memref<1x128x128xbf16, #tpu.memory_space<vmem>>, vector<1x128x128xbf16>
    %12 = vector.shape_cast %11 : vector<1x128x128xbf16> to vector<128x128xbf16>
    %13 = vector.shape_cast %10 : vector<128x128xbf16> to vector<1x128x128xbf16>
    tpu.vector_store %arg5[%c0_6, %c0_7, %c0_8], %13 {strides = array<i32>} : memref<1x128x128xbf16, #tpu.memory_space<vmem>>, vector<1x128x128xbf16>,
    return
  }
  func.func @transform_0(%arg0: i32, %arg1: i32) -> (i32, i32, i32) {
    %c0_i32 = arith.constant 0 : i32
    %c0_i32_0 = arith.constant 0 : i32
    return %arg0, %arg1, %c0_i32 : i32, i32, i32
  }
  func.func @transform_1(%arg0: i32, %arg1: i32) -> (i32, i32) {
    %c0_i32 = arith.constant 0 : i32
    %c0_i32_0 = arith.constant 0 : i32
    %c0_i32_1 = arith.constant 0 : i32
    return %c0_i32, %c0_i32_0 : i32, i32
  }
  func.func @transform_2(%arg0: i32, %arg1: i32) -> (i32, i32) {
    %c0_i32 = arith.constant 0 : i32
    %c0_i32_0 = arith.constant 0 : i32
    %c0_i32_1 = arith.constant 0 : i32
    return %c0_i32, %c0_i32_0 : i32, i32
  }
  func.func @transform_3(%arg0: i32, %arg1: i32) -> (i32, i32, i32) {
    %c0_i32 = arith.constant 0 : i32
    %c0_i32_0 = arith.constant 0 : i32
    return %arg0, %arg1, %c0_i32 : i32, i32, i32
  }
}

module attributes {stable_mosaic.version = 11 : i64} {
  func.func @_mm_tanh_kernel(%arg0: i32, %arg1: i32, %arg2: memref<1x512x128xbf16, #tpu.memory_space<vmem>>, %arg3: memref<1x128x128xbf16, #tpu.memory_space<vmem>>, %arg4: memref<1x512x128xf32, #tpu.memory_space<vmem>>) attributes {dimension_semantics = [#tpu.dimension_semantics<parallel>, #tpu.dimension_semantics<parallel>], iteration_bounds = array<i64: 4, 1>, scalar_prefetch = 0 : i64, scratch_operands = 0 : i64, tpu.core_type = #tpu.core_type<tc>, window_params = [{transform_indices = @transform_0, window_bounds = array<i64: 1, 512, 128>}, {transform_indices = @transform_1, window_bounds = array<i64: 1, 128, 128>}, {transform_indices = @transform_2, window_bounds = array<i64: 1, 512, 128>}]} {
    %c0 = arith.constant 0 : index
    %c0_0 = arith.constant 0 : index
    %c0_1 = arith.constant 0 : index
    %0 = vector.load %arg2[%c0, %c0_0, %c0_1] : memref<1x512x128xbf16, #tpu.memory_space<vmem>>, vector<1x512x128xbf16>
    %1 = vector.shape_cast %0 : vector<1x512x128xbf16> to vector<512x128xbf16>
    %c0_2 = arith.constant 0 : index
    %c0_3 = arith.constant 0 : index
    %c0_4 = arith.constant 0 : index
    %2 = vector.load %arg3[%c0_2, %c0_3, %c0_4] : memref<1x128x128xbf16, #tpu.memory_space<vmem>>, vector<1x128x128xbf16>
    %3 = vector.shape_cast %2 : vector<1x128x128xbf16> to vector<128x128xbf16>
    %cst = arith.constant dense<0.000000e+00> : vector<512x128xf32>
    %4 = tpu.matmul %1, %3, %cst {dimension_numbers = #tpu.dot_dimension_numbers<[1], [0], [0], [1], [0, 0, 1, 1], [], []>} : vector<512x128xbf16>, vector<128x128xbf16>, vector<512x128xf32> -> vector<512x128xf32>
    %5 = math.tanh %4 : vector<512x128xf32>
    %c0_5 = arith.constant 0 : index
    %c0_6 = arith.constant 0 : index
    %c0_7 = arith.constant 0 : index
    %6 = vector.load %arg4[%c0_5, %c0_6, %c0_7] : memref<1x512x128xf32, #tpu.memory_space<vmem>>, vector<1x512x128xf32>
    %7 = vector.shape_cast %6 : vector<1x512x128xf32> to vector<512x128xf32>
    %8 = vector.shape_cast %5 : vector<512x128xf32> to vector<1x512x128xf32>
    tpu.vector_store %arg4[%c0_5, %c0_6, %c0_7], %8 {strides = array<i32>} : memref<1x512x128xf32, #tpu.memory_space<vmem>>, vector<1x512x128xf32>,
    return
  }
  func.func @transform_0(%arg0: i32, %arg1: i32) -> (i32, i32, i32) {
    %c0_i32 = arith.constant 0 : i32
    %c0_i32_0 = arith.constant 0 : i32
    return %arg0, %arg1, %c0_i32 : i32, i32, i32
  }
  func.func @transform_1(%arg0: i32, %arg1: i32) -> (i32, i32, i32) {
    %c0_i32 = arith.constant 0 : i32
    %c0_i32_0 = arith.constant 0 : i32
    %c0_i32_1 = arith.constant 0 : i32
    return %arg0, %c0_i32, %c0_i32_0 : i32, i32, i32
  }
  func.func @transform_2(%arg0: i32, %arg1: i32) -> (i32, i32, i32) {
    %c0_i32 = arith.constant 0 : i32
    %c0_i32_0 = arith.constant 0 : i32
    return %arg0, %arg1, %c0_i32 : i32, i32, i32
  }
}

</mosaic_0001>

<llo_original>
// kernel: _lambda_.9
$region0: #{_lambda_.9}
  #allocation0 [shape = 'u32[]', space=smem, size = 0x4, offset = 0x4, fixed_abs, tag = 'smem constant byte address 0x4 - core index']
  #allocation1 [shape = 'u32[144,128]{1,0:T(1,128)}', space=vmem, size = 0x12000, scoped, tag = 'internal scratch']
  %s0 = inlined_call_operand.vmem [shape: bf16[4,8,128], index: 0, kind: input, shape index: {}]
  %s1 = inlined_call_operand.vmem [shape: bf16[4,128,128], index: 1, kind: input, shape index: {}]
  %s2 = inlined_call_operand.vmem [shape: f32[4,8,128], index: 2, kind: output, shape index: {0}]
  %s3 = inlined_call_operand.vmem [shape: f32[4,1,2,128], index: 3, kind: output, shape index: {1}]
  %4 = xla_tuple %s2, %s3
  %s5 = sld [smem:[#allocation0]]
  $region49: #{_lambda_.9} parent=0
    _
  %s7 = ssub.s32 1, %s5
  %s8 = scalar_select 0, %s7, %s5
  loop: start=0, step=1, limit=6
  $region2: #{_lambda_.9} parent=0 // loop_pre_header
    _
  $region3: #{_lambda_.9} parent=0 // loop_header
    %s10 = sphi 0, %s14
    %p11 = scmp.ge.s32.totalorder %s10, 6
    %s17 = sphi 0, %s29
    %s18 = sphi 0, %s25
    %s19 = sphi 0, %s17
    %s20 = sphi 0, %s18
    %s21 = sphi 0, %s19
    %s22 = sphi 0, %s20
    %s34 = sphi 0, %s36
    %s37 = sphi 0, %s34
    %s38 = sphi 0, %s37
    %s54 = sphi 0, %s38
    %s60 = sphi 0, %s62
    %s63 = sphi 0, %s60
    %s64 = sphi 0, %s63
    %s80 = sphi 0, %s64
    %s88 = sphi 0, %s90
    %s91 = sphi 0, %s88
    %s92 = sphi 0, %s91
    %s108 = sphi 0, %s92
    %s116 = sphi 0, %s118
    %s119 = sphi 0, %s116
    %s120 = sphi 0, %s119
    %s136 = sphi 0, %s120
  $region4: #{_lambda_.9} parent=0 // loop_header_branch
    %13 = sbr.rel (%p11) target = $region8
  $region5: #{_lambda_.9} parent=0 // loop_body
    %s15 = ssub.s32 %s10, 1
    %s16 = ssub.s32 %s10, 2
    %s23 = sadd.s32 1, %s18
    %p24 = scmp.ge.s32.totalorder %s23, 1
    %s25 = scalar_select %p24, 0, %s23
    %s26 = sadd.s32 1, %s17
    %s27 = scalar_select %p24, %s26, %s17
    %p28 = scmp.ge.s32.totalorder %s27, 4
    %s29 = scalar_select %p28, 0, %s27
    %s30 = ssub.s32 %s17, %s29
    %s31 = ssub.s32 %s18, %s25
    %s32 = sor.u32 %s30, %s31
    %p33 = scmp.eq.s32.totalorder %s32, 0
    %s35 = sadd.s32 %s34, 1
    %s36 = scalar_select %p33, %s34, %s35
    %p39 = pneg %p33
    %p40 = scmp.eq.s32.totalorder %s10, 3
    %p41 = por %p39, %p40
    %p42 = scmp.ne.s32.totalorder %s34, %s37
    %p43 = scmp.eq.s32.totalorder %s10, 0
    %p44 = por %p42, %p43
    %p45 = scmp.ne.s32.totalorder %s34, %s37
    %p46 = scmp.eq.s32.totalorder %s15, 3
    %p47 = por %p45, %p46
    %p48 = scmp.ne.s32.totalorder %s37, %s38
    %p49 = scmp.eq.s32.totalorder %s15, 0
    %p50 = por %p48, %p49
    %p51 = scmp.ne.s32.totalorder %s37, %s38
    %p52 = scmp.eq.s32.totalorder %s16, 3
    %p53 = por %p51, %p52
    %p55 = scmp.ne.s32.totalorder %s38, %s54
    %p56 = scmp.eq.s32.totalorder %s16, 0
    %p57 = por %p55, %p56
    %s58 = ssub.s32 %s17, %s29
    %p59 = scmp.eq.s32.totalorder %s58, 0
    %s61 = sadd.s32 %s60, 1
    %s62 = scalar_select %p59, %s60, %s61
    %p65 = pneg %p59
    %p66 = scmp.eq.s32.totalorder %s10, 3
    %p67 = por %p65, %p66
    %p68 = scmp.ne.s32.totalorder %s60, %s63
    %p69 = scmp.eq.s32.totalorder %s10, 0
    %p70 = por %p68, %p69
    %p71 = scmp.ne.s32.totalorder %s60, %s63
    %p72 = scmp.eq.s32.totalorder %s15, 3
    %p73 = por %p71, %p72
    %p74 = scmp.ne.s32.totalorder %s63, %s64
    %p75 = scmp.eq.s32.totalorder %s15, 0
    %p76 = por %p74, %p75
    %p77 = scmp.ne.s32.totalorder %s63, %s64
    %p78 = scmp.eq.s32.totalorder %s16, 3
    %p79 = por %p77, %p78
    %p81 = scmp.ne.s32.totalorder %s64, %s80
    %p82 = scmp.eq.s32.totalorder %s16, 0
    %p83 = por %p81, %p82
    %s84 = ssub.s32 %s17, %s29
    %s85 = ssub.s32 %s18, %s25
    %s86 = sor.u32 %s84, %s85
    %p87 = scmp.eq.s32.totalorder %s86, 0
    %s89 = sadd.s32 %s88, 1
    %s90 = scalar_select %p87, %s88, %s89
    %p93 = pneg %p87
    %p94 = scmp.eq.s32.totalorder %s10, 3
    %p95 = por %p93, %p94
    %p96 = scmp.ne.s32.totalorder %s88, %s91
    %p97 = scmp.eq.s32.totalorder %s10, 0
    %p98 = por %p96, %p97
    %p99 = scmp.ne.s32.totalorder %s88, %s91
    %p100 = scmp.eq.s32.totalorder %s15, 3
    %p101 = por %p99, %p100
    %p102 = scmp.ne.s32.totalorder %s91, %s92
    %p103 = scmp.eq.s32.totalorder %s15, 0
    %p104 = por %p102, %p103
    %p105 = scmp.ne.s32.totalorder %s91, %s92
    %p106 = scmp.eq.s32.totalorder %s16, 3
    %p107 = por %p105, %p106
    %p109 = scmp.ne.s32.totalorder %s92, %s108
    %p110 = scmp.eq.s32.totalorder %s16, 0
    %p111 = por %p109, %p110
    %s112 = ssub.s32 %s17, %s29
    %s113 = ssub.s32 %s18, %s25
    %s114 = sor.u32 %s112, %s113
    %p115 = scmp.eq.s32.totalorder %s114, 0
    %s117 = sadd.s32 %s116, 1
    %s118 = scalar_select %p115, %s116, %s117
    %p121 = pneg %p115
    %p122 = scmp.eq.s32.totalorder %s10, 3
    %p123 = por %p121, %p122
    %p124 = scmp.ne.s32.totalorder %s116, %s119
    %p125 = scmp.eq.s32.totalorder %s10, 0
    %p126 = por %p124, %p125
    %p127 = scmp.ne.s32.totalorder %s116, %s119
    %p128 = scmp.eq.s32.totalorder %s15, 3
    %p129 = por %p127, %p128
    %p130 = scmp.ne.s32.totalorder %s119, %s120
    %p131 = scmp.eq.s32.totalorder %s15, 0
    %p132 = por %p130, %p131
    %p133 = scmp.ne.s32.totalorder %s119, %s120
    %p134 = scmp.eq.s32.totalorder %s16, 3
    %p135 = por %p133, %p134
    %p137 = scmp.ne.s32.totalorder %s120, %s136
    %p138 = scmp.eq.s32.totalorder %s16, 0
    %p139 = por %p137, %p138
    %p140 = scmp.le.s32.totalorder 1, %s10
    %p141 = scmp.lt.s32.totalorder %s10, 5
    %p142 = pnand %p140, %p141
    %p143 = pneg %p142
    // Predicated region
    $region9: #{_lambda_.9} parent=5 // pred_check
      _
    $region10: #{_lambda_.9} parent=5 // pred_check_branch
      %145 = sbr.rel (%p142) target = $region12
    $region11: #{_lambda_.9} parent=5 // pred_region
      %s146 = ssub.s32 %s10, 1
    $region12: #{_lambda_.9} parent=5 // pred_fallthru
      _
    %p147 = scmp.lt.s32.totalorder %s10, 4
    // Predicated region
    $region13: #{_lambda_.9} parent=5 // pred_check
      %p148 = pneg %p147
    $region14: #{_lambda_.9} parent=5 // pred_check_branch
      %150 = sbr.rel (%p148) target = $region16
    $region15: #{_lambda_.9} parent=5 // pred_region
      // Predicated region
      $region17: #{_lambda_.9} parent=15 // pred_check
        %p151 = pneg %p44
      $region18: #{_lambda_.9} parent=15 // pred_check_branch
        %153 = sbr.rel (%p151) target = $region20
      $region19: #{_lambda_.9} parent=15 // pred_region
        %p154 = scmp.lt.s32.totalorder %s17, 3
        %s155 = scalar_select %p154, %s17, 3
        %p156 = scmp.lt.s32.totalorder %s18, 0
        %s157 = scalar_select %p156, %s18, 0
        %s158 = sadd.s32 %s157, %s155
        %s159 = smul.addr %s158, 4
        %s160 = scalar_lea.vmem %s0, %s159
      $region20: #{_lambda_.9} parent=15 // pred_fallthru
        _
      // Predicated region
      $region21: #{_lambda_.9} parent=15 // pred_check
        %p161 = pneg %p70
      $region22: #{_lambda_.9} parent=15 // pred_check_branch
        %163 = sbr.rel (%p161) target = $region24
      $region23: #{_lambda_.9} parent=15 // pred_region
        %p164 = scmp.lt.s32.totalorder %s17, 3
        %s165 = scalar_select %p164, %s17, 3
        %s166 = smul.addr %s165, 16
        %s167 = smul.addr %s166, 4
        %s168 = scalar_lea.vmem %s1, %s167
      $region24: #{_lambda_.9} parent=15 // pred_fallthru
        _
    $region16: #{_lambda_.9} parent=5 // pred_fallthru
      _
    %p169 = scmp.le.s32.totalorder 1, %s10
    %p170 = scmp.lt.s32.totalorder %s10, 5
    %p171 = pnand %p169, %p170
    %p172 = pneg %p171
    // Predicated region
    $region25: #{_lambda_.9} parent=5 // pred_check
      _
    $region26: #{_lambda_.9} parent=5 // pred_check_branch
      %174 = sbr.rel (%p171) target = $region28
    $region27: #{_lambda_.9} parent=5 // pred_region
      %s175 = ssub.s32 %s10, 1
      %p176 = scmp.lt.s32.totalorder %s19, 3
      %s177 = scalar_select %p176, %s19, 3
      %p178 = scmp.lt.s32.totalorder %s20, 0
      %s179 = scalar_select %p178, %s20, 0
      %s180 = sadd.s32 %s179, %s177
      %s181 = smul.addr %s180, 4
      %s182 = scalar_lea.vmem %s0, %s181
      %p183 = pneg %p50
      %p184 = pneg %p47
      %p185 = scmp.lt.s32.totalorder %s19, 3
      %s186 = scalar_select %p185, %s19, 3
      %s187 = smul.addr %s186, 16
      %s188 = smul.addr %s187, 4
      %s189 = scalar_lea.vmem %s1, %s188
      %p190 = pneg %p76
      %p191 = pneg %p73
      %p192 = pneg %p104
      %p193 = pneg %p101
      %p194 = scmp.lt.s32.totalorder %s19, 3
      %s195 = scalar_select %p194, %s19, 3
      %p196 = scmp.lt.s32.totalorder %s20, 0
      %s197 = scalar_select %p196, %s20, 0
      %s198 = sadd.s32 %s197, %s195
      %s199 = smul.addr %s198, 8
      %s200 = scalar_lea.vmem %s2, %s199
      %p201 = pneg %p132
      %p202 = pneg %p129
      %p203 = scmp.lt.s32.totalorder %s19, 3
      %s204 = scalar_select %p203, %s19, 3
      %p205 = scmp.lt.s32.totalorder %s20, 0
      %s206 = scalar_select %p205, %s20, 0
      %s207 = sadd.s32 %s206, %s204
      %s208 = smul.addr %s207, 2
      %s209 = scalar_lea.vmem %s3, %s208
      %p210 = scmp.lt.s32.totalorder %s19, 3
      %s211 = scalar_select %p210, %s19, 3
      %p212 = scmp.lt.s32.totalorder %s20, 0
      %s213 = scalar_select %p212, %s20, 0
      %s214 = sadd.s32 %s213, %s211
      %s215 = smul.addr %s214, 4
      %s216 = scalar_lea.vmem %s0, %s215
      %p217 = scmp.lt.s32.totalorder %s19, 3
      %s218 = scalar_select %p217, %s19, 3
      %s219 = smul.addr %s218, 16
      %s220 = smul.addr %s219, 4
      %s221 = scalar_lea.vmem %s1, %s220
      %p222 = scmp.lt.s32.totalorder %s19, 3
      %s223 = scalar_select %p222, %s19, 3
      %p224 = scmp.lt.s32.totalorder %s20, 0
      %s225 = scalar_select %p224, %s20, 0
      %s226 = sadd.s32 %s225, %s223
      %s227 = smul.addr %s226, 8
      %s228 = scalar_lea.vmem %s2, %s227
      %p229 = scmp.lt.s32.totalorder %s19, 3
      %s230 = scalar_select %p229, %s19, 3
      %p231 = scmp.lt.s32.totalorder %s20, 0
      %s232 = scalar_select %p231, %s20, 0
      %s233 = sadd.s32 %s232, %s230
      %s234 = smul.addr %s233, 2
      %s235 = scalar_lea.vmem %s3, %s234
      %v237 = vld [vmem:[%s216] sm:$0xf]
      %v238 = vld [vmem:[%s221] sm:$0xf]
      %v239 = vld [vmem:[%s221 + $0x4] sm:$0xf]
      %v240 = vld [vmem:[%s221 + $0x8] sm:$0xf]
      %v241 = vld [vmem:[%s221 + $0xc] sm:$0xf]
      %v242 = vld [vmem:[%s221 + $0x10] sm:$0xf]
      %v243 = vld [vmem:[%s221 + $0x14] sm:$0xf]
      %v244 = vld [vmem:[%s221 + $0x18] sm:$0xf]
      %v245 = vld [vmem:[%s221 + $0x1c] sm:$0xf]
      %v246 = vld [vmem:[%s221 + $0x20] sm:$0xf]
      %v247 = vld [vmem:[%s221 + $0x24] sm:$0xf]
      %v248 = vld [vmem:[%s221 + $0x28] sm:$0xf]
      %v249 = vld [vmem:[%s221 + $0x2c] sm:$0xf]
      %v250 = vld [vmem:[%s221 + $0x30] sm:$0xf]
      %v251 = vld [vmem:[%s221 + $0x34] sm:$0xf]
      %v252 = vld [vmem:[%s221 + $0x38] sm:$0xf]
      %v253 = vld [vmem:[%s221 + $0x3c] sm:$0xf]
      %v270 = vunpack.c.l.b16 %v238
      %v271 = vunpack.c.l.b16 %v239
      %v272 = vunpack.c.l.b16 %v240
      %v273 = vunpack.c.l.b16 %v241
      %v274 = vunpack.c.l.b16 %v242
      %v275 = vunpack.c.l.b16 %v243
      %v276 = vunpack.c.l.b16 %v244
      %v277 = vunpack.c.l.b16 %v245
      %v278 = vunpack.c.l.b16 %v246
      %v279 = vunpack.c.l.b16 %v247
      %v280 = vunpack.c.l.b16 %v248
      %v281 = vunpack.c.l.b16 %v249
      %v282 = vunpack.c.l.b16 %v250
      %v283 = vunpack.c.l.b16 %v251
      %v284 = vunpack.c.l.b16 %v252
      %v285 = vunpack.c.l.b16 %v253
      %v286 = vpack.c.b16 %v271, %v270
      %v287 = vpack.c.b16 %v273, %v272
      %v288 = vpack.c.b16 %v275, %v274
      %v289 = vpack.c.b16 %v277, %v276
      %v290 = vpack.c.b16 %v279, %v278
      %v291 = vpack.c.b16 %v281, %v280
      %v292 = vpack.c.b16 %v283, %v282
      %v293 = vpack.c.b16 %v285, %v284
      %302 = vmatprep.subr.bf16.mxu0 0
      %303 = vmatpush1.bf16.msra.mxu0 %v293
      %304 = vmatprep.subr.bf16.mxu0 0
      %305 = vmatpush1.bf16.msra.mxu0 %v292
      %306 = vmatprep.subr.bf16.mxu0 0
      %307 = vmatpush1.bf16.msra.mxu0 %v291
      %308 = vmatprep.subr.bf16.mxu0 0
      %309 = vmatpush1.bf16.msra.mxu0 %v290
      %310 = vmatprep.subr.bf16.mxu0 0
      %311 = vmatpush1.bf16.msra.mxu0 %v289
      %312 = vmatprep.subr.bf16.mxu0 0
      %313 = vmatpush1.bf16.msra.mxu0 %v288
      %314 = vmatprep.subr.bf16.mxu0 0
      %315 = vmatpush1.bf16.msra.mxu0 %v287
      %316 = vmatprep.subr.bf16.mxu0 0
      %317 = vmatpush1.bf16.msra.mxu0 %v286
      %318 = vmatprep.subr.bf16.mxu0 0
      %319 = vmatpush2.bf16.msra.mxu0 0
      %320 = vmatprep.subr.bf16.mxu0 0
      %321 = vmatpush2.bf16.msra.mxu0 0
      %322 = vmatprep.subr.bf16.mxu0 0
      %323 = vmatpush2.bf16.msra.mxu0 0
      %324 = vmatprep.subr.bf16.mxu0 0
      %325 = vmatpush2.bf16.msra.mxu0 0
      %326 = vmatprep.subr.bf16.mxu0 0
      %327 = vmatpush2.bf16.msra.mxu0 0
      %328 = vmatprep.subr.bf16.mxu0 0
      %329 = vmatpush2.bf16.msra.mxu0 0
      %330 = vmatprep.subr.bf16.mxu0 0
      %331 = vmatpush2.bf16.msra.mxu0 0
      %332 = vmatprep.subr.bf16.mxu0 0
      %333 = vmatpush2.bf16.msra.mxu0 0
      %334 = vmatprep.mubr.bf16.mxu0 0
      %335 = vmatmul.mubr.bf16.gmra.mxu0 %v237
      %v336 = vpop.f32.mrf.mxu0
      %v337 = vadd.f32 0.0, %v336
      %v338 = vpop.f32.mrf.mxu0
      %v339 = vpop.f32.mrf.mxu0
      %v340 = vpop.f32.mrf.mxu0
      %341 = vdwg.mxu0
      %342 = vst [vmem:[%s228] sm:$0xff] %v337
      %v343 = vrot.slane %v337, 4
      %v344 = vadd.f32 %v337, %v343
      %v345 = vrot.slane %v344, 2
      %v346 = vadd.f32 %v344, %v345
      %v347 = vrot.slane %v346, 1
      %v348 = vadd.f32 %v346, %v347
      %v349 = vmul.f32 %v337, %v337
      %v350 = vrot.slane %v349, 4
      %v351 = vadd.f32 %v349, %v350
      %v352 = vrot.slane %v351, 2
      %v353 = vadd.f32 %v351, %v352
      %v354 = vrot.slane %v353, 1
      %v355 = vadd.f32 %v353, %v354
      %vm356 = vcmask 1040384
      %v357 = vsel %vm356, %v348, %v355
      %358 = vst [vmem:[%s235] sm:$0x3] %v357
      %p359 = scmp.lt.s32.totalorder %s19, 3
      %s360 = scalar_select %p359, %s19, 3
      %p361 = scmp.lt.s32.totalorder %s20, 0
      %s362 = scalar_select %p361, %s20, 0
      %s363 = sadd.s32 %s362, %s360
      %s364 = smul.addr %s363, 8
      %s365 = scalar_lea.vmem %s2, %s364
      %p366 = scmp.lt.s32.totalorder %s19, 3
      %s367 = scalar_select %p366, %s19, 3
      %p368 = scmp.lt.s32.totalorder %s20, 0
      %s369 = scalar_select %p368, %s20, 0
      %s370 = sadd.s32 %s369, %s367
      %s371 = smul.addr %s370, 2
      %s372 = scalar_lea.vmem %s3, %s371
      // Predicated region
      $region29: #{_lambda_.9} parent=27 // pred_check
        %p373 = pneg %p101
      $region30: #{_lambda_.9} parent=27 // pred_check_branch
        %375 = sbr.rel (%p373) target = $region32
      $region31: #{_lambda_.9} parent=27 // pred_region
        _
      $region32: #{_lambda_.9} parent=27 // pred_fallthru
        _
      // Predicated region
      $region33: #{_lambda_.9} parent=27 // pred_check
        %p376 = pneg %p129
      $region34: #{_lambda_.9} parent=27 // pred_check_branch
        %378 = sbr.rel (%p376) target = $region36
      $region35: #{_lambda_.9} parent=27 // pred_region
        _
      $region36: #{_lambda_.9} parent=27 // pred_fallthru
        _
    $region28: #{_lambda_.9} parent=5 // pred_fallthru
      _
    %p379 = scmp.le.s32.totalorder 2, %s10
    // Predicated region
    $region37: #{_lambda_.9} parent=5 // pred_check
      %p380 = pneg %p379
    $region38: #{_lambda_.9} parent=5 // pred_check_branch
      %382 = sbr.rel (%p380) target = $region40
    $region39: #{_lambda_.9} parent=5 // pred_region
      %s383 = ssub.s32 %s10, 2
      // Predicated region
      $region41: #{_lambda_.9} parent=39 // pred_check
        %p384 = pneg %p107
      $region42: #{_lambda_.9} parent=39 // pred_check_branch
        %386 = sbr.rel (%p384) target = $region44
      $region43: #{_lambda_.9} parent=39 // pred_region
        %p387 = scmp.lt.s32.totalorder %s21, 3
        %s388 = scalar_select %p387, %s21, 3
        %p389 = scmp.lt.s32.totalorder %s22, 0
        %s390 = scalar_select %p389, %s22, 0
        %s391 = sadd.s32 %s390, %s388
        %s392 = smul.addr %s391, 8
        %s393 = scalar_lea.vmem %s2, %s392
      $region44: #{_lambda_.9} parent=39 // pred_fallthru
        _
      // Predicated region
      $region45: #{_lambda_.9} parent=39 // pred_check
        %p394 = pneg %p135
      $region46: #{_lambda_.9} parent=39 // pred_check_branch
        %396 = sbr.rel (%p394) target = $region48
      $region47: #{_lambda_.9} parent=39 // pred_region
        %p397 = scmp.lt.s32.totalorder %s21, 3
        %s398 = scalar_select %p397, %s21, 3
        %p399 = scmp.lt.s32.totalorder %s22, 0
        %s400 = scalar_select %p399, %s22, 0
        %s401 = sadd.s32 %s400, %s398
        %s402 = smul.addr %s401, 2
        %s403 = scalar_lea.vmem %s3, %s402
      $region48: #{_lambda_.9} parent=39 // pred_fallthru
        _
    $region40: #{_lambda_.9} parent=5 // pred_fallthru
      _
  $region6: #{_lambda_.9} parent=0 // loop_footer
    %s14 = sadd.s32 1, %s10
  $region7: #{_lambda_.9} parent=0 // loop_footer_branch
    %9 = sbr.rel target = $region3
  $region8: #{_lambda_.9} parent=0 // loop_exit
    _

// kernel: _lambda_.10
$region0: #{_lambda_.10}
  #allocation0 [shape = 'u32[]', space=smem, size = 0x4, offset = 0x4, fixed_abs, tag = 'smem constant byte address 0x4 - core index']
  #allocation1 [shape = 'u32[144,128]{1,0:T(1,128)}', space=vmem, size = 0x12000, scoped, tag = 'internal scratch']
  %s0 = inlined_call_operand.vmem [shape: f32[4,8,128], index: 0, kind: input, shape index: {}]
  %s1 = inlined_call_operand.vmem [shape: f32[1,128], index: 1, kind: input, shape index: {}]
  %s2 = inlined_call_operand.vmem [shape: f32[1,128], index: 2, kind: input, shape index: {}]
  %s3 = inlined_call_operand.vmem [shape: bf16[4,8,128], index: 3, kind: output, shape index: {}]
  %s4 = sld [smem:[#allocation0]]
  $region45: #{_lambda_.10} parent=0
    _
  %s6 = ssub.s32 1, %s4
  %s7 = scalar_select 0, %s6, %s4
  loop: start=0, step=1, limit=6
  $region2: #{_lambda_.10} parent=0 // loop_pre_header
    _
  $region3: #{_lambda_.10} parent=0 // loop_header
    %s9 = sphi 0, %s13
    %p10 = scmp.ge.s32.totalorder %s9, 6
    %s16 = sphi 0, %s28
    %s17 = sphi 0, %s24
    %s18 = sphi 0, %s16
    %s19 = sphi 0, %s17
    %s20 = sphi 0, %s18
    %s21 = sphi 0, %s19
    %s33 = sphi 0, %s35
    %s36 = sphi 0, %s33
    %s37 = sphi 0, %s36
    %s53 = sphi 0, %s37
    %s57 = sphi 0, %s57
    %s59 = sphi 0, %s57
    %s60 = sphi 0, %s59
    %s74 = sphi 0, %s60
    %s78 = sphi 0, %s78
    %s80 = sphi 0, %s78
    %s81 = sphi 0, %s80
    %s95 = sphi 0, %s81
    %s103 = sphi 0, %s105
    %s106 = sphi 0, %s103
    %s107 = sphi 0, %s106
    %s123 = sphi 0, %s107
  $region4: #{_lambda_.10} parent=0 // loop_header_branch
    %12 = sbr.rel (%p10) target = $region8
  $region5: #{_lambda_.10} parent=0 // loop_body
    %s14 = ssub.s32 %s9, 1
    %s15 = ssub.s32 %s9, 2
    %s22 = sadd.s32 1, %s17
    %p23 = scmp.ge.s32.totalorder %s22, 1
    %s24 = scalar_select %p23, 0, %s22
    %s25 = sadd.s32 1, %s16
    %s26 = scalar_select %p23, %s25, %s16
    %p27 = scmp.ge.s32.totalorder %s26, 4
    %s28 = scalar_select %p27, 0, %s26
    %s29 = ssub.s32 %s16, %s28
    %s30 = ssub.s32 %s17, %s24
    %s31 = sor.u32 %s29, %s30
    %p32 = scmp.eq.s32.totalorder %s31, 0
    %s34 = sadd.s32 %s33, 1
    %s35 = scalar_select %p32, %s33, %s34
    %p38 = pneg %p32
    %p39 = scmp.eq.s32.totalorder %s9, 3
    %p40 = por %p38, %p39
    %p41 = scmp.ne.s32.totalorder %s33, %s36
    %p42 = scmp.eq.s32.totalorder %s9, 0
    %p43 = por %p41, %p42
    %p44 = scmp.ne.s32.totalorder %s33, %s36
    %p45 = scmp.eq.s32.totalorder %s14, 3
    %p46 = por %p44, %p45
    %p47 = scmp.ne.s32.totalorder %s36, %s37
    %p48 = scmp.eq.s32.totalorder %s14, 0
    %p49 = por %p47, %p48
    %p50 = scmp.ne.s32.totalorder %s36, %s37
    %p51 = scmp.eq.s32.totalorder %s15, 3
    %p52 = por %p50, %p51
    %p54 = scmp.ne.s32.totalorder %s37, %s53
    %p55 = scmp.eq.s32.totalorder %s15, 0
    %p56 = por %p54, %p55
    %s58 = sadd.s32 %s57, 1
    %p61 = scmp.eq.s32.totalorder %s9, 3
    %p62 = scmp.ne.s32.totalorder %s57, %s59
    %p63 = scmp.eq.s32.totalorder %s9, 0
    %p64 = por %p62, %p63
    %p65 = scmp.ne.s32.totalorder %s57, %s59
    %p66 = scmp.eq.s32.totalorder %s14, 3
    %p67 = por %p65, %p66
    %p68 = scmp.ne.s32.totalorder %s59, %s60
    %p69 = scmp.eq.s32.totalorder %s14, 0
    %p70 = por %p68, %p69
    %p71 = scmp.ne.s32.totalorder %s59, %s60
    %p72 = scmp.eq.s32.totalorder %s15, 3
    %p73 = por %p71, %p72
    %p75 = scmp.ne.s32.totalorder %s60, %s74
    %p76 = scmp.eq.s32.totalorder %s15, 0
    %p77 = por %p75, %p76
    %s79 = sadd.s32 %s78, 1
    %p82 = scmp.eq.s32.totalorder %s9, 3
    %p83 = scmp.ne.s32.totalorder %s78, %s80
    %p84 = scmp.eq.s32.totalorder %s9, 0
    %p85 = por %p83, %p84
    %p86 = scmp.ne.s32.totalorder %s78, %s80
    %p87 = scmp.eq.s32.totalorder %s14, 3
    %p88 = por %p86, %p87
    %p89 = scmp.ne.s32.totalorder %s80, %s81
    %p90 = scmp.eq.s32.totalorder %s14, 0
    %p91 = por %p89, %p90
    %p92 = scmp.ne.s32.totalorder %s80, %s81
    %p93 = scmp.eq.s32.totalorder %s15, 3
    %p94 = por %p92, %p93
    %p96 = scmp.ne.s32.totalorder %s81, %s95
    %p97 = scmp.eq.s32.totalorder %s15, 0
    %p98 = por %p96, %p97
    %s99 = ssub.s32 %s16, %s28
    %s100 = ssub.s32 %s17, %s24
    %s101 = sor.u32 %s99, %s100
    %p102 = scmp.eq.s32.totalorder %s101, 0
    %s104 = sadd.s32 %s103, 1
    %s105 = scalar_select %p102, %s103, %s104
    %p108 = pneg %p102
    %p109 = scmp.eq.s32.totalorder %s9, 3
    %p110 = por %p108, %p109
    %p111 = scmp.ne.s32.totalorder %s103, %s106
    %p112 = scmp.eq.s32.totalorder %s9, 0
    %p113 = por %p111, %p112
    %p114 = scmp.ne.s32.totalorder %s103, %s106
    %p115 = scmp.eq.s32.totalorder %s14, 3
    %p116 = por %p114, %p115
    %p117 = scmp.ne.s32.totalorder %s106, %s107
    %p118 = scmp.eq.s32.totalorder %s14, 0
    %p119 = por %p117, %p118
    %p120 = scmp.ne.s32.totalorder %s106, %s107
    %p121 = scmp.eq.s32.totalorder %s15, 3
    %p122 = por %p120, %p121
    %p124 = scmp.ne.s32.totalorder %s107, %s123
    %p125 = scmp.eq.s32.totalorder %s15, 0
    %p126 = por %p124, %p125
    %p127 = scmp.le.s32.totalorder 1, %s9
    %p128 = scmp.lt.s32.totalorder %s9, 5
    %p129 = pnand %p127, %p128
    %p130 = pneg %p129
    // Predicated region
    $region9: #{_lambda_.10} parent=5 // pred_check
      _
    $region10: #{_lambda_.10} parent=5 // pred_check_branch
      %132 = sbr.rel (%p129) target = $region12
    $region11: #{_lambda_.10} parent=5 // pred_region
      %s133 = ssub.s32 %s9, 1
      // Predicated region
      $region13: #{_lambda_.10} parent=11 // pred_check
        %p134 = pneg %p70
      $region14: #{_lambda_.10} parent=11 // pred_check_branch
        %136 = sbr.rel (%p134) target = $region16
      $region15: #{_lambda_.10} parent=11 // pred_region
        _
      $region16: #{_lambda_.10} parent=11 // pred_fallthru
        _
      // Predicated region
      $region17: #{_lambda_.10} parent=11 // pred_check
        %p137 = pneg %p91
      $region18: #{_lambda_.10} parent=11 // pred_check_branch
        %139 = sbr.rel (%p137) target = $region20
      $region19: #{_lambda_.10} parent=11 // pred_region
        _
      $region20: #{_lambda_.10} parent=11 // pred_fallthru
        _
    $region12: #{_lambda_.10} parent=5 // pred_fallthru
      _
    %p140 = scmp.lt.s32.totalorder %s9, 4
    // Predicated region
    $region21: #{_lambda_.10} parent=5 // pred_check
      %p141 = pneg %p140
    $region22: #{_lambda_.10} parent=5 // pred_check_branch
      %143 = sbr.rel (%p141) target = $region24
    $region23: #{_lambda_.10} parent=5 // pred_region
      // Predicated region
      $region25: #{_lambda_.10} parent=23 // pred_check
        %p144 = pneg %p43
      $region26: #{_lambda_.10} parent=23 // pred_check_branch
        %146 = sbr.rel (%p144) target = $region28
      $region27: #{_lambda_.10} parent=23 // pred_region
        %p147 = scmp.lt.s32.totalorder %s16, 3
        %s148 = scalar_select %p147, %s16, 3
        %p149 = scmp.lt.s32.totalorder %s17, 0
        %s150 = scalar_select %p149, %s17, 0
        %s151 = sadd.s32 %s150, %s148
        %s152 = smul.addr %s151, 8
        %s153 = scalar_lea.vmem %s0, %s152
      $region28: #{_lambda_.10} parent=23 // pred_fallthru
        _
    $region24: #{_lambda_.10} parent=5 // pred_fallthru
      _
    %p154 = scmp.le.s32.totalorder 1, %s9
    %p155 = scmp.lt.s32.totalorder %s9, 5
    %p156 = pnand %p154, %p155
    %p157 = pneg %p156
    // Predicated region
    $region29: #{_lambda_.10} parent=5 // pred_check
      _
    $region30: #{_lambda_.10} parent=5 // pred_check_branch
      %159 = sbr.rel (%p156) target = $region32
    $region31: #{_lambda_.10} parent=5 // pred_region
      %s160 = ssub.s32 %s9, 1
      %p161 = scmp.lt.s32.totalorder %s18, 3
      %s162 = scalar_select %p161, %s18, 3
      %p163 = scmp.lt.s32.totalorder %s19, 0
      %s164 = scalar_select %p163, %s19, 0
      %s165 = sadd.s32 %s164, %s162
      %s166 = smul.addr %s165, 8
      %s167 = scalar_lea.vmem %s0, %s166
      %p168 = pneg %p49
      %p169 = pneg %p46
      %p170 = pneg %p70
      %p171 = pneg %p67
      %p172 = pneg %p91
      %p173 = pneg %p88
      %p174 = pneg %p119
      %p175 = pneg %p116
      %p176 = scmp.lt.s32.totalorder %s18, 3
      %s177 = scalar_select %p176, %s18, 3
      %p178 = scmp.lt.s32.totalorder %s19, 0
      %s179 = scalar_select %p178, %s19, 0
      %s180 = sadd.s32 %s179, %s177
      %s181 = smul.addr %s180, 4
      %s182 = scalar_lea.vmem %s3, %s181
      %p183 = scmp.lt.s32.totalorder %s18, 3
      %s184 = scalar_select %p183, %s18, 3
      %p185 = scmp.lt.s32.totalorder %s19, 0
      %s186 = scalar_select %p185, %s19, 0
      %s187 = sadd.s32 %s186, %s184
      %s188 = smul.addr %s187, 8
      %s189 = scalar_lea.vmem %s0, %s188
      %p190 = scmp.lt.s32.totalorder %s18, 3
      %s191 = scalar_select %p190, %s18, 3
      %p192 = scmp.lt.s32.totalorder %s19, 0
      %s193 = scalar_select %p192, %s19, 0
      %s194 = sadd.s32 %s193, %s191
      %s195 = smul.addr %s194, 4
      %s196 = scalar_lea.vmem %s3, %s195
      %v197 = vld [vmem:[%s189] sm:$0xff]
      %v198 = vld [vmem:[%s1] sm:$0x1]
      %v200 = vlaneseq
      %v201 = vshrl.u32 %v200, 7
      %v202 = vsub.s32 0, %v201
      %v203 = vrot.slane %v198, %v202
      %v205 = vmul.f32 %v197, %v203
      %v206 = vld [vmem:[%s2] sm:$0x1]
      %v208 = vlaneseq
      %v209 = vshrl.u32 %v208, 7
      %v210 = vsub.s32 0, %v209
      %v211 = vrot.slane %v206, %v210
      %v213 = vadd.f32 %v205, %v211
      %v214 = vmax.f32 %v213, 0.0
      %v215 = vpack.c.bf16 %v214, %v214
      %216 = vst [vmem:[%s196] sm:$0xf] %v215
      %p217 = scmp.lt.s32.totalorder %s18, 3
      %s218 = scalar_select %p217, %s18, 3
      %p219 = scmp.lt.s32.totalorder %s19, 0
      %s220 = scalar_select %p219, %s19, 0
      %s221 = sadd.s32 %s220, %s218
      %s222 = smul.addr %s221, 4
      %s223 = scalar_lea.vmem %s3, %s222
      // Predicated region
      $region33: #{_lambda_.10} parent=31 // pred_check
        %p224 = pneg %p116
      $region34: #{_lambda_.10} parent=31 // pred_check_branch
        %226 = sbr.rel (%p224) target = $region36
      $region35: #{_lambda_.10} parent=31 // pred_region
        _
      $region36: #{_lambda_.10} parent=31 // pred_fallthru
        _
    $region32: #{_lambda_.10} parent=5 // pred_fallthru
      _
    %p227 = scmp.le.s32.totalorder 2, %s9
    // Predicated region
    $region37: #{_lambda_.10} parent=5 // pred_check
      %p228 = pneg %p227
    $region38: #{_lambda_.10} parent=5 // pred_check_branch
      %230 = sbr.rel (%p228) target = $region40
    $region39: #{_lambda_.10} parent=5 // pred_region
      %s231 = ssub.s32 %s9, 2
      // Predicated region
      $region41: #{_lambda_.10} parent=39 // pred_check
        %p232 = pneg %p122
      $region42: #{_lambda_.10} parent=39 // pred_check_branch
        %234 = sbr.rel (%p232) target = $region44
      $region43: #{_lambda_.10} parent=39 // pred_region
        %p235 = scmp.lt.s32.totalorder %s20, 3
        %s236 = scalar_select %p235, %s20, 3
        %p237 = scmp.lt.s32.totalorder %s21, 0
        %s238 = scalar_select %p237, %s21, 0
        %s239 = sadd.s32 %s238, %s236
        %s240 = smul.addr %s239, 4
        %s241 = scalar_lea.vmem %s3, %s240
      $region44: #{_lambda_.10} parent=39 // pred_fallthru
        _
    $region40: #{_lambda_.10} parent=5 // pred_fallthru
      _
  $region6: #{_lambda_.10} parent=0 // loop_footer
    %s13 = sadd.s32 1, %s9
  $region7: #{_lambda_.10} parent=0 // loop_footer_branch
    %8 = sbr.rel target = $region3
  $region8: #{_lambda_.10} parent=0 // loop_exit
    _

// kernel: _lambda_.11
$region0: #{_lambda_.11}
  #allocation0 [shape = 'u32[]', space=smem, size = 0x4, offset = 0x4, fixed_abs, tag = 'smem constant byte address 0x4 - core index']
  #allocation1 [shape = 'u32[144,128]{1,0:T(1,128)}', space=vmem, size = 0x12000, scoped, tag = 'internal scratch']
  %s0 = inlined_call_operand.vmem [shape: bf16[4,8,512], index: 0, kind: input, shape index: {}]
  %s1 = inlined_call_operand.vmem [shape: bf16[4,512,128], index: 1, kind: input, shape index: {}]
  %s2 = inlined_call_operand.vmem [shape: f32[4,8,128], index: 2, kind: output, shape index: {0}]
  %s3 = inlined_call_operand.vmem [shape: f32[4,1,2,128], index: 3, kind: output, shape index: {1}]
  %4 = xla_tuple %s2, %s3
  %s5 = sld [smem:[#allocation0]]
  $region49: #{_lambda_.11} parent=0
    _
  %s7 = ssub.s32 1, %s5
  %s8 = scalar_select 0, %s7, %s5
  loop: start=0, step=1, limit=6
  $region2: #{_lambda_.11} parent=0 // loop_pre_header
    _
  $region3: #{_lambda_.11} parent=0 // loop_header
    %s10 = sphi 0, %s14
    %p11 = scmp.ge.s32.totalorder %s10, 6
    %s17 = sphi 0, %s29
    %s18 = sphi 0, %s25
    %s19 = sphi 0, %s17
    %s20 = sphi 0, %s18
    %s21 = sphi 0, %s19
    %s22 = sphi 0, %s20
    %s34 = sphi 0, %s36
    %s37 = sphi 0, %s34
    %s38 = sphi 0, %s37
    %s54 = sphi 0, %s38
    %s60 = sphi 0, %s62
    %s63 = sphi 0, %s60
    %s64 = sphi 0, %s63
    %s80 = sphi 0, %s64
    %s88 = sphi 0, %s90
    %s91 = sphi 0, %s88
    %s92 = sphi 0, %s91
    %s108 = sphi 0, %s92
    %s116 = sphi 0, %s118
    %s119 = sphi 0, %s116
    %s120 = sphi 0, %s119
    %s136 = sphi 0, %s120
  $region4: #{_lambda_.11} parent=0 // loop_header_branch
    %13 = sbr.rel (%p11) target = $region8
  $region5: #{_lambda_.11} parent=0 // loop_body
    %s15 = ssub.s32 %s10, 1
    %s16 = ssub.s32 %s10, 2
    %s23 = sadd.s32 1, %s18
    %p24 = scmp.ge.s32.totalorder %s23, 1
    %s25 = scalar_select %p24, 0, %s23
    %s26 = sadd.s32 1, %s17
    %s27 = scalar_select %p24, %s26, %s17
    %p28 = scmp.ge.s32.totalorder %s27, 4
    %s29 = scalar_select %p28, 0, %s27
    %s30 = ssub.s32 %s17, %s29
    %s31 = ssub.s32 %s18, %s25
    %s32 = sor.u32 %s30, %s31
    %p33 = scmp.eq.s32.totalorder %s32, 0
    %s35 = sadd.s32 %s34, 1
    %s36 = scalar_select %p33, %s34, %s35
    %p39 = pneg %p33
    %p40 = scmp.eq.s32.totalorder %s10, 3
    %p41 = por %p39, %p40
    %p42 = scmp.ne.s32.totalorder %s34, %s37
    %p43 = scmp.eq.s32.totalorder %s10, 0
    %p44 = por %p42, %p43
    %p45 = scmp.ne.s32.totalorder %s34, %s37
    %p46 = scmp.eq.s32.totalorder %s15, 3
    %p47 = por %p45, %p46
    %p48 = scmp.ne.s32.totalorder %s37, %s38
    %p49 = scmp.eq.s32.totalorder %s15, 0
    %p50 = por %p48, %p49
    %p51 = scmp.ne.s32.totalorder %s37, %s38
    %p52 = scmp.eq.s32.totalorder %s16, 3
    %p53 = por %p51, %p52
    %p55 = scmp.ne.s32.totalorder %s38, %s54
    %p56 = scmp.eq.s32.totalorder %s16, 0
    %p57 = por %p55, %p56
    %s58 = ssub.s32 %s17, %s29
    %p59 = scmp.eq.s32.totalorder %s58, 0
    %s61 = sadd.s32 %s60, 1
    %s62 = scalar_select %p59, %s60, %s61
    %p65 = pneg %p59
    %p66 = scmp.eq.s32.totalorder %s10, 3
    %p67 = por %p65, %p66
    %p68 = scmp.ne.s32.totalorder %s60, %s63
    %p69 = scmp.eq.s32.totalorder %s10, 0
    %p70 = por %p68, %p69
    %p71 = scmp.ne.s32.totalorder %s60, %s63
    %p72 = scmp.eq.s32.totalorder %s15, 3
    %p73 = por %p71, %p72
    %p74 = scmp.ne.s32.totalorder %s63, %s64
    %p75 = scmp.eq.s32.totalorder %s15, 0
    %p76 = por %p74, %p75
    %p77 = scmp.ne.s32.totalorder %s63, %s64
    %p78 = scmp.eq.s32.totalorder %s16, 3
    %p79 = por %p77, %p78
    %p81 = scmp.ne.s32.totalorder %s64, %s80
    %p82 = scmp.eq.s32.totalorder %s16, 0
    %p83 = por %p81, %p82
    %s84 = ssub.s32 %s17, %s29
    %s85 = ssub.s32 %s18, %s25
    %s86 = sor.u32 %s84, %s85
    %p87 = scmp.eq.s32.totalorder %s86, 0
    %s89 = sadd.s32 %s88, 1
    %s90 = scalar_select %p87, %s88, %s89
    %p93 = pneg %p87
    %p94 = scmp.eq.s32.totalorder %s10, 3
    %p95 = por %p93, %p94
    %p96 = scmp.ne.s32.totalorder %s88, %s91
    %p97 = scmp.eq.s32.totalorder %s10, 0
    %p98 = por %p96, %p97
    %p99 = scmp.ne.s32.totalorder %s88, %s91
    %p100 = scmp.eq.s32.totalorder %s15, 3
    %p101 = por %p99, %p100
    %p102 = scmp.ne.s32.totalorder %s91, %s92
    %p103 = scmp.eq.s32.totalorder %s15, 0
    %p104 = por %p102, %p103
    %p105 = scmp.ne.s32.totalorder %s91, %s92
    %p106 = scmp.eq.s32.totalorder %s16, 3
    %p107 = por %p105, %p106
    %p109 = scmp.ne.s32.totalorder %s92, %s108
    %p110 = scmp.eq.s32.totalorder %s16, 0
    %p111 = por %p109, %p110
    %s112 = ssub.s32 %s17, %s29
    %s113 = ssub.s32 %s18, %s25
    %s114 = sor.u32 %s112, %s113
    %p115 = scmp.eq.s32.totalorder %s114, 0
    %s117 = sadd.s32 %s116, 1
    %s118 = scalar_select %p115, %s116, %s117
    %p121 = pneg %p115
    %p122 = scmp.eq.s32.totalorder %s10, 3
    %p123 = por %p121, %p122
    %p124 = scmp.ne.s32.totalorder %s116, %s119
    %p125 = scmp.eq.s32.totalorder %s10, 0
    %p126 = por %p124, %p125
    %p127 = scmp.ne.s32.totalorder %s116, %s119
    %p128 = scmp.eq.s32.totalorder %s15, 3
    %p129 = por %p127, %p128
    %p130 = scmp.ne.s32.totalorder %s119, %s120
    %p131 = scmp.eq.s32.totalorder %s15, 0
    %p132 = por %p130, %p131
    %p133 = scmp.ne.s32.totalorder %s119, %s120
    %p134 = scmp.eq.s32.totalorder %s16, 3
    %p135 = por %p133, %p134
    %p137 = scmp.ne.s32.totalorder %s120, %s136
    %p138 = scmp.eq.s32.totalorder %s16, 0
    %p139 = por %p137, %p138
    %p140 = scmp.le.s32.totalorder 1, %s10
    %p141 = scmp.lt.s32.totalorder %s10, 5
    %p142 = pnand %p140, %p141
    %p143 = pneg %p142
    // Predicated region
    $region9: #{_lambda_.11} parent=5 // pred_check
      _
    $region10: #{_lambda_.11} parent=5 // pred_check_branch
      %145 = sbr.rel (%p142) target = $region12
    $region11: #{_lambda_.11} parent=5 // pred_region
      %s146 = ssub.s32 %s10, 1
    $region12: #{_lambda_.11} parent=5 // pred_fallthru
      _
    %p147 = scmp.lt.s32.totalorder %s10, 4
    // Predicated region
    $region13: #{_lambda_.11} parent=5 // pred_check
      %p148 = pneg %p147
    $region14: #{_lambda_.11} parent=5 // pred_check_branch
      %150 = sbr.rel (%p148) target = $region16
    $region15: #{_lambda_.11} parent=5 // pred_region
      // Predicated region
      $region17: #{_lambda_.11} parent=15 // pred_check
        %p151 = pneg %p44
      $region18: #{_lambda_.11} parent=15 // pred_check_branch
        %153 = sbr.rel (%p151) target = $region20
      $region19: #{_lambda_.11} parent=15 // pred_region
        %p154 = scmp.lt.s32.totalorder %s17, 3
        %s155 = scalar_select %p154, %s17, 3
        %p156 = scmp.lt.s32.totalorder %s18, 0
        %s157 = scalar_select %p156, %s18, 0
        %s158 = smul.addr %s157, 4
        %s159 = smul.addr %s155, 4
        %s160 = sadd.s32 %s158, %s159
        %s161 = smul.addr %s160, 4
        %s162 = scalar_lea.vmem %s0, %s161
      $region20: #{_lambda_.11} parent=15 // pred_fallthru
        _
      // Predicated region
      $region21: #{_lambda_.11} parent=15 // pred_check
        %p163 = pneg %p70
      $region22: #{_lambda_.11} parent=15 // pred_check_branch
        %165 = sbr.rel (%p163) target = $region24
      $region23: #{_lambda_.11} parent=15 // pred_region
        %p166 = scmp.lt.s32.totalorder %s17, 3
        %s167 = scalar_select %p166, %s17, 3
        %s168 = smul.addr %s167, 64
        %s169 = smul.addr %s168, 4
        %s170 = scalar_lea.vmem %s1, %s169
      $region24: #{_lambda_.11} parent=15 // pred_fallthru
        _
    $region16: #{_lambda_.11} parent=5 // pred_fallthru
      _
    %p171 = scmp.le.s32.totalorder 1, %s10
    %p172 = scmp.lt.s32.totalorder %s10, 5
    %p173 = pnand %p171, %p172
    %p174 = pneg %p173
    // Predicated region
    $region25: #{_lambda_.11} parent=5 // pred_check
      _
    $region26: #{_lambda_.11} parent=5 // pred_check_branch
      %176 = sbr.rel (%p173) target = $region28
    $region27: #{_lambda_.11} parent=5 // pred_region
      %s177 = ssub.s32 %s10, 1
      %p178 = scmp.lt.s32.totalorder %s19, 3
      %s179 = scalar_select %p178, %s19, 3
      %p180 = scmp.lt.s32.totalorder %s20, 0
      %s181 = scalar_select %p180, %s20, 0
      %s182 = smul.addr %s181, 4
      %s183 = smul.addr %s179, 4
      %s184 = sadd.s32 %s182, %s183
      %s185 = smul.addr %s184, 4
      %s186 = scalar_lea.vmem %s0, %s185
      %p187 = pneg %p50
      %p188 = pneg %p47
      %p189 = scmp.lt.s32.totalorder %s19, 3
      %s190 = scalar_select %p189, %s19, 3
      %s191 = smul.addr %s190, 64
      %s192 = smul.addr %s191, 4
      %s193 = scalar_lea.vmem %s1, %s192
      %p194 = pneg %p76
      %p195 = pneg %p73
      %p196 = pneg %p104
      %p197 = pneg %p101
      %p198 = scmp.lt.s32.totalorder %s19, 3
      %s199 = scalar_select %p198, %s19, 3
      %p200 = scmp.lt.s32.totalorder %s20, 0
      %s201 = scalar_select %p200, %s20, 0
      %s202 = sadd.s32 %s201, %s199
      %s203 = smul.addr %s202, 8
      %s204 = scalar_lea.vmem %s2, %s203
      %p205 = pneg %p132
      %p206 = pneg %p129
      %p207 = scmp.lt.s32.totalorder %s19, 3
      %s208 = scalar_select %p207, %s19, 3
      %p209 = scmp.lt.s32.totalorder %s20, 0
      %s210 = scalar_select %p209, %s20, 0
      %s211 = sadd.s32 %s210, %s208
      %s212 = smul.addr %s211, 2
      %s213 = scalar_lea.vmem %s3, %s212
      %p214 = scmp.lt.s32.totalorder %s19, 3
      %s215 = scalar_select %p214, %s19, 3
      %p216 = scmp.lt.s32.totalorder %s20, 0
      %s217 = scalar_select %p216, %s20, 0
      %s218 = smul.addr %s217, 4
      %s219 = smul.addr %s215, 4
      %s220 = sadd.s32 %s218, %s219
      %s221 = smul.addr %s220, 4
      %s222 = scalar_lea.vmem %s0, %s221
      %p223 = scmp.lt.s32.totalorder %s19, 3
      %s224 = scalar_select %p223, %s19, 3
      %s225 = smul.addr %s224, 64
      %s226 = smul.addr %s225, 4
      %s227 = scalar_lea.vmem %s1, %s226
      %p228 = scmp.lt.s32.totalorder %s19, 3
      %s229 = scalar_select %p228, %s19, 3
      %p230 = scmp.lt.s32.totalorder %s20, 0
      %s231 = scalar_select %p230, %s20, 0
      %s232 = sadd.s32 %s231, %s229
      %s233 = smul.addr %s232, 8
      %s234 = scalar_lea.vmem %s2, %s233
      %p235 = scmp.lt.s32.totalorder %s19, 3
      %s236 = scalar_select %p235, %s19, 3
      %p237 = scmp.lt.s32.totalorder %s20, 0
      %s238 = scalar_select %p237, %s20, 0
      %s239 = sadd.s32 %s238, %s236
      %s240 = smul.addr %s239, 2
      %s241 = scalar_lea.vmem %s3, %s240
      %v243 = vld [vmem:[%s222] sm:$0xff]
      %v244 = vld [vmem:[%s222 + $0x8] sm:$0xff]
      %v245 = vld [vmem:[%s227] sm:$0xf]
      %v246 = vld [vmem:[%s227 + $0x4] sm:$0xf]
      %v247 = vld [vmem:[%s227 + $0x8] sm:$0xf]
      %v248 = vld [vmem:[%s227 + $0xc] sm:$0xf]
      %v249 = vld [vmem:[%s227 + $0x10] sm:$0xf]
      %v250 = vld [vmem:[%s227 + $0x14] sm:$0xf]
      %v251 = vld [vmem:[%s227 + $0x18] sm:$0xf]
      %v252 = vld [vmem:[%s227 + $0x1c] sm:$0xf]
      %v253 = vld [vmem:[%s227 + $0x20] sm:$0xf]
      %v254 = vld [vmem:[%s227 + $0x24] sm:$0xf]
      %v255 = vld [vmem:[%s227 + $0x28] sm:$0xf]
      %v256 = vld [vmem:[%s227 + $0x2c] sm:$0xf]
      %v257 = vld [vmem:[%s227 + $0x30] sm:$0xf]
      %v258 = vld [vmem:[%s227 + $0x34] sm:$0xf]
      %v259 = vld [vmem:[%s227 + $0x38] sm:$0xf]
      %v260 = vld [vmem:[%s227 + $0x3c] sm:$0xf]
      %v261 = vld [vmem:[%s227 + $0x40] sm:$0xf]
      %v262 = vld [vmem:[%s227 + $0x44] sm:$0xf]
      %v263 = vld [vmem:[%s227 + $0x48] sm:$0xf]
      %v264 = vld [vmem:[%s227 + $0x4c] sm:$0xf]
      %v265 = vld [vmem:[%s227 + $0x50] sm:$0xf]
      %v266 = vld [vmem:[%s227 + $0x54] sm:$0xf]
      %v267 = vld [vmem:[%s227 + $0x58] sm:$0xf]
      %v268 = vld [vmem:[%s227 + $0x5c] sm:$0xf]
      %v269 = vld [vmem:[%s227 + $0x60] sm:$0xf]
      %v270 = vld [vmem:[%s227 + $0x64] sm:$0xf]
      %v271 = vld [vmem:[%s227 + $0x68] sm:$0xf]
      %v272 = vld [vmem:[%s227 + $0x6c] sm:$0xf]
      %v273 = vld [vmem:[%s227 + $0x70] sm:$0xf]
      %v274 = vld [vmem:[%s227 + $0x74] sm:$0xf]
      %v275 = vld [vmem:[%s227 + $0x78] sm:$0xf]
      %v276 = vld [vmem:[%s227 + $0x7c] sm:$0xf]
      %v277 = vld [vmem:[%s227 + $0x80] sm:$0xf]
      %v278 = vld [vmem:[%s227 + $0x84] sm:$0xf]
      %v279 = vld [vmem:[%s227 + $0x88] sm:$0xf]
      %v280 = vld [vmem:[%s227 + $0x8c] sm:$0xf]
      %v281 = vld [vmem:[%s227 + $0x90] sm:$0xf]
      %v282 = vld [vmem:[%s227 + $0x94] sm:$0xf]
      %v283 = vld [vmem:[%s227 + $0x98] sm:$0xf]
      %v284 = vld [vmem:[%s227 + $0x9c] sm:$0xf]
      %v285 = vld [vmem:[%s227 + $0xa0] sm:$0xf]
      %v286 = vld [vmem:[%s227 + $0xa4] sm:$0xf]
      %v287 = vld [vmem:[%s227 + $0xa8] sm:$0xf]
      %v288 = vld [vmem:[%s227 + $0xac] sm:$0xf]
      %v289 = vld [vmem:[%s227 + $0xb0] sm:$0xf]
      %v290 = vld [vmem:[%s227 + $0xb4] sm:$0xf]
      %v291 = vld [vmem:[%s227 + $0xb8] sm:$0xf]
      %v292 = vld [vmem:[%s227 + $0xbc] sm:$0xf]
      %v293 = vld [vmem:[%s227 + $0xc0] sm:$0xf]
      %v294 = vld [vmem:[%s227 + $0xc4] sm:$0xf]
      %v295 = vld [vmem:[%s227 + $0xc8] sm:$0xf]
      %v296 = vld [vmem:[%s227 + $0xcc] sm:$0xf]
      %v297 = vld [vmem:[%s227 + $0xd0] sm:$0xf]
      %v298 = vld [vmem:[%s227 + $0xd4] sm:$0xf]
      %v299 = vld [vmem:[%s227 + $0xd8] sm:$0xf]
      %v300 = vld [vmem:[%s227 + $0xdc] sm:$0xf]
      %v301 = vld [vmem:[%s227 + $0xe0] sm:$0xf]
      %v302 = vld [vmem:[%s227 + $0xe4] sm:$0xf]
      %v303 = vld [vmem:[%s227 + $0xe8] sm:$0xf]
      %v304 = vld [vmem:[%s227 + $0xec] sm:$0xf]
      %v305 = vld [vmem:[%s227 + $0xf0] sm:$0xf]
      %v306 = vld [vmem:[%s227 + $0xf4] sm:$0xf]
      %v307 = vld [vmem:[%s227 + $0xf8] sm:$0xf]
      %v308 = vld [vmem:[%s227 + $0xfc] sm:$0xf]
      %v311 = vunpack.c.l.b16 %v243
      %v312 = vunpack.c.h.b16 %v243
      %v313 = vunpack.c.l.b16 %v244
      %v314 = vunpack.c.h.b16 %v244
      %v315 = vpack.c.b16 %v311, %v311
      %v316 = vpack.c.b16 %v312, %v312
      %v317 = vpack.c.b16 %v313, %v313
      %v318 = vpack.c.b16 %v314, %v314
      %v387 = vunpack.c.l.b16 %v245
      %v388 = vunpack.c.l.b16 %v246
      %v389 = vunpack.c.l.b16 %v247
      %v390 = vunpack.c.l.b16 %v248
      %v391 = vunpack.c.l.b16 %v249
      %v392 = vunpack.c.l.b16 %v250
      %v393 = vunpack.c.l.b16 %v251
      %v394 = vunpack.c.l.b16 %v252
      %v395 = vunpack.c.l.b16 %v253
      %v396 = vunpack.c.l.b16 %v254
      %v397 = vunpack.c.l.b16 %v255
      %v398 = vunpack.c.l.b16 %v256
      %v399 = vunpack.c.l.b16 %v257
      %v400 = vunpack.c.l.b16 %v258
      %v401 = vunpack.c.l.b16 %v259
      %v402 = vunpack.c.l.b16 %v260
      %v403 = vunpack.c.l.b16 %v261
      %v404 = vunpack.c.l.b16 %v262
      %v405 = vunpack.c.l.b16 %v263
      %v406 = vunpack.c.l.b16 %v264
      %v407 = vunpack.c.l.b16 %v265
      %v408 = vunpack.c.l.b16 %v266
      %v409 = vunpack.c.l.b16 %v267
      %v410 = vunpack.c.l.b16 %v268
      %v411 = vunpack.c.l.b16 %v269
      %v412 = vunpack.c.l.b16 %v270
      %v413 = vunpack.c.l.b16 %v271
      %v414 = vunpack.c.l.b16 %v272
      %v415 = vunpack.c.l.b16 %v273
      %v416 = vunpack.c.l.b16 %v274
      %v417 = vunpack.c.l.b16 %v275
      %v418 = vunpack.c.l.b16 %v276
      %v419 = vunpack.c.l.b16 %v277
      %v420 = vunpack.c.l.b16 %v278
      %v421 = vunpack.c.l.b16 %v279
      %v422 = vunpack.c.l.b16 %v280
      %v423 = vunpack.c.l.b16 %v281
      %v424 = vunpack.c.l.b16 %v282
      %v425 = vunpack.c.l.b16 %v283
      %v426 = vunpack.c.l.b16 %v284
      %v427 = vunpack.c.l.b16 %v285
      %v428 = vunpack.c.l.b16 %v286
      %v429 = vunpack.c.l.b16 %v287
      %v430 = vunpack.c.l.b16 %v288
      %v431 = vunpack.c.l.b16 %v289
      %v432 = vunpack.c.l.b16 %v290
      %v433 = vunpack.c.l.b16 %v291
      %v434 = vunpack.c.l.b16 %v292
      %v435 = vunpack.c.l.b16 %v293
      %v436 = vunpack.c.l.b16 %v294
      %v437 = vunpack.c.l.b16 %v295
      %v438 = vunpack.c.l.b16 %v296
      %v439 = vunpack.c.l.b16 %v297
      %v440 = vunpack.c.l.b16 %v298
      %v441 = vunpack.c.l.b16 %v299
      %v442 = vunpack.c.l.b16 %v300
      %v443 = vunpack.c.l.b16 %v301
      %v444 = vunpack.c.l.b16 %v302
      %v445 = vunpack.c.l.b16 %v303
      %v446 = vunpack.c.l.b16 %v304
      %v447 = vunpack.c.l.b16 %v305
      %v448 = vunpack.c.l.b16 %v306
      %v449 = vunpack.c.l.b16 %v307
      %v450 = vunpack.c.l.b16 %v308
      %v451 = vpack.c.b16 %v388, %v387
      %v452 = vpack.c.b16 %v390, %v389
      %v453 = vpack.c.b16 %v392, %v391
      %v454 = vpack.c.b16 %v394, %v393
      %v455 = vpack.c.b16 %v396, %v395
      %v456 = vpack.c.b16 %v398, %v397
      %v457 = vpack.c.b16 %v400, %v399
      %v458 = vpack.c.b16 %v402, %v401
      %v459 = vpack.c.b16 %v404, %v403
      %v460 = vpack.c.b16 %v406, %v405
      %v461 = vpack.c.b16 %v408, %v407
      %v462 = vpack.c.b16 %v410, %v409
      %v463 = vpack.c.b16 %v412, %v411
      %v464 = vpack.c.b16 %v414, %v413
      %v465 = vpack.c.b16 %v416, %v415
      %v466 = vpack.c.b16 %v418, %v417
      %v467 = vpack.c.b16 %v420, %v419
      %v468 = vpack.c.b16 %v422, %v421
      %v469 = vpack.c.b16 %v424, %v423
      %v470 = vpack.c.b16 %v426, %v425
      %v471 = vpack.c.b16 %v428, %v427
      %v472 = vpack.c.b16 %v430, %v429
      %v473 = vpack.c.b16 %v432, %v431
      %v474 = vpack.c.b16 %v434, %v433
      %v475 = vpack.c.b16 %v436, %v435
      %v476 = vpack.c.b16 %v438, %v437
      %v477 = vpack.c.b16 %v440, %v439
      %v478 = vpack.c.b16 %v442, %v441
      %v479 = vpack.c.b16 %v444, %v443
      %v480 = vpack.c.b16 %v446, %v445
      %v481 = vpack.c.b16 %v448, %v447
      %v482 = vpack.c.b16 %v450, %v449
      %515 = vmatprep.subr.bf16.mxu0 0
      %516 = vmatpush1.bf16.msra.mxu0 %v458
      %517 = vmatprep.subr.bf16.mxu0 0
      %518 = vmatpush1.bf16.msra.mxu0 %v457
      %519 = vmatprep.subr.bf16.mxu0 0
      %520 = vmatpush1.bf16.msra.mxu0 %v456
      %521 = vmatprep.subr.bf16.mxu0 0
      %522 = vmatpush1.bf16.msra.mxu0 %v455
      %523 = vmatprep.subr.bf16.mxu0 0
      %524 = vmatpush1.bf16.msra.mxu0 %v454
      %525 = vmatprep.subr.bf16.mxu0 0
      %526 = vmatpush1.bf16.msra.mxu0 %v453
      %527 = vmatprep.subr.bf16.mxu0 0
      %528 = vmatpush1.bf16.msra.mxu0 %v452
      %529 = vmatprep.subr.bf16.mxu0 0
      %530 = vmatpush1.bf16.msra.mxu0 %v451
      %531 = vmatprep.subr.bf16.mxu0 0
      %532 = vmatpush2.bf16.msra.mxu0 %v466
      %533 = vmatprep.subr.bf16.mxu0 0
      %534 = vmatpush2.bf16.msra.mxu0 %v465
      %535 = vmatprep.subr.bf16.mxu0 0
      %536 = vmatpush2.bf16.msra.mxu0 %v464
      %537 = vmatprep.subr.bf16.mxu0 0
      %538 = vmatpush2.bf16.msra.mxu0 %v463
      %539 = vmatprep.subr.bf16.mxu0 0
      %540 = vmatpush2.bf16.msra.mxu0 %v462
      %541 = vmatprep.subr.bf16.mxu0 0
      %542 = vmatpush2.bf16.msra.mxu0 %v461
      %543 = vmatprep.subr.bf16.mxu0 0
      %544 = vmatpush2.bf16.msra.mxu0 %v460
      %545 = vmatprep.subr.bf16.mxu0 0
      %546 = vmatpush2.bf16.msra.mxu0 %v459
      %547 = vmatprep.mubr.bf16.mxu0 %v316
      %548 = vmatmul.mubr.bf16.gmra.mxu0 %v315
      %v549 = vpop.f32.mrf.mxu0
      %v550 = vadd.f32 0.0, %v549
      %v551 = vpop.f32.mrf.mxu0
      %v552 = vpop.f32.mrf.mxu0
      %v553 = vpop.f32.mrf.mxu0
      %554 = vdwg.mxu0
      %555 = vmatprep.subr.bf16.mxu0 0
      %556 = vmatpush1.bf16.msra.mxu0 %v474
      %557 = vmatprep.subr.bf16.mxu0 0
      %558 = vmatpush1.bf16.msra.mxu0 %v473
      %559 = vmatprep.subr.bf16.mxu0 0
      %560 = vmatpush1.bf16.msra.mxu0 %v472
      %561 = vmatprep.subr.bf16.mxu0 0
      %562 = vmatpush1.bf16.msra.mxu0 %v471
      %563 = vmatprep.subr.bf16.mxu0 0
      %564 = vmatpush1.bf16.msra.mxu0 %v470
      %565 = vmatprep.subr.bf16.mxu0 0
      %566 = vmatpush1.bf16.msra.mxu0 %v469
      %567 = vmatprep.subr.bf16.mxu0 0
      %568 = vmatpush1.bf16.msra.mxu0 %v468
      %569 = vmatprep.subr.bf16.mxu0 0
      %570 = vmatpush1.bf16.msra.mxu0 %v467
      %571 = vmatprep.subr.bf16.mxu0 0
      %572 = vmatpush2.bf16.msra.mxu0 %v482
      %573 = vmatprep.subr.bf16.mxu0 0
      %574 = vmatpush2.bf16.msra.mxu0 %v481
      %575 = vmatprep.subr.bf16.mxu0 0
      %576 = vmatpush2.bf16.msra.mxu0 %v480
      %577 = vmatprep.subr.bf16.mxu0 0
      %578 = vmatpush2.bf16.msra.mxu0 %v479
      %579 = vmatprep.subr.bf16.mxu0 0
      %580 = vmatpush2.bf16.msra.mxu0 %v478
      %581 = vmatprep.subr.bf16.mxu0 0
      %582 = vmatpush2.bf16.msra.mxu0 %v477
      %583 = vmatprep.subr.bf16.mxu0 0
      %584 = vmatpush2.bf16.msra.mxu0 %v476
      %585 = vmatprep.subr.bf16.mxu0 0
      %586 = vmatpush2.bf16.msra.mxu0 %v475
      %587 = vmatprep.mubr.bf16.mxu0 %v318
      %588 = vmatmul.mubr.bf16.gmra.mxu0 %v317
      %v589 = vpop.f32.mrf.mxu0
      %v590 = vadd.f32 %v550, %v589
      %v591 = vpop.f32.mrf.mxu0
      %v592 = vpop.f32.mrf.mxu0
      %v593 = vpop.f32.mrf.mxu0
      %594 = vdwg.mxu0
      %595 = vst [vmem:[%s234] sm:$0xff] %v590
      %v596 = vrot.slane %v590, 4
      %v597 = vadd.f32 %v590, %v596
      %v598 = vrot.slane %v597, 2
      %v599 = vadd.f32 %v597, %v598
      %v600 = vrot.slane %v599, 1
      %v601 = vadd.f32 %v599, %v600
      %v602 = vmul.f32 %v590, %v590
      %v603 = vrot.slane %v602, 4
      %v604 = vadd.f32 %v602, %v603
      %v605 = vrot.slane %v604, 2
      %v606 = vadd.f32 %v604, %v605
      %v607 = vrot.slane %v606, 1
      %v608 = vadd.f32 %v606, %v607
      %vm609 = vcmask 1040384
      %v610 = vsel %vm609, %v601, %v608
      %611 = vst [vmem:[%s241] sm:$0x3] %v610
      %p612 = scmp.lt.s32.totalorder %s19, 3
      %s613 = scalar_select %p612, %s19, 3
      %p614 = scmp.lt.s32.totalorder %s20, 0
      %s615 = scalar_select %p614, %s20, 0
      %s616 = sadd.s32 %s615, %s613
      %s617 = smul.addr %s616, 8
      %s618 = scalar_lea.vmem %s2, %s617
      %p619 = scmp.lt.s32.totalorder %s19, 3
      %s620 = scalar_select %p619, %s19, 3
      %p621 = scmp.lt.s32.totalorder %s20, 0
      %s622 = scalar_select %p621, %s20, 0
      %s623 = sadd.s32 %s622, %s620
      %s624 = smul.addr %s623, 2
      %s625 = scalar_lea.vmem %s3, %s624
      // Predicated region
      $region29: #{_lambda_.11} parent=27 // pred_check
        %p626 = pneg %p101
      $region30: #{_lambda_.11} parent=27 // pred_check_branch
        %628 = sbr.rel (%p626) target = $region32
      $region31: #{_lambda_.11} parent=27 // pred_region
        _
      $region32: #{_lambda_.11} parent=27 // pred_fallthru
        _
      // Predicated region
      $region33: #{_lambda_.11} parent=27 // pred_check
        %p629 = pneg %p129
      $region34: #{_lambda_.11} parent=27 // pred_check_branch
        %631 = sbr.rel (%p629) target = $region36
      $region35: #{_lambda_.11} parent=27 // pred_region
        _
      $region36: #{_lambda_.11} parent=27 // pred_fallthru
        _
    $region28: #{_lambda_.11} parent=5 // pred_fallthru
      _
    %p632 = scmp.le.s32.totalorder 2, %s10
    // Predicated region
    $region37: #{_lambda_.11} parent=5 // pred_check
      %p633 = pneg %p632
    $region38: #{_lambda_.11} parent=5 // pred_check_branch
      %635 = sbr.rel (%p633) target = $region40
    $region39: #{_lambda_.11} parent=5 // pred_region
      %s636 = ssub.s32 %s10, 2
      // Predicated region
      $region41: #{_lambda_.11} parent=39 // pred_check
        %p637 = pneg %p107
      $region42: #{_lambda_.11} parent=39 // pred_check_branch
        %639 = sbr.rel (%p637) target = $region44
      $region43: #{_lambda_.11} parent=39 // pred_region
        %p640 = scmp.lt.s32.totalorder %s21, 3
        %s641 = scalar_select %p640, %s21, 3
        %p642 = scmp.lt.s32.totalorder %s22, 0
        %s643 = scalar_select %p642, %s22, 0
        %s644 = sadd.s32 %s643, %s641
        %s645 = smul.addr %s644, 8
        %s646 = scalar_lea.vmem %s2, %s645
      $region44: #{_lambda_.11} parent=39 // pred_fallthru
        _
      // Predicated region
      $region45: #{_lambda_.11} parent=39 // pred_check
        %p647 = pneg %p135
      $region46: #{_lambda_.11} parent=39 // pred_check_branch
        %649 = sbr.rel (%p647) target = $region48
      $region47: #{_lambda_.11} parent=39 // pred_region
        %p650 = scmp.lt.s32.totalorder %s21, 3
        %s651 = scalar_select %p650, %s21, 3
        %p652 = scmp.lt.s32.totalorder %s22, 0
        %s653 = scalar_select %p652, %s22, 0
        %s654 = sadd.s32 %s653, %s651
        %s655 = smul.addr %s654, 2
        %s656 = scalar_lea.vmem %s3, %s655
      $region48: #{_lambda_.11} parent=39 // pred_fallthru
        _
    $region40: #{_lambda_.11} parent=5 // pred_fallthru
      _
  $region6: #{_lambda_.11} parent=0 // loop_footer
    %s14 = sadd.s32 1, %s10
  $region7: #{_lambda_.11} parent=0 // loop_footer_branch
    %9 = sbr.rel target = $region3
  $region8: #{_lambda_.11} parent=0 // loop_exit
    _

// kernel: _lambda_.14
$region0: #{_lambda_.14}
  #allocation0 [shape = 'u32[]', space=smem, size = 0x4, offset = 0x4, fixed_abs, tag = 'smem constant byte address 0x4 - core index']
  #allocation1 [shape = 'u32[144,128]{1,0:T(1,128)}', space=vmem, size = 0x12000, scoped, tag = 'internal scratch']
  %s0 = inlined_call_operand.vmem [shape: f32[4,32,128], index: 0, kind: input, shape index: {}]
  %s1 = inlined_call_operand.vmem [shape: f32[1,128], index: 1, kind: input, shape index: {}]
  %s2 = inlined_call_operand.vmem [shape: f32[1,128], index: 2, kind: input, shape index: {}]
  %s3 = inlined_call_operand.vmem [shape: bf16[4,32,128], index: 3, kind: output, shape index: {}]
  %s4 = sld [smem:[#allocation0]]
  $region45: #{_lambda_.14} parent=0
    _
  %s6 = ssub.s32 1, %s4
  %s7 = scalar_select 0, %s6, %s4
  loop: start=0, step=1, limit=6
  $region2: #{_lambda_.14} parent=0 // loop_pre_header
    _
  $region3: #{_lambda_.14} parent=0 // loop_header
    %s9 = sphi 0, %s13
    %p10 = scmp.ge.s32.totalorder %s9, 6
    %s16 = sphi 0, %s28
    %s17 = sphi 0, %s24
    %s18 = sphi 0, %s16
    %s19 = sphi 0, %s17
    %s20 = sphi 0, %s18
    %s21 = sphi 0, %s19
    %s33 = sphi 0, %s35
    %s36 = sphi 0, %s33
    %s37 = sphi 0, %s36
    %s53 = sphi 0, %s37
    %s57 = sphi 0, %s57
    %s59 = sphi 0, %s57
    %s60 = sphi 0, %s59
    %s74 = sphi 0, %s60
    %s78 = sphi 0, %s78
    %s80 = sphi 0, %s78
    %s81 = sphi 0, %s80
    %s95 = sphi 0, %s81
    %s103 = sphi 0, %s105
    %s106 = sphi 0, %s103
    %s107 = sphi 0, %s106
    %s123 = sphi 0, %s107
  $region4: #{_lambda_.14} parent=0 // loop_header_branch
    %12 = sbr.rel (%p10) target = $region8
  $region5: #{_lambda_.14} parent=0 // loop_body
    %s14 = ssub.s32 %s9, 1
    %s15 = ssub.s32 %s9, 2
    %s22 = sadd.s32 1, %s17
    %p23 = scmp.ge.s32.totalorder %s22, 1
    %s24 = scalar_select %p23, 0, %s22
    %s25 = sadd.s32 1, %s16
    %s26 = scalar_select %p23, %s25, %s16
    %p27 = scmp.ge.s32.totalorder %s26, 4
    %s28 = scalar_select %p27, 0, %s26
    %s29 = ssub.s32 %s16, %s28
    %s30 = ssub.s32 %s17, %s24
    %s31 = sor.u32 %s29, %s30
    %p32 = scmp.eq.s32.totalorder %s31, 0
    %s34 = sadd.s32 %s33, 1
    %s35 = scalar_select %p32, %s33, %s34
    %p38 = pneg %p32
    %p39 = scmp.eq.s32.totalorder %s9, 3
    %p40 = por %p38, %p39
    %p41 = scmp.ne.s32.totalorder %s33, %s36
    %p42 = scmp.eq.s32.totalorder %s9, 0
    %p43 = por %p41, %p42
    %p44 = scmp.ne.s32.totalorder %s33, %s36
    %p45 = scmp.eq.s32.totalorder %s14, 3
    %p46 = por %p44, %p45
    %p47 = scmp.ne.s32.totalorder %s36, %s37
    %p48 = scmp.eq.s32.totalorder %s14, 0
    %p49 = por %p47, %p48
    %p50 = scmp.ne.s32.totalorder %s36, %s37
    %p51 = scmp.eq.s32.totalorder %s15, 3
    %p52 = por %p50, %p51
    %p54 = scmp.ne.s32.totalorder %s37, %s53
    %p55 = scmp.eq.s32.totalorder %s15, 0
    %p56 = por %p54, %p55
    %s58 = sadd.s32 %s57, 1
    %p61 = scmp.eq.s32.totalorder %s9, 3
    %p62 = scmp.ne.s32.totalorder %s57, %s59
    %p63 = scmp.eq.s32.totalorder %s9, 0
    %p64 = por %p62, %p63
    %p65 = scmp.ne.s32.totalorder %s57, %s59
    %p66 = scmp.eq.s32.totalorder %s14, 3
    %p67 = por %p65, %p66
    %p68 = scmp.ne.s32.totalorder %s59, %s60
    %p69 = scmp.eq.s32.totalorder %s14, 0
    %p70 = por %p68, %p69
    %p71 = scmp.ne.s32.totalorder %s59, %s60
    %p72 = scmp.eq.s32.totalorder %s15, 3
    %p73 = por %p71, %p72
    %p75 = scmp.ne.s32.totalorder %s60, %s74
    %p76 = scmp.eq.s32.totalorder %s15, 0
    %p77 = por %p75, %p76
    %s79 = sadd.s32 %s78, 1
    %p82 = scmp.eq.s32.totalorder %s9, 3
    %p83 = scmp.ne.s32.totalorder %s78, %s80
    %p84 = scmp.eq.s32.totalorder %s9, 0
    %p85 = por %p83, %p84
    %p86 = scmp.ne.s32.totalorder %s78, %s80
    %p87 = scmp.eq.s32.totalorder %s14, 3
    %p88 = por %p86, %p87
    %p89 = scmp.ne.s32.totalorder %s80, %s81
    %p90 = scmp.eq.s32.totalorder %s14, 0
    %p91 = por %p89, %p90
    %p92 = scmp.ne.s32.totalorder %s80, %s81
    %p93 = scmp.eq.s32.totalorder %s15, 3
    %p94 = por %p92, %p93
    %p96 = scmp.ne.s32.totalorder %s81, %s95
    %p97 = scmp.eq.s32.totalorder %s15, 0
    %p98 = por %p96, %p97
    %s99 = ssub.s32 %s16, %s28
    %s100 = ssub.s32 %s17, %s24
    %s101 = sor.u32 %s99, %s100
    %p102 = scmp.eq.s32.totalorder %s101, 0
    %s104 = sadd.s32 %s103, 1
    %s105 = scalar_select %p102, %s103, %s104
    %p108 = pneg %p102
    %p109 = scmp.eq.s32.totalorder %s9, 3
    %p110 = por %p108, %p109
    %p111 = scmp.ne.s32.totalorder %s103, %s106
    %p112 = scmp.eq.s32.totalorder %s9, 0
    %p113 = por %p111, %p112
    %p114 = scmp.ne.s32.totalorder %s103, %s106
    %p115 = scmp.eq.s32.totalorder %s14, 3
    %p116 = por %p114, %p115
    %p117 = scmp.ne.s32.totalorder %s106, %s107
    %p118 = scmp.eq.s32.totalorder %s14, 0
    %p119 = por %p117, %p118
    %p120 = scmp.ne.s32.totalorder %s106, %s107
    %p121 = scmp.eq.s32.totalorder %s15, 3
    %p122 = por %p120, %p121
    %p124 = scmp.ne.s32.totalorder %s107, %s123
    %p125 = scmp.eq.s32.totalorder %s15, 0
    %p126 = por %p124, %p125
    %p127 = scmp.le.s32.totalorder 1, %s9
    %p128 = scmp.lt.s32.totalorder %s9, 5
    %p129 = pnand %p127, %p128
    %p130 = pneg %p129
    // Predicated region
    $region9: #{_lambda_.14} parent=5 // pred_check
      _
    $region10: #{_lambda_.14} parent=5 // pred_check_branch
      %132 = sbr.rel (%p129) target = $region12
    $region11: #{_lambda_.14} parent=5 // pred_region
      %s133 = ssub.s32 %s9, 1
      // Predicated region
      $region13: #{_lambda_.14} parent=11 // pred_check
        %p134 = pneg %p70
      $region14: #{_lambda_.14} parent=11 // pred_check_branch
        %136 = sbr.rel (%p134) target = $region16
      $region15: #{_lambda_.14} parent=11 // pred_region
        _
      $region16: #{_lambda_.14} parent=11 // pred_fallthru
        _
      // Predicated region
      $region17: #{_lambda_.14} parent=11 // pred_check
        %p137 = pneg %p91
      $region18: #{_lambda_.14} parent=11 // pred_check_branch
        %139 = sbr.rel (%p137) target = $region20
      $region19: #{_lambda_.14} parent=11 // pred_region
        _
      $region20: #{_lambda_.14} parent=11 // pred_fallthru
        _
    $region12: #{_lambda_.14} parent=5 // pred_fallthru
      _
    %p140 = scmp.lt.s32.totalorder %s9, 4
    // Predicated region
    $region21: #{_lambda_.14} parent=5 // pred_check
      %p141 = pneg %p140
    $region22: #{_lambda_.14} parent=5 // pred_check_branch
      %143 = sbr.rel (%p141) target = $region24
    $region23: #{_lambda_.14} parent=5 // pred_region
      // Predicated region
      $region25: #{_lambda_.14} parent=23 // pred_check
        %p144 = pneg %p43
      $region26: #{_lambda_.14} parent=23 // pred_check_branch
        %146 = sbr.rel (%p144) target = $region28
      $region27: #{_lambda_.14} parent=23 // pred_region
        %s147 = smul.u32 4, %s17
        %p148 = scmp.lt.s32.totalorder %s16, 3
        %s149 = scalar_select %p148, %s16, 3
        %p150 = scmp.lt.s32.totalorder %s147, 3
        %s151 = scalar_select %p150, %s147, 3
        %s152 = smul.addr %s149, 4
        %s153 = sadd.s32 %s151, %s152
        %s154 = smul.addr %s153, 8
        %s155 = scalar_lea.vmem %s0, %s154
        %s156 = smul.u32 4, %s17
      $region28: #{_lambda_.14} parent=23 // pred_fallthru
        _
    $region24: #{_lambda_.14} parent=5 // pred_fallthru
      _
    %p157 = scmp.le.s32.totalorder 1, %s9
    %p158 = scmp.lt.s32.totalorder %s9, 5
    %p159 = pnand %p157, %p158
    %p160 = pneg %p159
    // Predicated region
    $region29: #{_lambda_.14} parent=5 // pred_check
      _
    $region30: #{_lambda_.14} parent=5 // pred_check_branch
      %162 = sbr.rel (%p159) target = $region32
    $region31: #{_lambda_.14} parent=5 // pred_region
      %s163 = ssub.s32 %s9, 1
      %s164 = smul.u32 4, %s19
      %p165 = scmp.lt.s32.totalorder %s18, 3
      %s166 = scalar_select %p165, %s18, 3
      %p167 = scmp.lt.s32.totalorder %s164, 3
      %s168 = scalar_select %p167, %s164, 3
      %s169 = smul.addr %s166, 4
      %s170 = sadd.s32 %s168, %s169
      %s171 = smul.addr %s170, 8
      %s172 = scalar_lea.vmem %s0, %s171
      %p173 = pneg %p49
      %p174 = pneg %p46
      %p175 = pneg %p70
      %p176 = pneg %p67
      %p177 = pneg %p91
      %p178 = pneg %p88
      %p179 = pneg %p119
      %p180 = pneg %p116
      %s181 = smul.u32 4, %s19
      %p182 = scmp.lt.s32.totalorder %s18, 3
      %s183 = scalar_select %p182, %s18, 3
      %p184 = scmp.lt.s32.totalorder %s181, 3
      %s185 = scalar_select %p184, %s181, 3
      %s186 = smul.addr %s183, 4
      %s187 = sadd.s32 %s185, %s186
      %s188 = smul.addr %s187, 4
      %s189 = scalar_lea.vmem %s3, %s188
      %s190 = smul.u32 4, %s19
      %p191 = scmp.lt.s32.totalorder %s18, 3
      %s192 = scalar_select %p191, %s18, 3
      %p193 = scmp.lt.s32.totalorder %s190, 3
      %s194 = scalar_select %p193, %s190, 3
      %s195 = smul.addr %s192, 4
      %s196 = sadd.s32 %s194, %s195
      %s197 = smul.addr %s196, 8
      %s198 = scalar_lea.vmem %s0, %s197
      %s199 = smul.u32 4, %s19
      %s200 = smul.u32 4, %s19
      %p201 = scmp.lt.s32.totalorder %s18, 3
      %s202 = scalar_select %p201, %s18, 3
      %p203 = scmp.lt.s32.totalorder %s200, 3
      %s204 = scalar_select %p203, %s200, 3
      %s205 = smul.addr %s202, 4
      %s206 = sadd.s32 %s204, %s205
      %s207 = smul.addr %s206, 4
      %s208 = scalar_lea.vmem %s3, %s207
      %s209 = smul.u32 4, %s19
      %v210 = vld [vmem:[%s198] sm:$0xff]
      %v211 = vld [vmem:[%s198 + $0x8] sm:$0xff]
      %v212 = vld [vmem:[%s198 + $0x10] sm:$0xff]
      %v213 = vld [vmem:[%s198 + $0x18] sm:$0xff]
      %v214 = vld [vmem:[%s1] sm:$0x1]
      %v216 = vlaneseq
      %v217 = vshrl.u32 %v216, 7
      %v218 = vsub.s32 0, %v217
      %v219 = vrot.slane %v214, %v218
      %v221 = vmul.f32 %v210, %v219
      %v222 = vmul.f32 %v211, %v219
      %v223 = vmul.f32 %v212, %v219
      %v224 = vmul.f32 %v213, %v219
      %v225 = vld [vmem:[%s2] sm:$0x1]
      %v227 = vlaneseq
      %v228 = vshrl.u32 %v227, 7
      %v229 = vsub.s32 0, %v228
      %v230 = vrot.slane %v225, %v229
      %v232 = vadd.f32 %v221, %v230
      %v233 = vadd.f32 %v222, %v230
      %v234 = vadd.f32 %v223, %v230
      %v235 = vadd.f32 %v224, %v230
      %v236 = vmax.f32 %v232, 0.0
      %v237 = vmax.f32 %v233, 0.0
      %v238 = vmax.f32 %v234, 0.0
      %v239 = vmax.f32 %v235, 0.0
      %v240 = vpack.c.bf16 %v237, %v236
      %v241 = vpack.c.bf16 %v239, %v238
      %v244 = vunpack.c.l.b16 %v240
      %v245 = vunpack.c.h.b16 %v240
      %v246 = vunpack.c.l.b16 %v241
      %v247 = vunpack.c.h.b16 %v241
      %v248 = vpack.c.b16 %v244, %v244
      %v249 = vpack.c.b16 %v245, %v245
      %v250 = vpack.c.b16 %v246, %v246
      %v251 = vpack.c.b16 %v247, %v247
      %256 = vst [vmem:[%s208] sm:$0xf] %v248
      %257 = vst [vmem:[%s208 + $0x4] sm:$0xf] %v249
      %258 = vst [vmem:[%s208 + $0x8] sm:$0xf] %v250
      %259 = vst [vmem:[%s208 + $0xc] sm:$0xf] %v251
      %s260 = smul.u32 4, %s19
      %p261 = scmp.lt.s32.totalorder %s18, 3
      %s262 = scalar_select %p261, %s18, 3
      %p263 = scmp.lt.s32.totalorder %s260, 3
      %s264 = scalar_select %p263, %s260, 3
      %s265 = smul.addr %s262, 4
      %s266 = sadd.s32 %s264, %s265
      %s267 = smul.addr %s266, 4
      %s268 = scalar_lea.vmem %s3, %s267
      // Predicated region
      $region33: #{_lambda_.14} parent=31 // pred_check
        %p269 = pneg %p116
      $region34: #{_lambda_.14} parent=31 // pred_check_branch
        %271 = sbr.rel (%p269) target = $region36
      $region35: #{_lambda_.14} parent=31 // pred_region
        %s272 = smul.u32 4, %s19
      $region36: #{_lambda_.14} parent=31 // pred_fallthru
        _
    $region32: #{_lambda_.14} parent=5 // pred_fallthru
      _
    %p273 = scmp.le.s32.totalorder 2, %s9
    // Predicated region
    $region37: #{_lambda_.14} parent=5 // pred_check
      %p274 = pneg %p273
    $region38: #{_lambda_.14} parent=5 // pred_check_branch
      %276 = sbr.rel (%p274) target = $region40
    $region39: #{_lambda_.14} parent=5 // pred_region
      %s277 = ssub.s32 %s9, 2
      // Predicated region
      $region41: #{_lambda_.14} parent=39 // pred_check
        %p278 = pneg %p122
      $region42: #{_lambda_.14} parent=39 // pred_check_branch
        %280 = sbr.rel (%p278) target = $region44
      $region43: #{_lambda_.14} parent=39 // pred_region
        %s281 = smul.u32 4, %s21
        %p282 = scmp.lt.s32.totalorder %s20, 3
        %s283 = scalar_select %p282, %s20, 3
        %p284 = scmp.lt.s32.totalorder %s281, 3
        %s285 = scalar_select %p284, %s281, 3
        %s286 = smul.addr %s283, 4
        %s287 = sadd.s32 %s285, %s286
        %s288 = smul.addr %s287, 4
        %s289 = scalar_lea.vmem %s3, %s288
      $region44: #{_lambda_.14} parent=39 // pred_fallthru
        _
    $region40: #{_lambda_.14} parent=5 // pred_fallthru
      _
  $region6: #{_lambda_.14} parent=0 // loop_footer
    %s13 = sadd.s32 1, %s9
  $region7: #{_lambda_.14} parent=0 // loop_footer_branch
    %8 = sbr.rel target = $region3
  $region8: #{_lambda_.14} parent=0 // loop_exit
    _

// kernel: _lambda_.13
$region0: #{_lambda_.13}
  #allocation0 [shape = 'u32[]', space=smem, size = 0x4, offset = 0x4, fixed_abs, tag = 'smem constant byte address 0x4 - core index']
  #allocation1 [shape = 'u32[144,128]{1,0:T(1,128)}', space=vmem, size = 0x12000, scoped, tag = 'internal scratch']
  %s0 = inlined_call_operand.vmem [shape: bf16[4,32,256], index: 0, kind: input, shape index: {}]
  %s1 = inlined_call_operand.vmem [shape: bf16[4,256,128], index: 1, kind: input, shape index: {}]
  %s2 = inlined_call_operand.vmem [shape: f32[4,32,128], index: 2, kind: output, shape index: {0}]
  %s3 = inlined_call_operand.vmem [shape: f32[4,1,2,128], index: 3, kind: output, shape index: {1}]
  %4 = xla_tuple %s2, %s3
  %s5 = sld [smem:[#allocation0]]
  $region49: #{_lambda_.13} parent=0
    _
  %s7 = ssub.s32 1, %s5
  %s8 = scalar_select 0, %s7, %s5
  loop: start=0, step=1, limit=6
  $region2: #{_lambda_.13} parent=0 // loop_pre_header
    _
  $region3: #{_lambda_.13} parent=0 // loop_header
    %s10 = sphi 0, %s14
    %p11 = scmp.ge.s32.totalorder %s10, 6
    %s17 = sphi 0, %s29
    %s18 = sphi 0, %s25
    %s19 = sphi 0, %s17
    %s20 = sphi 0, %s18
    %s21 = sphi 0, %s19
    %s22 = sphi 0, %s20
    %s34 = sphi 0, %s36
    %s37 = sphi 0, %s34
    %s38 = sphi 0, %s37
    %s54 = sphi 0, %s38
    %s60 = sphi 0, %s62
    %s63 = sphi 0, %s60
    %s64 = sphi 0, %s63
    %s80 = sphi 0, %s64
    %s88 = sphi 0, %s90
    %s91 = sphi 0, %s88
    %s92 = sphi 0, %s91
    %s108 = sphi 0, %s92
    %s116 = sphi 0, %s118
    %s119 = sphi 0, %s116
    %s120 = sphi 0, %s119
    %s136 = sphi 0, %s120
  $region4: #{_lambda_.13} parent=0 // loop_header_branch
    %13 = sbr.rel (%p11) target = $region8
  $region5: #{_lambda_.13} parent=0 // loop_body
    %s15 = ssub.s32 %s10, 1
    %s16 = ssub.s32 %s10, 2
    %s23 = sadd.s32 1, %s18
    %p24 = scmp.ge.s32.totalorder %s23, 1
    %s25 = scalar_select %p24, 0, %s23
    %s26 = sadd.s32 1, %s17
    %s27 = scalar_select %p24, %s26, %s17
    %p28 = scmp.ge.s32.totalorder %s27, 4
    %s29 = scalar_select %p28, 0, %s27
    %s30 = ssub.s32 %s17, %s29
    %s31 = ssub.s32 %s18, %s25
    %s32 = sor.u32 %s30, %s31
    %p33 = scmp.eq.s32.totalorder %s32, 0
    %s35 = sadd.s32 %s34, 1
    %s36 = scalar_select %p33, %s34, %s35
    %p39 = pneg %p33
    %p40 = scmp.eq.s32.totalorder %s10, 3
    %p41 = por %p39, %p40
    %p42 = scmp.ne.s32.totalorder %s34, %s37
    %p43 = scmp.eq.s32.totalorder %s10, 0
    %p44 = por %p42, %p43
    %p45 = scmp.ne.s32.totalorder %s34, %s37
    %p46 = scmp.eq.s32.totalorder %s15, 3
    %p47 = por %p45, %p46
    %p48 = scmp.ne.s32.totalorder %s37, %s38
    %p49 = scmp.eq.s32.totalorder %s15, 0
    %p50 = por %p48, %p49
    %p51 = scmp.ne.s32.totalorder %s37, %s38
    %p52 = scmp.eq.s32.totalorder %s16, 3
    %p53 = por %p51, %p52
    %p55 = scmp.ne.s32.totalorder %s38, %s54
    %p56 = scmp.eq.s32.totalorder %s16, 0
    %p57 = por %p55, %p56
    %s58 = ssub.s32 %s17, %s29
    %p59 = scmp.eq.s32.totalorder %s58, 0
    %s61 = sadd.s32 %s60, 1
    %s62 = scalar_select %p59, %s60, %s61
    %p65 = pneg %p59
    %p66 = scmp.eq.s32.totalorder %s10, 3
    %p67 = por %p65, %p66
    %p68 = scmp.ne.s32.totalorder %s60, %s63
    %p69 = scmp.eq.s32.totalorder %s10, 0
    %p70 = por %p68, %p69
    %p71 = scmp.ne.s32.totalorder %s60, %s63
    %p72 = scmp.eq.s32.totalorder %s15, 3
    %p73 = por %p71, %p72
    %p74 = scmp.ne.s32.totalorder %s63, %s64
    %p75 = scmp.eq.s32.totalorder %s15, 0
    %p76 = por %p74, %p75
    %p77 = scmp.ne.s32.totalorder %s63, %s64
    %p78 = scmp.eq.s32.totalorder %s16, 3
    %p79 = por %p77, %p78
    %p81 = scmp.ne.s32.totalorder %s64, %s80
    %p82 = scmp.eq.s32.totalorder %s16, 0
    %p83 = por %p81, %p82
    %s84 = ssub.s32 %s17, %s29
    %s85 = ssub.s32 %s18, %s25
    %s86 = sor.u32 %s84, %s85
    %p87 = scmp.eq.s32.totalorder %s86, 0
    %s89 = sadd.s32 %s88, 1
    %s90 = scalar_select %p87, %s88, %s89
    %p93 = pneg %p87
    %p94 = scmp.eq.s32.totalorder %s10, 3
    %p95 = por %p93, %p94
    %p96 = scmp.ne.s32.totalorder %s88, %s91
    %p97 = scmp.eq.s32.totalorder %s10, 0
    %p98 = por %p96, %p97
    %p99 = scmp.ne.s32.totalorder %s88, %s91
    %p100 = scmp.eq.s32.totalorder %s15, 3
    %p101 = por %p99, %p100
    %p102 = scmp.ne.s32.totalorder %s91, %s92
    %p103 = scmp.eq.s32.totalorder %s15, 0
    %p104 = por %p102, %p103
    %p105 = scmp.ne.s32.totalorder %s91, %s92
    %p106 = scmp.eq.s32.totalorder %s16, 3
    %p107 = por %p105, %p106
    %p109 = scmp.ne.s32.totalorder %s92, %s108
    %p110 = scmp.eq.s32.totalorder %s16, 0
    %p111 = por %p109, %p110
    %s112 = ssub.s32 %s17, %s29
    %s113 = ssub.s32 %s18, %s25
    %s114 = sor.u32 %s112, %s113
    %p115 = scmp.eq.s32.totalorder %s114, 0
    %s117 = sadd.s32 %s116, 1
    %s118 = scalar_select %p115, %s116, %s117
    %p121 = pneg %p115
    %p122 = scmp.eq.s32.totalorder %s10, 3
    %p123 = por %p121, %p122
    %p124 = scmp.ne.s32.totalorder %s116, %s119
    %p125 = scmp.eq.s32.totalorder %s10, 0
    %p126 = por %p124, %p125
    %p127 = scmp.ne.s32.totalorder %s116, %s119
    %p128 = scmp.eq.s32.totalorder %s15, 3
    %p129 = por %p127, %p128
    %p130 = scmp.ne.s32.totalorder %s119, %s120
    %p131 = scmp.eq.s32.totalorder %s15, 0
    %p132 = por %p130, %p131
    %p133 = scmp.ne.s32.totalorder %s119, %s120
    %p134 = scmp.eq.s32.totalorder %s16, 3
    %p135 = por %p133, %p134
    %p137 = scmp.ne.s32.totalorder %s120, %s136
    %p138 = scmp.eq.s32.totalorder %s16, 0
    %p139 = por %p137, %p138
    %p140 = scmp.le.s32.totalorder 1, %s10
    %p141 = scmp.lt.s32.totalorder %s10, 5
    %p142 = pnand %p140, %p141
    %p143 = pneg %p142
    // Predicated region
    $region9: #{_lambda_.13} parent=5 // pred_check
      _
    $region10: #{_lambda_.13} parent=5 // pred_check_branch
      %145 = sbr.rel (%p142) target = $region12
    $region11: #{_lambda_.13} parent=5 // pred_region
      %s146 = ssub.s32 %s10, 1
    $region12: #{_lambda_.13} parent=5 // pred_fallthru
      _
    %p147 = scmp.lt.s32.totalorder %s10, 4
    // Predicated region
    $region13: #{_lambda_.13} parent=5 // pred_check
      %p148 = pneg %p147
    $region14: #{_lambda_.13} parent=5 // pred_check_branch
      %150 = sbr.rel (%p148) target = $region16
    $region15: #{_lambda_.13} parent=5 // pred_region
      // Predicated region
      $region17: #{_lambda_.13} parent=15 // pred_check
        %p151 = pneg %p44
      $region18: #{_lambda_.13} parent=15 // pred_check_branch
        %153 = sbr.rel (%p151) target = $region20
      $region19: #{_lambda_.13} parent=15 // pred_region
        %s154 = smul.u32 4, %s18
        %p155 = scmp.lt.s32.totalorder %s17, 3
        %s156 = scalar_select %p155, %s17, 3
        %p157 = scmp.lt.s32.totalorder %s154, 3
        %s158 = scalar_select %p157, %s154, 3
        %s159 = smul.addr %s158, 2
        %s160 = smul.addr %s156, 8
        %s161 = sadd.s32 %s159, %s160
        %s162 = smul.addr %s161, 4
        %s163 = scalar_lea.vmem %s0, %s162
        %s164 = smul.u32 4, %s18
      $region20: #{_lambda_.13} parent=15 // pred_fallthru
        _
      // Predicated region
      $region21: #{_lambda_.13} parent=15 // pred_check
        %p165 = pneg %p70
      $region22: #{_lambda_.13} parent=15 // pred_check_branch
        %167 = sbr.rel (%p165) target = $region24
      $region23: #{_lambda_.13} parent=15 // pred_region
        %p168 = scmp.lt.s32.totalorder %s17, 3
        %s169 = scalar_select %p168, %s17, 3
        %s170 = smul.addr %s169, 32
        %s171 = smul.addr %s170, 4
        %s172 = scalar_lea.vmem %s1, %s171
      $region24: #{_lambda_.13} parent=15 // pred_fallthru
        _
    $region16: #{_lambda_.13} parent=5 // pred_fallthru
      _
    %p173 = scmp.le.s32.totalorder 1, %s10
    %p174 = scmp.lt.s32.totalorder %s10, 5
    %p175 = pnand %p173, %p174
    %p176 = pneg %p175
    // Predicated region
    $region25: #{_lambda_.13} parent=5 // pred_check
      _
    $region26: #{_lambda_.13} parent=5 // pred_check_branch
      %178 = sbr.rel (%p175) target = $region28
    $region27: #{_lambda_.13} parent=5 // pred_region
      %s179 = ssub.s32 %s10, 1
      %s180 = smul.u32 4, %s20
      %p181 = scmp.lt.s32.totalorder %s19, 3
      %s182 = scalar_select %p181, %s19, 3
      %p183 = scmp.lt.s32.totalorder %s180, 3
      %s184 = scalar_select %p183, %s180, 3
      %s185 = smul.addr %s184, 2
      %s186 = smul.addr %s182, 8
      %s187 = sadd.s32 %s185, %s186
      %s188 = smul.addr %s187, 4
      %s189 = scalar_lea.vmem %s0, %s188
      %p190 = pneg %p50
      %p191 = pneg %p47
      %p192 = scmp.lt.s32.totalorder %s19, 3
      %s193 = scalar_select %p192, %s19, 3
      %s194 = smul.addr %s193, 32
      %s195 = smul.addr %s194, 4
      %s196 = scalar_lea.vmem %s1, %s195
      %p197 = pneg %p76
      %p198 = pneg %p73
      %p199 = pneg %p104
      %p200 = pneg %p101
      %s201 = smul.u32 4, %s20
      %p202 = scmp.lt.s32.totalorder %s19, 3
      %s203 = scalar_select %p202, %s19, 3
      %p204 = scmp.lt.s32.totalorder %s201, 3
      %s205 = scalar_select %p204, %s201, 3
      %s206 = smul.addr %s203, 4
      %s207 = sadd.s32 %s205, %s206
      %s208 = smul.addr %s207, 8
      %s209 = scalar_lea.vmem %s2, %s208
      %p210 = pneg %p132
      %p211 = pneg %p129
      %p212 = scmp.lt.s32.totalorder %s19, 3
      %s213 = scalar_select %p212, %s19, 3
      %p214 = scmp.lt.s32.totalorder %s20, 0
      %s215 = scalar_select %p214, %s20, 0
      %s216 = sadd.s32 %s215, %s213
      %s217 = smul.addr %s216, 2
      %s218 = scalar_lea.vmem %s3, %s217
      %s219 = smul.u32 4, %s20
      %p220 = scmp.lt.s32.totalorder %s19, 3
      %s221 = scalar_select %p220, %s19, 3
      %p222 = scmp.lt.s32.totalorder %s219, 3
      %s223 = scalar_select %p222, %s219, 3
      %s224 = smul.addr %s223, 2
      %s225 = smul.addr %s221, 8
      %s226 = sadd.s32 %s224, %s225
      %s227 = smul.addr %s226, 4
      %s228 = scalar_lea.vmem %s0, %s227
      %s229 = smul.u32 4, %s20
      %p230 = scmp.lt.s32.totalorder %s19, 3
      %s231 = scalar_select %p230, %s19, 3
      %s232 = smul.addr %s231, 32
      %s233 = smul.addr %s232, 4
      %s234 = scalar_lea.vmem %s1, %s233
      %s235 = smul.u32 4, %s20
      %p236 = scmp.lt.s32.totalorder %s19, 3
      %s237 = scalar_select %p236, %s19, 3
      %p238 = scmp.lt.s32.totalorder %s235, 3
      %s239 = scalar_select %p238, %s235, 3
      %s240 = smul.addr %s237, 4
      %s241 = sadd.s32 %s239, %s240
      %s242 = smul.addr %s241, 8
      %s243 = scalar_lea.vmem %s2, %s242
      %s244 = smul.u32 4, %s20
      %p245 = scmp.lt.s32.totalorder %s19, 3
      %s246 = scalar_select %p245, %s19, 3
      %p247 = scmp.lt.s32.totalorder %s20, 0
      %s248 = scalar_select %p247, %s20, 0
      %s249 = sadd.s32 %s248, %s246
      %s250 = smul.addr %s249, 2
      %s251 = scalar_lea.vmem %s3, %s250
      %v253 = vld [vmem:[%s228] sm:$0xff]
      %v254 = vld [vmem:[%s228 + $0x8] sm:$0xff]
      %v255 = vld [vmem:[%s228 + $0x10] sm:$0xff]
      %v256 = vld [vmem:[%s228 + $0x18] sm:$0xff]
      %v257 = vld [vmem:[%s234] sm:$0xf]
      %v258 = vld [vmem:[%s234 + $0x4] sm:$0xf]
      %v259 = vld [vmem:[%s234 + $0x8] sm:$0xf]
      %v260 = vld [vmem:[%s234 + $0xc] sm:$0xf]
      %v261 = vld [vmem:[%s234 + $0x10] sm:$0xf]
      %v262 = vld [vmem:[%s234 + $0x14] sm:$0xf]
      %v263 = vld [vmem:[%s234 + $0x18] sm:$0xf]
      %v264 = vld [vmem:[%s234 + $0x1c] sm:$0xf]
      %v265 = vld [vmem:[%s234 + $0x20] sm:$0xf]
      %v266 = vld [vmem:[%s234 + $0x24] sm:$0xf]
      %v267 = vld [vmem:[%s234 + $0x28] sm:$0xf]
      %v268 = vld [vmem:[%s234 + $0x2c] sm:$0xf]
      %v269 = vld [vmem:[%s234 + $0x30] sm:$0xf]
      %v270 = vld [vmem:[%s234 + $0x34] sm:$0xf]
      %v271 = vld [vmem:[%s234 + $0x38] sm:$0xf]
      %v272 = vld [vmem:[%s234 + $0x3c] sm:$0xf]
      %v273 = vld [vmem:[%s234 + $0x40] sm:$0xf]
      %v274 = vld [vmem:[%s234 + $0x44] sm:$0xf]
      %v275 = vld [vmem:[%s234 + $0x48] sm:$0xf]
      %v276 = vld [vmem:[%s234 + $0x4c] sm:$0xf]
      %v277 = vld [vmem:[%s234 + $0x50] sm:$0xf]
      %v278 = vld [vmem:[%s234 + $0x54] sm:$0xf]
      %v279 = vld [vmem:[%s234 + $0x58] sm:$0xf]
      %v280 = vld [vmem:[%s234 + $0x5c] sm:$0xf]
      %v281 = vld [vmem:[%s234 + $0x60] sm:$0xf]
      %v282 = vld [vmem:[%s234 + $0x64] sm:$0xf]
      %v283 = vld [vmem:[%s234 + $0x68] sm:$0xf]
      %v284 = vld [vmem:[%s234 + $0x6c] sm:$0xf]
      %v285 = vld [vmem:[%s234 + $0x70] sm:$0xf]
      %v286 = vld [vmem:[%s234 + $0x74] sm:$0xf]
      %v287 = vld [vmem:[%s234 + $0x78] sm:$0xf]
      %v288 = vld [vmem:[%s234 + $0x7c] sm:$0xf]
      %v293 = vunpack.c.l.b16 %v253
      %v294 = vunpack.c.h.b16 %v253
      %v295 = vunpack.c.l.b16 %v254
      %v296 = vunpack.c.h.b16 %v254
      %v297 = vunpack.c.l.b16 %v255
      %v298 = vunpack.c.h.b16 %v255
      %v299 = vunpack.c.l.b16 %v256
      %v300 = vunpack.c.h.b16 %v256
      %v301 = vpack.c.b16 %v295, %v293
      %v302 = vpack.c.b16 %v296, %v294
      %v303 = vpack.c.b16 %v299, %v297
      %v304 = vpack.c.b16 %v300, %v298
      %v341 = vunpack.c.l.b16 %v257
      %v342 = vunpack.c.l.b16 %v258
      %v343 = vunpack.c.l.b16 %v259
      %v344 = vunpack.c.l.b16 %v260
      %v345 = vunpack.c.l.b16 %v261
      %v346 = vunpack.c.l.b16 %v262
      %v347 = vunpack.c.l.b16 %v263
      %v348 = vunpack.c.l.b16 %v264
      %v349 = vunpack.c.l.b16 %v265
      %v350 = vunpack.c.l.b16 %v266
      %v351 = vunpack.c.l.b16 %v267
      %v352 = vunpack.c.l.b16 %v268
      %v353 = vunpack.c.l.b16 %v269
      %v354 = vunpack.c.l.b16 %v270
      %v355 = vunpack.c.l.b16 %v271
      %v356 = vunpack.c.l.b16 %v272
      %v357 = vunpack.c.l.b16 %v273
      %v358 = vunpack.c.l.b16 %v274
      %v359 = vunpack.c.l.b16 %v275
      %v360 = vunpack.c.l.b16 %v276
      %v361 = vunpack.c.l.b16 %v277
      %v362 = vunpack.c.l.b16 %v278
      %v363 = vunpack.c.l.b16 %v279
      %v364 = vunpack.c.l.b16 %v280
      %v365 = vunpack.c.l.b16 %v281
      %v366 = vunpack.c.l.b16 %v282
      %v367 = vunpack.c.l.b16 %v283
      %v368 = vunpack.c.l.b16 %v284
      %v369 = vunpack.c.l.b16 %v285
      %v370 = vunpack.c.l.b16 %v286
      %v371 = vunpack.c.l.b16 %v287
      %v372 = vunpack.c.l.b16 %v288
      %v373 = vpack.c.b16 %v342, %v341
      %v374 = vpack.c.b16 %v344, %v343
      %v375 = vpack.c.b16 %v346, %v345
      %v376 = vpack.c.b16 %v348, %v347
      %v377 = vpack.c.b16 %v350, %v349
      %v378 = vpack.c.b16 %v352, %v351
      %v379 = vpack.c.b16 %v354, %v353
      %v380 = vpack.c.b16 %v356, %v355
      %v381 = vpack.c.b16 %v358, %v357
      %v382 = vpack.c.b16 %v360, %v359
      %v383 = vpack.c.b16 %v362, %v361
      %v384 = vpack.c.b16 %v364, %v363
      %v385 = vpack.c.b16 %v366, %v365
      %v386 = vpack.c.b16 %v368, %v367
      %v387 = vpack.c.b16 %v370, %v369
      %v388 = vpack.c.b16 %v372, %v371
      %405 = vmatprep.subr.bf16.mxu0 0
      %406 = vmatpush1.bf16.msra.mxu0 %v380
      %407 = vmatprep.subr.bf16.mxu0 0
      %408 = vmatpush1.bf16.msra.mxu0 %v379
      %409 = vmatprep.subr.bf16.mxu0 0
      %410 = vmatpush1.bf16.msra.mxu0 %v378
      %411 = vmatprep.subr.bf16.mxu0 0
      %412 = vmatpush1.bf16.msra.mxu0 %v377
      %413 = vmatprep.subr.bf16.mxu0 0
      %414 = vmatpush1.bf16.msra.mxu0 %v376
      %415 = vmatprep.subr.bf16.mxu0 0
      %416 = vmatpush1.bf16.msra.mxu0 %v375
      %417 = vmatprep.subr.bf16.mxu0 0
      %418 = vmatpush1.bf16.msra.mxu0 %v374
      %419 = vmatprep.subr.bf16.mxu0 0
      %420 = vmatpush1.bf16.msra.mxu0 %v373
      %421 = vmatprep.subr.bf16.mxu0 0
      %422 = vmatpush2.bf16.msra.mxu0 %v388
      %423 = vmatprep.subr.bf16.mxu0 0
      %424 = vmatpush2.bf16.msra.mxu0 %v387
      %425 = vmatprep.subr.bf16.mxu0 0
      %426 = vmatpush2.bf16.msra.mxu0 %v386
      %427 = vmatprep.subr.bf16.mxu0 0
      %428 = vmatpush2.bf16.msra.mxu0 %v385
      %429 = vmatprep.subr.bf16.mxu0 0
      %430 = vmatpush2.bf16.msra.mxu0 %v384
      %431 = vmatprep.subr.bf16.mxu0 0
      %432 = vmatpush2.bf16.msra.mxu0 %v383
      %433 = vmatprep.subr.bf16.mxu0 0
      %434 = vmatpush2.bf16.msra.mxu0 %v382
      %435 = vmatprep.subr.bf16.mxu0 0
      %436 = vmatpush2.bf16.msra.mxu0 %v381
      %437 = vmatprep.mubr.bf16.mxu0 %v302
      %438 = vmatmul.mubr.bf16.gmra.mxu0 %v301
      %v439 = vpop.f32.mrf.mxu0
      %v440 = vadd.f32 0.0, %v439
      %v441 = vpop.f32.mrf.mxu0
      %v442 = vpop.f32.mrf.mxu0
      %v443 = vadd.f32 0.0, %v442
      %v444 = vpop.f32.mrf.mxu0
      %445 = vmatprep.mubr.bf16.mxu0 %v304
      %446 = vmatmul.mubr.bf16.gmra.mxu0 %v303
      %v447 = vpop.f32.mrf.mxu0
      %v448 = vadd.f32 0.0, %v447
      %v449 = vpop.f32.mrf.mxu0
      %v450 = vpop.f32.mrf.mxu0
      %v451 = vadd.f32 0.0, %v450
      %v452 = vpop.f32.mrf.mxu0
      %453 = vdwg.mxu0
      %454 = vst [vmem:[%s243] sm:$0xff] %v440
      %455 = vst [vmem:[%s243 + $0x8] sm:$0xff] %v443
      %456 = vst [vmem:[%s243 + $0x10] sm:$0xff] %v448
      %457 = vst [vmem:[%s243 + $0x18] sm:$0xff] %v451
      %v458 = vadd.f32 %v440, %v443
      %v459 = vadd.f32 %v458, %v448
      %v460 = vadd.f32 %v459, %v451
      %v461 = vrot.slane %v460, 4
      %v462 = vadd.f32 %v460, %v461
      %v463 = vrot.slane %v462, 2
      %v464 = vadd.f32 %v462, %v463
      %v465 = vrot.slane %v464, 1
      %v466 = vadd.f32 %v464, %v465
      %v467 = vmul.f32 %v440, %v440
      %v468 = vmul.f32 %v443, %v443
      %v469 = vmul.f32 %v448, %v448
      %v470 = vmul.f32 %v451, %v451
      %v471 = vadd.f32 %v467, %v468
      %v472 = vadd.f32 %v471, %v469
      %v473 = vadd.f32 %v472, %v470
      %v474 = vrot.slane %v473, 4
      %v475 = vadd.f32 %v473, %v474
      %v476 = vrot.slane %v475, 2
      %v477 = vadd.f32 %v475, %v476
      %v478 = vrot.slane %v477, 1
      %v479 = vadd.f32 %v477, %v478
      %vm480 = vcmask 1040384
      %v481 = vsel %vm480, %v466, %v479
      %482 = vst [vmem:[%s251] sm:$0x3] %v481
      %s483 = smul.u32 4, %s20
      %p484 = scmp.lt.s32.totalorder %s19, 3
      %s485 = scalar_select %p484, %s19, 3
      %p486 = scmp.lt.s32.totalorder %s483, 3
      %s487 = scalar_select %p486, %s483, 3
      %s488 = smul.addr %s485, 4
      %s489 = sadd.s32 %s487, %s488
      %s490 = smul.addr %s489, 8
      %s491 = scalar_lea.vmem %s2, %s490
      %p492 = scmp.lt.s32.totalorder %s19, 3
      %s493 = scalar_select %p492, %s19, 3
      %p494 = scmp.lt.s32.totalorder %s20, 0
      %s495 = scalar_select %p494, %s20, 0
      %s496 = sadd.s32 %s495, %s493
      %s497 = smul.addr %s496, 2
      %s498 = scalar_lea.vmem %s3, %s497
      // Predicated region
      $region29: #{_lambda_.13} parent=27 // pred_check
        %p499 = pneg %p101
      $region30: #{_lambda_.13} parent=27 // pred_check_branch
        %501 = sbr.rel (%p499) target = $region32
      $region31: #{_lambda_.13} parent=27 // pred_region
        %s502 = smul.u32 4, %s20
      $region32: #{_lambda_.13} parent=27 // pred_fallthru
        _
      // Predicated region
      $region33: #{_lambda_.13} parent=27 // pred_check
        %p503 = pneg %p129
      $region34: #{_lambda_.13} parent=27 // pred_check_branch
        %505 = sbr.rel (%p503) target = $region36
      $region35: #{_lambda_.13} parent=27 // pred_region
        _
      $region36: #{_lambda_.13} parent=27 // pred_fallthru
        _
    $region28: #{_lambda_.13} parent=5 // pred_fallthru
      _
    %p506 = scmp.le.s32.totalorder 2, %s10
    // Predicated region
    $region37: #{_lambda_.13} parent=5 // pred_check
      %p507 = pneg %p506
    $region38: #{_lambda_.13} parent=5 // pred_check_branch
      %509 = sbr.rel (%p507) target = $region40
    $region39: #{_lambda_.13} parent=5 // pred_region
      %s510 = ssub.s32 %s10, 2
      // Predicated region
      $region41: #{_lambda_.13} parent=39 // pred_check
        %p511 = pneg %p107
      $region42: #{_lambda_.13} parent=39 // pred_check_branch
        %513 = sbr.rel (%p511) target = $region44
      $region43: #{_lambda_.13} parent=39 // pred_region
        %s514 = smul.u32 4, %s22
        %p515 = scmp.lt.s32.totalorder %s21, 3
        %s516 = scalar_select %p515, %s21, 3
        %p517 = scmp.lt.s32.totalorder %s514, 3
        %s518 = scalar_select %p517, %s514, 3
        %s519 = smul.addr %s516, 4
        %s520 = sadd.s32 %s518, %s519
        %s521 = smul.addr %s520, 8
        %s522 = scalar_lea.vmem %s2, %s521
      $region44: #{_lambda_.13} parent=39 // pred_fallthru
        _
      // Predicated region
      $region45: #{_lambda_.13} parent=39 // pred_check
        %p523 = pneg %p135
      $region46: #{_lambda_.13} parent=39 // pred_check_branch
        %525 = sbr.rel (%p523) target = $region48
      $region47: #{_lambda_.13} parent=39 // pred_region
        %p526 = scmp.lt.s32.totalorder %s21, 3
        %s527 = scalar_select %p526, %s21, 3
        %p528 = scmp.lt.s32.totalorder %s22, 0
        %s529 = scalar_select %p528, %s22, 0
        %s530 = sadd.s32 %s529, %s527
        %s531 = smul.addr %s530, 2
        %s532 = scalar_lea.vmem %s3, %s531
      $region48: #{_lambda_.13} parent=39 // pred_fallthru
        _
    $region40: #{_lambda_.13} parent=5 // pred_fallthru
      _
  $region6: #{_lambda_.13} parent=0 // loop_footer
    %s14 = sadd.s32 1, %s10
  $region7: #{_lambda_.13} parent=0 // loop_footer_branch
    %9 = sbr.rel target = $region3
  $region8: #{_lambda_.13} parent=0 // loop_exit
    _

// kernel: _lambda_.15
$region0: #{_lambda_.15}
  #allocation0 [shape = 'u32[]', space=smem, size = 0x4, offset = 0x4, fixed_abs, tag = 'smem constant byte address 0x4 - core index']
  #allocation1 [shape = 'u32[144,128]{1,0:T(1,128)}', space=vmem, size = 0x12000, scoped, tag = 'internal scratch']
  %s0 = inlined_call_operand.vmem [shape: bf16[4,128,128], index: 0, kind: input, shape index: {}]
  %s1 = inlined_call_operand.vmem [shape: bf16[4,128,128], index: 1, kind: input, shape index: {}]
  %s2 = inlined_call_operand.vmem [shape: f32[4,128,128], index: 2, kind: output, shape index: {0}]
  %s3 = inlined_call_operand.vmem [shape: f32[4,1,2,128], index: 3, kind: output, shape index: {1}]
  %4 = xla_tuple %s2, %s3
  %s5 = sld [smem:[#allocation0]]
  $region49: #{_lambda_.15} parent=0
    _
  %s7 = ssub.s32 1, %s5
  %s8 = scalar_select 0, %s7, %s5
  loop: start=0, step=1, limit=6
  $region2: #{_lambda_.15} parent=0 // loop_pre_header
    _
  $region3: #{_lambda_.15} parent=0 // loop_header
    %s10 = sphi 0, %s14
    %p11 = scmp.ge.s32.totalorder %s10, 6
    %s17 = sphi 0, %s29
    %s18 = sphi 0, %s25
    %s19 = sphi 0, %s17
    %s20 = sphi 0, %s18
    %s21 = sphi 0, %s19
    %s22 = sphi 0, %s20
    %s34 = sphi 0, %s36
    %s37 = sphi 0, %s34
    %s38 = sphi 0, %s37
    %s54 = sphi 0, %s38
    %s60 = sphi 0, %s62
    %s63 = sphi 0, %s60
    %s64 = sphi 0, %s63
    %s80 = sphi 0, %s64
    %s88 = sphi 0, %s90
    %s91 = sphi 0, %s88
    %s92 = sphi 0, %s91
    %s108 = sphi 0, %s92
    %s116 = sphi 0, %s118
    %s119 = sphi 0, %s116
    %s120 = sphi 0, %s119
    %s136 = sphi 0, %s120
  $region4: #{_lambda_.15} parent=0 // loop_header_branch
    %13 = sbr.rel (%p11) target = $region8
  $region5: #{_lambda_.15} parent=0 // loop_body
    %s15 = ssub.s32 %s10, 1
    %s16 = ssub.s32 %s10, 2
    %s23 = sadd.s32 1, %s18
    %p24 = scmp.ge.s32.totalorder %s23, 1
    %s25 = scalar_select %p24, 0, %s23
    %s26 = sadd.s32 1, %s17
    %s27 = scalar_select %p24, %s26, %s17
    %p28 = scmp.ge.s32.totalorder %s27, 4
    %s29 = scalar_select %p28, 0, %s27
    %s30 = ssub.s32 %s17, %s29
    %s31 = ssub.s32 %s18, %s25
    %s32 = sor.u32 %s30, %s31
    %p33 = scmp.eq.s32.totalorder %s32, 0
    %s35 = sadd.s32 %s34, 1
    %s36 = scalar_select %p33, %s34, %s35
    %p39 = pneg %p33
    %p40 = scmp.eq.s32.totalorder %s10, 3
    %p41 = por %p39, %p40
    %p42 = scmp.ne.s32.totalorder %s34, %s37
    %p43 = scmp.eq.s32.totalorder %s10, 0
    %p44 = por %p42, %p43
    %p45 = scmp.ne.s32.totalorder %s34, %s37
    %p46 = scmp.eq.s32.totalorder %s15, 3
    %p47 = por %p45, %p46
    %p48 = scmp.ne.s32.totalorder %s37, %s38
    %p49 = scmp.eq.s32.totalorder %s15, 0
    %p50 = por %p48, %p49
    %p51 = scmp.ne.s32.totalorder %s37, %s38
    %p52 = scmp.eq.s32.totalorder %s16, 3
    %p53 = por %p51, %p52
    %p55 = scmp.ne.s32.totalorder %s38, %s54
    %p56 = scmp.eq.s32.totalorder %s16, 0
    %p57 = por %p55, %p56
    %s58 = ssub.s32 %s17, %s29
    %p59 = scmp.eq.s32.totalorder %s58, 0
    %s61 = sadd.s32 %s60, 1
    %s62 = scalar_select %p59, %s60, %s61
    %p65 = pneg %p59
    %p66 = scmp.eq.s32.totalorder %s10, 3
    %p67 = por %p65, %p66
    %p68 = scmp.ne.s32.totalorder %s60, %s63
    %p69 = scmp.eq.s32.totalorder %s10, 0
    %p70 = por %p68, %p69
    %p71 = scmp.ne.s32.totalorder %s60, %s63
    %p72 = scmp.eq.s32.totalorder %s15, 3
    %p73 = por %p71, %p72
    %p74 = scmp.ne.s32.totalorder %s63, %s64
    %p75 = scmp.eq.s32.totalorder %s15, 0
    %p76 = por %p74, %p75
    %p77 = scmp.ne.s32.totalorder %s63, %s64
    %p78 = scmp.eq.s32.totalorder %s16, 3
    %p79 = por %p77, %p78
    %p81 = scmp.ne.s32.totalorder %s64, %s80
    %p82 = scmp.eq.s32.totalorder %s16, 0
    %p83 = por %p81, %p82
    %s84 = ssub.s32 %s17, %s29
    %s85 = ssub.s32 %s18, %s25
    %s86 = sor.u32 %s84, %s85
    %p87 = scmp.eq.s32.totalorder %s86, 0
    %s89 = sadd.s32 %s88, 1
    %s90 = scalar_select %p87, %s88, %s89
    %p93 = pneg %p87
    %p94 = scmp.eq.s32.totalorder %s10, 3
    %p95 = por %p93, %p94
    %p96 = scmp.ne.s32.totalorder %s88, %s91
    %p97 = scmp.eq.s32.totalorder %s10, 0
    %p98 = por %p96, %p97
    %p99 = scmp.ne.s32.totalorder %s88, %s91
    %p100 = scmp.eq.s32.totalorder %s15, 3
    %p101 = por %p99, %p100
    %p102 = scmp.ne.s32.totalorder %s91, %s92
    %p103 = scmp.eq.s32.totalorder %s15, 0
    %p104 = por %p102, %p103
    %p105 = scmp.ne.s32.totalorder %s91, %s92
    %p106 = scmp.eq.s32.totalorder %s16, 3
    %p107 = por %p105, %p106
    %p109 = scmp.ne.s32.totalorder %s92, %s108
    %p110 = scmp.eq.s32.totalorder %s16, 0
    %p111 = por %p109, %p110
    %s112 = ssub.s32 %s17, %s29
    %s113 = ssub.s32 %s18, %s25
    %s114 = sor.u32 %s112, %s113
    %p115 = scmp.eq.s32.totalorder %s114, 0
    %s117 = sadd.s32 %s116, 1
    %s118 = scalar_select %p115, %s116, %s117
    %p121 = pneg %p115
    %p122 = scmp.eq.s32.totalorder %s10, 3
    %p123 = por %p121, %p122
    %p124 = scmp.ne.s32.totalorder %s116, %s119
    %p125 = scmp.eq.s32.totalorder %s10, 0
    %p126 = por %p124, %p125
    %p127 = scmp.ne.s32.totalorder %s116, %s119
    %p128 = scmp.eq.s32.totalorder %s15, 3
    %p129 = por %p127, %p128
    %p130 = scmp.ne.s32.totalorder %s119, %s120
    %p131 = scmp.eq.s32.totalorder %s15, 0
    %p132 = por %p130, %p131
    %p133 = scmp.ne.s32.totalorder %s119, %s120
    %p134 = scmp.eq.s32.totalorder %s16, 3
    %p135 = por %p133, %p134
    %p137 = scmp.ne.s32.totalorder %s120, %s136
    %p138 = scmp.eq.s32.totalorder %s16, 0
    %p139 = por %p137, %p138
    %p140 = scmp.le.s32.totalorder 1, %s10
    %p141 = scmp.lt.s32.totalorder %s10, 5
    %p142 = pnand %p140, %p141
    %p143 = pneg %p142
    // Predicated region
    $region9: #{_lambda_.15} parent=5 // pred_check
      _
    $region10: #{_lambda_.15} parent=5 // pred_check_branch
      %145 = sbr.rel (%p142) target = $region12
    $region11: #{_lambda_.15} parent=5 // pred_region
      %s146 = ssub.s32 %s10, 1
    $region12: #{_lambda_.15} parent=5 // pred_fallthru
      _
    %p147 = scmp.lt.s32.totalorder %s10, 4
    // Predicated region
    $region13: #{_lambda_.15} parent=5 // pred_check
      %p148 = pneg %p147
    $region14: #{_lambda_.15} parent=5 // pred_check_branch
      %150 = sbr.rel (%p148) target = $region16
    $region15: #{_lambda_.15} parent=5 // pred_region
      // Predicated region
      $region17: #{_lambda_.15} parent=15 // pred_check
        %p151 = pneg %p44
      $region18: #{_lambda_.15} parent=15 // pred_check_branch
        %153 = sbr.rel (%p151) target = $region20
      $region19: #{_lambda_.15} parent=15 // pred_region
        %s154 = smul.u32 16, %s18
        %p155 = scmp.lt.s32.totalorder %s17, 3
        %s156 = scalar_select %p155, %s17, 3
        %p157 = scmp.lt.s32.totalorder %s154, 15
        %s158 = scalar_select %p157, %s154, 15
        %s159 = smul.addr %s156, 16
        %s160 = sadd.s32 %s158, %s159
        %s161 = smul.addr %s160, 4
        %s162 = scalar_lea.vmem %s0, %s161
        %s163 = smul.u32 16, %s18
      $region20: #{_lambda_.15} parent=15 // pred_fallthru
        _
      // Predicated region
      $region21: #{_lambda_.15} parent=15 // pred_check
        %p164 = pneg %p70
      $region22: #{_lambda_.15} parent=15 // pred_check_branch
        %166 = sbr.rel (%p164) target = $region24
      $region23: #{_lambda_.15} parent=15 // pred_region
        %p167 = scmp.lt.s32.totalorder %s17, 3
        %s168 = scalar_select %p167, %s17, 3
        %s169 = smul.addr %s168, 16
        %s170 = smul.addr %s169, 4
        %s171 = scalar_lea.vmem %s1, %s170
      $region24: #{_lambda_.15} parent=15 // pred_fallthru
        _
    $region16: #{_lambda_.15} parent=5 // pred_fallthru
      _
    %p172 = scmp.le.s32.totalorder 1, %s10
    %p173 = scmp.lt.s32.totalorder %s10, 5
    %p174 = pnand %p172, %p173
    %p175 = pneg %p174
    // Predicated region
    $region25: #{_lambda_.15} parent=5 // pred_check
      _
    $region26: #{_lambda_.15} parent=5 // pred_check_branch
      %177 = sbr.rel (%p174) target = $region28
    $region27: #{_lambda_.15} parent=5 // pred_region
      %s178 = ssub.s32 %s10, 1
      %s179 = smul.u32 16, %s20
      %p180 = scmp.lt.s32.totalorder %s19, 3
      %s181 = scalar_select %p180, %s19, 3
      %p182 = scmp.lt.s32.totalorder %s179, 15
      %s183 = scalar_select %p182, %s179, 15
      %s184 = smul.addr %s181, 16
      %s185 = sadd.s32 %s183, %s184
      %s186 = smul.addr %s185, 4
      %s187 = scalar_lea.vmem %s0, %s186
      %p188 = pneg %p50
      %p189 = pneg %p47
      %p190 = scmp.lt.s32.totalorder %s19, 3
      %s191 = scalar_select %p190, %s19, 3
      %s192 = smul.addr %s191, 16
      %s193 = smul.addr %s192, 4
      %s194 = scalar_lea.vmem %s1, %s193
      %p195 = pneg %p76
      %p196 = pneg %p73
      %p197 = pneg %p104
      %p198 = pneg %p101
      %s199 = smul.u32 16, %s20
      %p200 = scmp.lt.s32.totalorder %s19, 3
      %s201 = scalar_select %p200, %s19, 3
      %p202 = scmp.lt.s32.totalorder %s199, 15
      %s203 = scalar_select %p202, %s199, 15
      %s204 = smul.addr %s201, 16
      %s205 = sadd.s32 %s203, %s204
      %s206 = smul.addr %s205, 8
      %s207 = scalar_lea.vmem %s2, %s206
      %p208 = pneg %p132
      %p209 = pneg %p129
      %p210 = scmp.lt.s32.totalorder %s19, 3
      %s211 = scalar_select %p210, %s19, 3
      %p212 = scmp.lt.s32.totalorder %s20, 0
      %s213 = scalar_select %p212, %s20, 0
      %s214 = sadd.s32 %s213, %s211
      %s215 = smul.addr %s214, 2
      %s216 = scalar_lea.vmem %s3, %s215
      %s217 = smul.u32 16, %s20
      %p218 = scmp.lt.s32.totalorder %s19, 3
      %s219 = scalar_select %p218, %s19, 3
      %p220 = scmp.lt.s32.totalorder %s217, 15
      %s221 = scalar_select %p220, %s217, 15
      %s222 = smul.addr %s219, 16
      %s223 = sadd.s32 %s221, %s222
      %s224 = smul.addr %s223, 4
      %s225 = scalar_lea.vmem %s0, %s224
      %s226 = smul.u32 16, %s20
      %p227 = scmp.lt.s32.totalorder %s19, 3
      %s228 = scalar_select %p227, %s19, 3
      %s229 = smul.addr %s228, 16
      %s230 = smul.addr %s229, 4
      %s231 = scalar_lea.vmem %s1, %s230
      %s232 = smul.u32 16, %s20
      %p233 = scmp.lt.s32.totalorder %s19, 3
      %s234 = scalar_select %p233, %s19, 3
      %p235 = scmp.lt.s32.totalorder %s232, 15
      %s236 = scalar_select %p235, %s232, 15
      %s237 = smul.addr %s234, 16
      %s238 = sadd.s32 %s236, %s237
      %s239 = smul.addr %s238, 8
      %s240 = scalar_lea.vmem %s2, %s239
      %s241 = smul.u32 16, %s20
      %p242 = scmp.lt.s32.totalorder %s19, 3
      %s243 = scalar_select %p242, %s19, 3
      %p244 = scmp.lt.s32.totalorder %s20, 0
      %s245 = scalar_select %p244, %s20, 0
      %s246 = sadd.s32 %s245, %s243
      %s247 = smul.addr %s246, 2
      %s248 = scalar_lea.vmem %s3, %s247
      %v250 = vld [vmem:[%s225] sm:$0xf]
      %v251 = vld [vmem:[%s225 + $0x4] sm:$0xf]
      %v252 = vld [vmem:[%s225 + $0x8] sm:$0xf]
      %v253 = vld [vmem:[%s225 + $0xc] sm:$0xf]
      %v254 = vld [vmem:[%s225 + $0x10] sm:$0xf]
      %v255 = vld [vmem:[%s225 + $0x14] sm:$0xf]
      %v256 = vld [vmem:[%s225 + $0x18] sm:$0xf]
      %v257 = vld [vmem:[%s225 + $0x1c] sm:$0xf]
      %v258 = vld [vmem:[%s225 + $0x20] sm:$0xf]
      %v259 = vld [vmem:[%s225 + $0x24] sm:$0xf]
      %v260 = vld [vmem:[%s225 + $0x28] sm:$0xf]
      %v261 = vld [vmem:[%s225 + $0x2c] sm:$0xf]
      %v262 = vld [vmem:[%s225 + $0x30] sm:$0xf]
      %v263 = vld [vmem:[%s225 + $0x34] sm:$0xf]
      %v264 = vld [vmem:[%s225 + $0x38] sm:$0xf]
      %v265 = vld [vmem:[%s225 + $0x3c] sm:$0xf]
      %v266 = vld [vmem:[%s231] sm:$0xf]
      %v267 = vld [vmem:[%s231 + $0x4] sm:$0xf]
      %v268 = vld [vmem:[%s231 + $0x8] sm:$0xf]
      %v269 = vld [vmem:[%s231 + $0xc] sm:$0xf]
      %v270 = vld [vmem:[%s231 + $0x10] sm:$0xf]
      %v271 = vld [vmem:[%s231 + $0x14] sm:$0xf]
      %v272 = vld [vmem:[%s231 + $0x18] sm:$0xf]
      %v273 = vld [vmem:[%s231 + $0x1c] sm:$0xf]
      %v274 = vld [vmem:[%s231 + $0x20] sm:$0xf]
      %v275 = vld [vmem:[%s231 + $0x24] sm:$0xf]
      %v276 = vld [vmem:[%s231 + $0x28] sm:$0xf]
      %v277 = vld [vmem:[%s231 + $0x2c] sm:$0xf]
      %v278 = vld [vmem:[%s231 + $0x30] sm:$0xf]
      %v279 = vld [vmem:[%s231 + $0x34] sm:$0xf]
      %v280 = vld [vmem:[%s231 + $0x38] sm:$0xf]
      %v281 = vld [vmem:[%s231 + $0x3c] sm:$0xf]
      %v298 = vunpack.c.l.b16 %v250
      %v299 = vunpack.c.l.b16 %v251
      %v300 = vunpack.c.l.b16 %v252
      %v301 = vunpack.c.l.b16 %v253
      %v302 = vunpack.c.l.b16 %v254
      %v303 = vunpack.c.l.b16 %v255
      %v304 = vunpack.c.l.b16 %v256
      %v305 = vunpack.c.l.b16 %v257
      %v306 = vunpack.c.l.b16 %v258
      %v307 = vunpack.c.l.b16 %v259
      %v308 = vunpack.c.l.b16 %v260
      %v309 = vunpack.c.l.b16 %v261
      %v310 = vunpack.c.l.b16 %v262
      %v311 = vunpack.c.l.b16 %v263
      %v312 = vunpack.c.l.b16 %v264
      %v313 = vunpack.c.l.b16 %v265
      %v314 = vpack.c.b16 %v299, %v298
      %v315 = vpack.c.b16 %v301, %v300
      %v316 = vpack.c.b16 %v303, %v302
      %v317 = vpack.c.b16 %v305, %v304
      %v318 = vpack.c.b16 %v307, %v306
      %v319 = vpack.c.b16 %v309, %v308
      %v320 = vpack.c.b16 %v311, %v310
      %v321 = vpack.c.b16 %v313, %v312
      %v346 = vunpack.c.l.b16 %v266
      %v347 = vunpack.c.l.b16 %v267
      %v348 = vunpack.c.l.b16 %v268
      %v349 = vunpack.c.l.b16 %v269
      %v350 = vunpack.c.l.b16 %v270
      %v351 = vunpack.c.l.b16 %v271
      %v352 = vunpack.c.l.b16 %v272
      %v353 = vunpack.c.l.b16 %v273
      %v354 = vunpack.c.l.b16 %v274
      %v355 = vunpack.c.l.b16 %v275
      %v356 = vunpack.c.l.b16 %v276
      %v357 = vunpack.c.l.b16 %v277
      %v358 = vunpack.c.l.b16 %v278
      %v359 = vunpack.c.l.b16 %v279
      %v360 = vunpack.c.l.b16 %v280
      %v361 = vunpack.c.l.b16 %v281
      %v362 = vpack.c.b16 %v347, %v346
      %v363 = vpack.c.b16 %v349, %v348
      %v364 = vpack.c.b16 %v351, %v350
      %v365 = vpack.c.b16 %v353, %v352
      %v366 = vpack.c.b16 %v355, %v354
      %v367 = vpack.c.b16 %v357, %v356
      %v368 = vpack.c.b16 %v359, %v358
      %v369 = vpack.c.b16 %v361, %v360
      %378 = vmatprep.subr.bf16.mxu0 0
      %379 = vmatpush1.bf16.msra.mxu0 %v369
      %380 = vmatprep.subr.bf16.mxu0 0
      %381 = vmatpush1.bf16.msra.mxu0 %v368
      %382 = vmatprep.subr.bf16.mxu0 0
      %383 = vmatpush1.bf16.msra.mxu0 %v367
      %384 = vmatprep.subr.bf16.mxu0 0
      %385 = vmatpush1.bf16.msra.mxu0 %v366
      %386 = vmatprep.subr.bf16.mxu0 0
      %387 = vmatpush1.bf16.msra.mxu0 %v365
      %388 = vmatprep.subr.bf16.mxu0 0
      %389 = vmatpush1.bf16.msra.mxu0 %v364
      %390 = vmatprep.subr.bf16.mxu0 0
      %391 = vmatpush1.bf16.msra.mxu0 %v363
      %392 = vmatprep.subr.bf16.mxu0 0
      %393 = vmatpush1.bf16.msra.mxu0 %v362
      %394 = vmatprep.subr.bf16.mxu0 0
      %395 = vmatpush2.bf16.msra.mxu0 0
      %396 = vmatprep.subr.bf16.mxu0 0
      %397 = vmatpush2.bf16.msra.mxu0 0
      %398 = vmatprep.subr.bf16.mxu0 0
      %399 = vmatpush2.bf16.msra.mxu0 0
      %400 = vmatprep.subr.bf16.mxu0 0
      %401 = vmatpush2.bf16.msra.mxu0 0
      %402 = vmatprep.subr.bf16.mxu0 0
      %403 = vmatpush2.bf16.msra.mxu0 0
      %404 = vmatprep.subr.bf16.mxu0 0
      %405 = vmatpush2.bf16.msra.mxu0 0
      %406 = vmatprep.subr.bf16.mxu0 0
      %407 = vmatpush2.bf16.msra.mxu0 0
      %408 = vmatprep.subr.bf16.mxu0 0
      %409 = vmatpush2.bf16.msra.mxu0 0
      %410 = vmatprep.mubr.bf16.mxu0 0
      %411 = vmatmul.mubr.bf16.gmra.mxu0 %v314
      %v412 = vpop.f32.mrf.mxu0
      %v413 = vadd.f32 0.0, %v412
      %v414 = vpop.f32.mrf.mxu0
      %v415 = vpop.f32.mrf.mxu0
      %v416 = vadd.f32 0.0, %v415
      %v417 = vpop.f32.mrf.mxu0
      %418 = vmatprep.mubr.bf16.mxu0 0
      %419 = vmatmul.mubr.bf16.gmra.mxu0 %v315
      %v420 = vpop.f32.mrf.mxu0
      %v421 = vadd.f32 0.0, %v420
      %v422 = vpop.f32.mrf.mxu0
      %v423 = vpop.f32.mrf.mxu0
      %v424 = vadd.f32 0.0, %v423
      %v425 = vpop.f32.mrf.mxu0
      %426 = vmatprep.mubr.bf16.mxu0 0
      %427 = vmatmul.mubr.bf16.gmra.mxu0 %v316
      %v428 = vpop.f32.mrf.mxu0
      %v429 = vadd.f32 0.0, %v428
      %v430 = vpop.f32.mrf.mxu0
      %v431 = vpop.f32.mrf.mxu0
      %v432 = vadd.f32 0.0, %v431
      %v433 = vpop.f32.mrf.mxu0
      %434 = vmatprep.mubr.bf16.mxu0 0
      %435 = vmatmul.mubr.bf16.gmra.mxu0 %v317
      %v436 = vpop.f32.mrf.mxu0
      %v437 = vadd.f32 0.0, %v436
      %v438 = vpop.f32.mrf.mxu0
      %v439 = vpop.f32.mrf.mxu0
      %v440 = vadd.f32 0.0, %v439
      %v441 = vpop.f32.mrf.mxu0
      %442 = vmatprep.mubr.bf16.mxu0 0
      %443 = vmatmul.mubr.bf16.gmra.mxu0 %v318
      %v444 = vpop.f32.mrf.mxu0
      %v445 = vadd.f32 0.0, %v444
      %v446 = vpop.f32.mrf.mxu0
      %v447 = vpop.f32.mrf.mxu0
      %v448 = vadd.f32 0.0, %v447
      %v449 = vpop.f32.mrf.mxu0
      %450 = vmatprep.mubr.bf16.mxu0 0
      %451 = vmatmul.mubr.bf16.gmra.mxu0 %v319
      %v452 = vpop.f32.mrf.mxu0
      %v453 = vadd.f32 0.0, %v452
      %v454 = vpop.f32.mrf.mxu0
      %v455 = vpop.f32.mrf.mxu0
      %v456 = vadd.f32 0.0, %v455
      %v457 = vpop.f32.mrf.mxu0
      %458 = vmatprep.mubr.bf16.mxu0 0
      %459 = vmatmul.mubr.bf16.gmra.mxu0 %v320
      %v460 = vpop.f32.mrf.mxu0
      %v461 = vadd.f32 0.0, %v460
      %v462 = vpop.f32.mrf.mxu0
      %v463 = vpop.f32.mrf.mxu0
      %v464 = vadd.f32 0.0, %v463
      %v465 = vpop.f32.mrf.mxu0
      %466 = vmatprep.mubr.bf16.mxu0 0
      %467 = vmatmul.mubr.bf16.gmra.mxu0 %v321
      %v468 = vpop.f32.mrf.mxu0
      %v469 = vadd.f32 0.0, %v468
      %v470 = vpop.f32.mrf.mxu0
      %v471 = vpop.f32.mrf.mxu0
      %v472 = vadd.f32 0.0, %v471
      %v473 = vpop.f32.mrf.mxu0
      %474 = vdwg.mxu0
      %475 = vst [vmem:[%s240] sm:$0xff] %v413
      %476 = vst [vmem:[%s240 + $0x8] sm:$0xff] %v416
      %477 = vst [vmem:[%s240 + $0x10] sm:$0xff] %v421
      %478 = vst [vmem:[%s240 + $0x18] sm:$0xff] %v424
      %479 = vst [vmem:[%s240 + $0x20] sm:$0xff] %v429
      %480 = vst [vmem:[%s240 + $0x28] sm:$0xff] %v432
      %481 = vst [vmem:[%s240 + $0x30] sm:$0xff] %v437
      %482 = vst [vmem:[%s240 + $0x38] sm:$0xff] %v440
      %483 = vst [vmem:[%s240 + $0x40] sm:$0xff] %v445
      %484 = vst [vmem:[%s240 + $0x48] sm:$0xff] %v448
      %485 = vst [vmem:[%s240 + $0x50] sm:$0xff] %v453
      %486 = vst [vmem:[%s240 + $0x58] sm:$0xff] %v456
      %487 = vst [vmem:[%s240 + $0x60] sm:$0xff] %v461
      %488 = vst [vmem:[%s240 + $0x68] sm:$0xff] %v464
      %489 = vst [vmem:[%s240 + $0x70] sm:$0xff] %v469
      %490 = vst [vmem:[%s240 + $0x78] sm:$0xff] %v472
      %v491 = vadd.f32 %v413, %v416
      %v492 = vadd.f32 %v491, %v421
      %v493 = vadd.f32 %v492, %v424
      %v494 = vadd.f32 %v493, %v429
      %v495 = vadd.f32 %v494, %v432
      %v496 = vadd.f32 %v495, %v437
      %v497 = vadd.f32 %v496, %v440
      %v498 = vadd.f32 %v497, %v445
      %v499 = vadd.f32 %v498, %v448
      %v500 = vadd.f32 %v499, %v453
      %v501 = vadd.f32 %v500, %v456
      %v502 = vadd.f32 %v501, %v461
      %v503 = vadd.f32 %v502, %v464
      %v504 = vadd.f32 %v503, %v469
      %v505 = vadd.f32 %v504, %v472
      %v506 = vrot.slane %v505, 4
      %v507 = vadd.f32 %v505, %v506
      %v508 = vrot.slane %v507, 2
      %v509 = vadd.f32 %v507, %v508
      %v510 = vrot.slane %v509, 1
      %v511 = vadd.f32 %v509, %v510
      %v512 = vmul.f32 %v413, %v413
      %v513 = vmul.f32 %v416, %v416
      %v514 = vmul.f32 %v421, %v421
      %v515 = vmul.f32 %v424, %v424
      %v516 = vmul.f32 %v429, %v429
      %v517 = vmul.f32 %v432, %v432
      %v518 = vmul.f32 %v437, %v437
      %v519 = vmul.f32 %v440, %v440
      %v520 = vmul.f32 %v445, %v445
      %v521 = vmul.f32 %v448, %v448
      %v522 = vmul.f32 %v453, %v453
      %v523 = vmul.f32 %v456, %v456
      %v524 = vmul.f32 %v461, %v461
      %v525 = vmul.f32 %v464, %v464
      %v526 = vmul.f32 %v469, %v469
      %v527 = vmul.f32 %v472, %v472
      %v528 = vadd.f32 %v512, %v513
      %v529 = vadd.f32 %v528, %v514
      %v530 = vadd.f32 %v529, %v515
      %v531 = vadd.f32 %v530, %v516
      %v532 = vadd.f32 %v531, %v517
      %v533 = vadd.f32 %v532, %v518
      %v534 = vadd.f32 %v533, %v519
      %v535 = vadd.f32 %v534, %v520
      %v536 = vadd.f32 %v535, %v521
      %v537 = vadd.f32 %v536, %v522
      %v538 = vadd.f32 %v537, %v523
      %v539 = vadd.f32 %v538, %v524
      %v540 = vadd.f32 %v539, %v525
      %v541 = vadd.f32 %v540, %v526
      %v542 = vadd.f32 %v541, %v527
      %v543 = vrot.slane %v542, 4
      %v544 = vadd.f32 %v542, %v543
      %v545 = vrot.slane %v544, 2
      %v546 = vadd.f32 %v544, %v545
      %v547 = vrot.slane %v546, 1
      %v548 = vadd.f32 %v546, %v547
      %vm549 = vcmask 1040384
      %v550 = vsel %vm549, %v511, %v548
      %551 = vst [vmem:[%s248] sm:$0x3] %v550
      %s552 = smul.u32 16, %s20
      %p553 = scmp.lt.s32.totalorder %s19, 3
      %s554 = scalar_select %p553, %s19, 3
      %p555 = scmp.lt.s32.totalorder %s552, 15
      %s556 = scalar_select %p555, %s552, 15
      %s557 = smul.addr %s554, 16
      %s558 = sadd.s32 %s556, %s557
      %s559 = smul.addr %s558, 8
      %s560 = scalar_lea.vmem %s2, %s559
      %p561 = scmp.lt.s32.totalorder %s19, 3
      %s562 = scalar_select %p561, %s19, 3
      %p563 = scmp.lt.s32.totalorder %s20, 0
      %s564 = scalar_select %p563, %s20, 0
      %s565 = sadd.s32 %s564, %s562
      %s566 = smul.addr %s565, 2
      %s567 = scalar_lea.vmem %s3, %s566
      // Predicated region
      $region29: #{_lambda_.15} parent=27 // pred_check
        %p568 = pneg %p101
      $region30: #{_lambda_.15} parent=27 // pred_check_branch
        %570 = sbr.rel (%p568) target = $region32
      $region31: #{_lambda_.15} parent=27 // pred_region
        %s571 = smul.u32 16, %s20
      $region32: #{_lambda_.15} parent=27 // pred_fallthru
        _
      // Predicated region
      $region33: #{_lambda_.15} parent=27 // pred_check
        %p572 = pneg %p129
      $region34: #{_lambda_.15} parent=27 // pred_check_branch
        %574 = sbr.rel (%p572) target = $region36
      $region35: #{_lambda_.15} parent=27 // pred_region
        _
      $region36: #{_lambda_.15} parent=27 // pred_fallthru
        _
    $region28: #{_lambda_.15} parent=5 // pred_fallthru
      _
    %p575 = scmp.le.s32.totalorder 2, %s10
    // Predicated region
    $region37: #{_lambda_.15} parent=5 // pred_check
      %p576 = pneg %p575
    $region38: #{_lambda_.15} parent=5 // pred_check_branch
      %578 = sbr.rel (%p576) target = $region40
    $region39: #{_lambda_.15} parent=5 // pred_region
      %s579 = ssub.s32 %s10, 2
      // Predicated region
      $region41: #{_lambda_.15} parent=39 // pred_check
        %p580 = pneg %p107
      $region42: #{_lambda_.15} parent=39 // pred_check_branch
        %582 = sbr.rel (%p580) target = $region44
      $region43: #{_lambda_.15} parent=39 // pred_region
        %s583 = smul.u32 16, %s22
        %p584 = scmp.lt.s32.totalorder %s21, 3
        %s585 = scalar_select %p584, %s21, 3
        %p586 = scmp.lt.s32.totalorder %s583, 15
        %s587 = scalar_select %p586, %s583, 15
        %s588 = smul.addr %s585, 16
        %s589 = sadd.s32 %s587, %s588
        %s590 = smul.addr %s589, 8
        %s591 = scalar_lea.vmem %s2, %s590
      $region44: #{_lambda_.15} parent=39 // pred_fallthru
        _
      // Predicated region
      $region45: #{_lambda_.15} parent=39 // pred_check
        %p592 = pneg %p135
      $region46: #{_lambda_.15} parent=39 // pred_check_branch
        %594 = sbr.rel (%p592) target = $region48
      $region47: #{_lambda_.15} parent=39 // pred_region
        %p595 = scmp.lt.s32.totalorder %s21, 3
        %s596 = scalar_select %p595, %s21, 3
        %p597 = scmp.lt.s32.totalorder %s22, 0
        %s598 = scalar_select %p597, %s22, 0
        %s599 = sadd.s32 %s598, %s596
        %s600 = smul.addr %s599, 2
        %s601 = scalar_lea.vmem %s3, %s600
      $region48: #{_lambda_.15} parent=39 // pred_fallthru
        _
    $region40: #{_lambda_.15} parent=5 // pred_fallthru
      _
  $region6: #{_lambda_.15} parent=0 // loop_footer
    %s14 = sadd.s32 1, %s10
  $region7: #{_lambda_.15} parent=0 // loop_footer_branch
    %9 = sbr.rel target = $region3
  $region8: #{_lambda_.15} parent=0 // loop_exit
    _

// kernel: _lambda_.16
$region0: #{_lambda_.16}
  #allocation0 [shape = 'u32[]', space=smem, size = 0x4, offset = 0x4, fixed_abs, tag = 'smem constant byte address 0x4 - core index']
  #allocation1 [shape = 'u32[144,128]{1,0:T(1,128)}', space=vmem, size = 0x12000, scoped, tag = 'internal scratch']
  %s0 = inlined_call_operand.vmem [shape: f32[4,128,128], index: 0, kind: input, shape index: {}]
  %s1 = inlined_call_operand.vmem [shape: f32[1,128], index: 1, kind: input, shape index: {}]
  %s2 = inlined_call_operand.vmem [shape: f32[1,128], index: 2, kind: input, shape index: {}]
  %s3 = inlined_call_operand.vmem [shape: bf16[4,128,128], index: 3, kind: output, shape index: {}]
  %s4 = sld [smem:[#allocation0]]
  $region45: #{_lambda_.16} parent=0
    _
  %s6 = ssub.s32 1, %s4
  %s7 = scalar_select 0, %s6, %s4
  loop: start=0, step=1, limit=6
  $region2: #{_lambda_.16} parent=0 // loop_pre_header
    _
  $region3: #{_lambda_.16} parent=0 // loop_header
    %s9 = sphi 0, %s13
    %p10 = scmp.ge.s32.totalorder %s9, 6
    %s16 = sphi 0, %s28
    %s17 = sphi 0, %s24
    %s18 = sphi 0, %s16
    %s19 = sphi 0, %s17
    %s20 = sphi 0, %s18
    %s21 = sphi 0, %s19
    %s33 = sphi 0, %s35
    %s36 = sphi 0, %s33
    %s37 = sphi 0, %s36
    %s53 = sphi 0, %s37
    %s57 = sphi 0, %s57
    %s59 = sphi 0, %s57
    %s60 = sphi 0, %s59
    %s74 = sphi 0, %s60
    %s78 = sphi 0, %s78
    %s80 = sphi 0, %s78
    %s81 = sphi 0, %s80
    %s95 = sphi 0, %s81
    %s103 = sphi 0, %s105
    %s106 = sphi 0, %s103
    %s107 = sphi 0, %s106
    %s123 = sphi 0, %s107
  $region4: #{_lambda_.16} parent=0 // loop_header_branch
    %12 = sbr.rel (%p10) target = $region8
  $region5: #{_lambda_.16} parent=0 // loop_body
    %s14 = ssub.s32 %s9, 1
    %s15 = ssub.s32 %s9, 2
    %s22 = sadd.s32 1, %s17
    %p23 = scmp.ge.s32.totalorder %s22, 1
    %s24 = scalar_select %p23, 0, %s22
    %s25 = sadd.s32 1, %s16
    %s26 = scalar_select %p23, %s25, %s16
    %p27 = scmp.ge.s32.totalorder %s26, 4
    %s28 = scalar_select %p27, 0, %s26
    %s29 = ssub.s32 %s16, %s28
    %s30 = ssub.s32 %s17, %s24
    %s31 = sor.u32 %s29, %s30
    %p32 = scmp.eq.s32.totalorder %s31, 0
    %s34 = sadd.s32 %s33, 1
    %s35 = scalar_select %p32, %s33, %s34
    %p38 = pneg %p32
    %p39 = scmp.eq.s32.totalorder %s9, 3
    %p40 = por %p38, %p39
    %p41 = scmp.ne.s32.totalorder %s33, %s36
    %p42 = scmp.eq.s32.totalorder %s9, 0
    %p43 = por %p41, %p42
    %p44 = scmp.ne.s32.totalorder %s33, %s36
    %p45 = scmp.eq.s32.totalorder %s14, 3
    %p46 = por %p44, %p45
    %p47 = scmp.ne.s32.totalorder %s36, %s37
    %p48 = scmp.eq.s32.totalorder %s14, 0
    %p49 = por %p47, %p48
    %p50 = scmp.ne.s32.totalorder %s36, %s37
    %p51 = scmp.eq.s32.totalorder %s15, 3
    %p52 = por %p50, %p51
    %p54 = scmp.ne.s32.totalorder %s37, %s53
    %p55 = scmp.eq.s32.totalorder %s15, 0
    %p56 = por %p54, %p55
    %s58 = sadd.s32 %s57, 1
    %p61 = scmp.eq.s32.totalorder %s9, 3
    %p62 = scmp.ne.s32.totalorder %s57, %s59
    %p63 = scmp.eq.s32.totalorder %s9, 0
    %p64 = por %p62, %p63
    %p65 = scmp.ne.s32.totalorder %s57, %s59
    %p66 = scmp.eq.s32.totalorder %s14, 3
    %p67 = por %p65, %p66
    %p68 = scmp.ne.s32.totalorder %s59, %s60
    %p69 = scmp.eq.s32.totalorder %s14, 0
    %p70 = por %p68, %p69
    %p71 = scmp.ne.s32.totalorder %s59, %s60
    %p72 = scmp.eq.s32.totalorder %s15, 3
    %p73 = por %p71, %p72
    %p75 = scmp.ne.s32.totalorder %s60, %s74
    %p76 = scmp.eq.s32.totalorder %s15, 0
    %p77 = por %p75, %p76
    %s79 = sadd.s32 %s78, 1
    %p82 = scmp.eq.s32.totalorder %s9, 3
    %p83 = scmp.ne.s32.totalorder %s78, %s80
    %p84 = scmp.eq.s32.totalorder %s9, 0
    %p85 = por %p83, %p84
    %p86 = scmp.ne.s32.totalorder %s78, %s80
    %p87 = scmp.eq.s32.totalorder %s14, 3
    %p88 = por %p86, %p87
    %p89 = scmp.ne.s32.totalorder %s80, %s81
    %p90 = scmp.eq.s32.totalorder %s14, 0
    %p91 = por %p89, %p90
    %p92 = scmp.ne.s32.totalorder %s80, %s81
    %p93 = scmp.eq.s32.totalorder %s15, 3
    %p94 = por %p92, %p93
    %p96 = scmp.ne.s32.totalorder %s81, %s95
    %p97 = scmp.eq.s32.totalorder %s15, 0
    %p98 = por %p96, %p97
    %s99 = ssub.s32 %s16, %s28
    %s100 = ssub.s32 %s17, %s24
    %s101 = sor.u32 %s99, %s100
    %p102 = scmp.eq.s32.totalorder %s101, 0
    %s104 = sadd.s32 %s103, 1
    %s105 = scalar_select %p102, %s103, %s104
    %p108 = pneg %p102
    %p109 = scmp.eq.s32.totalorder %s9, 3
    %p110 = por %p108, %p109
    %p111 = scmp.ne.s32.totalorder %s103, %s106
    %p112 = scmp.eq.s32.totalorder %s9, 0
    %p113 = por %p111, %p112
    %p114 = scmp.ne.s32.totalorder %s103, %s106
    %p115 = scmp.eq.s32.totalorder %s14, 3
    %p116 = por %p114, %p115
    %p117 = scmp.ne.s32.totalorder %s106, %s107
    %p118 = scmp.eq.s32.totalorder %s14, 0
    %p119 = por %p117, %p118
    %p120 = scmp.ne.s32.totalorder %s106, %s107
    %p121 = scmp.eq.s32.totalorder %s15, 3
    %p122 = por %p120, %p121
    %p124 = scmp.ne.s32.totalorder %s107, %s123
    %p125 = scmp.eq.s32.totalorder %s15, 0
    %p126 = por %p124, %p125
    %p127 = scmp.le.s32.totalorder 1, %s9
    %p128 = scmp.lt.s32.totalorder %s9, 5
    %p129 = pnand %p127, %p128
    %p130 = pneg %p129
    // Predicated region
    $region9: #{_lambda_.16} parent=5 // pred_check
      _
    $region10: #{_lambda_.16} parent=5 // pred_check_branch
      %132 = sbr.rel (%p129) target = $region12
    $region11: #{_lambda_.16} parent=5 // pred_region
      %s133 = ssub.s32 %s9, 1
      // Predicated region
      $region13: #{_lambda_.16} parent=11 // pred_check
        %p134 = pneg %p70
      $region14: #{_lambda_.16} parent=11 // pred_check_branch
        %136 = sbr.rel (%p134) target = $region16
      $region15: #{_lambda_.16} parent=11 // pred_region
        _
      $region16: #{_lambda_.16} parent=11 // pred_fallthru
        _
      // Predicated region
      $region17: #{_lambda_.16} parent=11 // pred_check
        %p137 = pneg %p91
      $region18: #{_lambda_.16} parent=11 // pred_check_branch
        %139 = sbr.rel (%p137) target = $region20
      $region19: #{_lambda_.16} parent=11 // pred_region
        _
      $region20: #{_lambda_.16} parent=11 // pred_fallthru
        _
    $region12: #{_lambda_.16} parent=5 // pred_fallthru
      _
    %p140 = scmp.lt.s32.totalorder %s9, 4
    // Predicated region
    $region21: #{_lambda_.16} parent=5 // pred_check
      %p141 = pneg %p140
    $region22: #{_lambda_.16} parent=5 // pred_check_branch
      %143 = sbr.rel (%p141) target = $region24
    $region23: #{_lambda_.16} parent=5 // pred_region
      // Predicated region
      $region25: #{_lambda_.16} parent=23 // pred_check
        %p144 = pneg %p43
      $region26: #{_lambda_.16} parent=23 // pred_check_branch
        %146 = sbr.rel (%p144) target = $region28
      $region27: #{_lambda_.16} parent=23 // pred_region
        %s147 = smul.u32 16, %s17
        %p148 = scmp.lt.s32.totalorder %s16, 3
        %s149 = scalar_select %p148, %s16, 3
        %p150 = scmp.lt.s32.totalorder %s147, 15
        %s151 = scalar_select %p150, %s147, 15
        %s152 = smul.addr %s149, 16
        %s153 = sadd.s32 %s151, %s152
        %s154 = smul.addr %s153, 8
        %s155 = scalar_lea.vmem %s0, %s154
        %s156 = smul.u32 16, %s17
      $region28: #{_lambda_.16} parent=23 // pred_fallthru
        _
    $region24: #{_lambda_.16} parent=5 // pred_fallthru
      _
    %p157 = scmp.le.s32.totalorder 1, %s9
    %p158 = scmp.lt.s32.totalorder %s9, 5
    %p159 = pnand %p157, %p158
    %p160 = pneg %p159
    // Predicated region
    $region29: #{_lambda_.16} parent=5 // pred_check
      _
    $region30: #{_lambda_.16} parent=5 // pred_check_branch
      %162 = sbr.rel (%p159) target = $region32
    $region31: #{_lambda_.16} parent=5 // pred_region
      %s163 = ssub.s32 %s9, 1
      %s164 = smul.u32 16, %s19
      %p165 = scmp.lt.s32.totalorder %s18, 3
      %s166 = scalar_select %p165, %s18, 3
      %p167 = scmp.lt.s32.totalorder %s164, 15
      %s168 = scalar_select %p167, %s164, 15
      %s169 = smul.addr %s166, 16
      %s170 = sadd.s32 %s168, %s169
      %s171 = smul.addr %s170, 8
      %s172 = scalar_lea.vmem %s0, %s171
      %p173 = pneg %p49
      %p174 = pneg %p46
      %p175 = pneg %p70
      %p176 = pneg %p67
      %p177 = pneg %p91
      %p178 = pneg %p88
      %p179 = pneg %p119
      %p180 = pneg %p116
      %s181 = smul.u32 16, %s19
      %p182 = scmp.lt.s32.totalorder %s18, 3
      %s183 = scalar_select %p182, %s18, 3
      %p184 = scmp.lt.s32.totalorder %s181, 15
      %s185 = scalar_select %p184, %s181, 15
      %s186 = smul.addr %s183, 16
      %s187 = sadd.s32 %s185, %s186
      %s188 = smul.addr %s187, 4
      %s189 = scalar_lea.vmem %s3, %s188
      %s190 = smul.u32 16, %s19
      %p191 = scmp.lt.s32.totalorder %s18, 3
      %s192 = scalar_select %p191, %s18, 3
      %p193 = scmp.lt.s32.totalorder %s190, 15
      %s194 = scalar_select %p193, %s190, 15
      %s195 = smul.addr %s192, 16
      %s196 = sadd.s32 %s194, %s195
      %s197 = smul.addr %s196, 8
      %s198 = scalar_lea.vmem %s0, %s197
      %s199 = smul.u32 16, %s19
      %s200 = smul.u32 16, %s19
      %p201 = scmp.lt.s32.totalorder %s18, 3
      %s202 = scalar_select %p201, %s18, 3
      %p203 = scmp.lt.s32.totalorder %s200, 15
      %s204 = scalar_select %p203, %s200, 15
      %s205 = smul.addr %s202, 16
      %s206 = sadd.s32 %s204, %s205
      %s207 = smul.addr %s206, 4
      %s208 = scalar_lea.vmem %s3, %s207
      %s209 = smul.u32 16, %s19
      %v210 = vld [vmem:[%s198] sm:$0xff]
      %v211 = vld [vmem:[%s198 + $0x8] sm:$0xff]
      %v212 = vld [vmem:[%s198 + $0x10] sm:$0xff]
      %v213 = vld [vmem:[%s198 + $0x18] sm:$0xff]
      %v214 = vld [vmem:[%s198 + $0x20] sm:$0xff]
      %v215 = vld [vmem:[%s198 + $0x28] sm:$0xff]
      %v216 = vld [vmem:[%s198 + $0x30] sm:$0xff]
      %v217 = vld [vmem:[%s198 + $0x38] sm:$0xff]
      %v218 = vld [vmem:[%s198 + $0x40] sm:$0xff]
      %v219 = vld [vmem:[%s198 + $0x48] sm:$0xff]
      %v220 = vld [vmem:[%s198 + $0x50] sm:$0xff]
      %v221 = vld [vmem:[%s198 + $0x58] sm:$0xff]
      %v222 = vld [vmem:[%s198 + $0x60] sm:$0xff]
      %v223 = vld [vmem:[%s198 + $0x68] sm:$0xff]
      %v224 = vld [vmem:[%s198 + $0x70] sm:$0xff]
      %v225 = vld [vmem:[%s198 + $0x78] sm:$0xff]
      %v226 = vld [vmem:[%s1] sm:$0x1]
      %v228 = vlaneseq
      %v229 = vshrl.u32 %v228, 7
      %v230 = vsub.s32 0, %v229
      %v231 = vrot.slane %v226, %v230
      %v233 = vmul.f32 %v210, %v231
      %v234 = vmul.f32 %v211, %v231
      %v235 = vmul.f32 %v212, %v231
      %v236 = vmul.f32 %v213, %v231
      %v237 = vmul.f32 %v214, %v231
      %v238 = vmul.f32 %v215, %v231
      %v239 = vmul.f32 %v216, %v231
      %v240 = vmul.f32 %v217, %v231
      %v241 = vmul.f32 %v218, %v231
      %v242 = vmul.f32 %v219, %v231
      %v243 = vmul.f32 %v220, %v231
      %v244 = vmul.f32 %v221, %v231
      %v245 = vmul.f32 %v222, %v231
      %v246 = vmul.f32 %v223, %v231
      %v247 = vmul.f32 %v224, %v231
      %v248 = vmul.f32 %v225, %v231
      %v249 = vld [vmem:[%s2] sm:$0x1]
      %v251 = vlaneseq
      %v252 = vshrl.u32 %v251, 7
      %v253 = vsub.s32 0, %v252
      %v254 = vrot.slane %v249, %v253
      %v256 = vadd.f32 %v233, %v254
      %v257 = vadd.f32 %v234, %v254
      %v258 = vadd.f32 %v235, %v254
      %v259 = vadd.f32 %v236, %v254
      %v260 = vadd.f32 %v237, %v254
      %v261 = vadd.f32 %v238, %v254
      %v262 = vadd.f32 %v239, %v254
      %v263 = vadd.f32 %v240, %v254
      %v264 = vadd.f32 %v241, %v254
      %v265 = vadd.f32 %v242, %v254
      %v266 = vadd.f32 %v243, %v254
      %v267 = vadd.f32 %v244, %v254
      %v268 = vadd.f32 %v245, %v254
      %v269 = vadd.f32 %v246, %v254
      %v270 = vadd.f32 %v247, %v254
      %v271 = vadd.f32 %v248, %v254
      %v272 = vmax.f32 %v256, 0.0
      %v273 = vmax.f32 %v257, 0.0
      %v274 = vmax.f32 %v258, 0.0
      %v275 = vmax.f32 %v259, 0.0
      %v276 = vmax.f32 %v260, 0.0
      %v277 = vmax.f32 %v261, 0.0
      %v278 = vmax.f32 %v262, 0.0
      %v279 = vmax.f32 %v263, 0.0
      %v280 = vmax.f32 %v264, 0.0
      %v281 = vmax.f32 %v265, 0.0
      %v282 = vmax.f32 %v266, 0.0
      %v283 = vmax.f32 %v267, 0.0
      %v284 = vmax.f32 %v268, 0.0
      %v285 = vmax.f32 %v269, 0.0
      %v286 = vmax.f32 %v270, 0.0
      %v287 = vmax.f32 %v271, 0.0
      %v288 = vpack.c.bf16 %v273, %v272
      %v289 = vpack.c.bf16 %v275, %v274
      %v290 = vpack.c.bf16 %v277, %v276
      %v291 = vpack.c.bf16 %v279, %v278
      %v292 = vpack.c.bf16 %v281, %v280
      %v293 = vpack.c.bf16 %v283, %v282
      %v294 = vpack.c.bf16 %v285, %v284
      %v295 = vpack.c.bf16 %v287, %v286
      %v304 = vunpack.c.l.b16 %v288
      %v305 = vunpack.c.h.b16 %v288
      %v306 = vunpack.c.l.b16 %v289
      %v307 = vunpack.c.h.b16 %v289
      %v308 = vunpack.c.l.b16 %v290
      %v309 = vunpack.c.h.b16 %v290
      %v310 = vunpack.c.l.b16 %v291
      %v311 = vunpack.c.h.b16 %v291
      %v312 = vunpack.c.l.b16 %v292
      %v313 = vunpack.c.h.b16 %v292
      %v314 = vunpack.c.l.b16 %v293
      %v315 = vunpack.c.h.b16 %v293
      %v316 = vunpack.c.l.b16 %v294
      %v317 = vunpack.c.h.b16 %v294
      %v318 = vunpack.c.l.b16 %v295
      %v319 = vunpack.c.h.b16 %v295
      %v320 = vpack.c.b16 %v304, %v304
      %v321 = vpack.c.b16 %v305, %v305
      %v322 = vpack.c.b16 %v306, %v306
      %v323 = vpack.c.b16 %v307, %v307
      %v324 = vpack.c.b16 %v308, %v308
      %v325 = vpack.c.b16 %v309, %v309
      %v326 = vpack.c.b16 %v310, %v310
      %v327 = vpack.c.b16 %v311, %v311
      %v328 = vpack.c.b16 %v312, %v312
      %v329 = vpack.c.b16 %v313, %v313
      %v330 = vpack.c.b16 %v314, %v314
      %v331 = vpack.c.b16 %v315, %v315
      %v332 = vpack.c.b16 %v316, %v316
      %v333 = vpack.c.b16 %v317, %v317
      %v334 = vpack.c.b16 %v318, %v318
      %v335 = vpack.c.b16 %v319, %v319
      %352 = vst [vmem:[%s208] sm:$0xf] %v320
      %353 = vst [vmem:[%s208 + $0x4] sm:$0xf] %v321
      %354 = vst [vmem:[%s208 + $0x8] sm:$0xf] %v322
      %355 = vst [vmem:[%s208 + $0xc] sm:$0xf] %v323
      %356 = vst [vmem:[%s208 + $0x10] sm:$0xf] %v324
      %357 = vst [vmem:[%s208 + $0x14] sm:$0xf] %v325
      %358 = vst [vmem:[%s208 + $0x18] sm:$0xf] %v326
      %359 = vst [vmem:[%s208 + $0x1c] sm:$0xf] %v327
      %360 = vst [vmem:[%s208 + $0x20] sm:$0xf] %v328
      %361 = vst [vmem:[%s208 + $0x24] sm:$0xf] %v329
      %362 = vst [vmem:[%s208 + $0x28] sm:$0xf] %v330
      %363 = vst [vmem:[%s208 + $0x2c] sm:$0xf] %v331
      %364 = vst [vmem:[%s208 + $0x30] sm:$0xf] %v332
      %365 = vst [vmem:[%s208 + $0x34] sm:$0xf] %v333
      %366 = vst [vmem:[%s208 + $0x38] sm:$0xf] %v334
      %367 = vst [vmem:[%s208 + $0x3c] sm:$0xf] %v335
      %s368 = smul.u32 16, %s19
      %p369 = scmp.lt.s32.totalorder %s18, 3
      %s370 = scalar_select %p369, %s18, 3
      %p371 = scmp.lt.s32.totalorder %s368, 15
      %s372 = scalar_select %p371, %s368, 15
      %s373 = smul.addr %s370, 16
      %s374 = sadd.s32 %s372, %s373
      %s375 = smul.addr %s374, 4
      %s376 = scalar_lea.vmem %s3, %s375
      // Predicated region
      $region33: #{_lambda_.16} parent=31 // pred_check
        %p377 = pneg %p116
      $region34: #{_lambda_.16} parent=31 // pred_check_branch
        %379 = sbr.rel (%p377) target = $region36
      $region35: #{_lambda_.16} parent=31 // pred_region
        %s380 = smul.u32 16, %s19
      $region36: #{_lambda_.16} parent=31 // pred_fallthru
        _
    $region32: #{_lambda_.16} parent=5 // pred_fallthru
      _
    %p381 = scmp.le.s32.totalorder 2, %s9
    // Predicated region
    $region37: #{_lambda_.16} parent=5 // pred_check
      %p382 = pneg %p381
    $region38: #{_lambda_.16} parent=5 // pred_check_branch
      %384 = sbr.rel (%p382) target = $region40
    $region39: #{_lambda_.16} parent=5 // pred_region
      %s385 = ssub.s32 %s9, 2
      // Predicated region
      $region41: #{_lambda_.16} parent=39 // pred_check
        %p386 = pneg %p122
      $region42: #{_lambda_.16} parent=39 // pred_check_branch
        %388 = sbr.rel (%p386) target = $region44
      $region43: #{_lambda_.16} parent=39 // pred_region
        %s389 = smul.u32 16, %s21
        %p390 = scmp.lt.s32.totalorder %s20, 3
        %s391 = scalar_select %p390, %s20, 3
        %p392 = scmp.lt.s32.totalorder %s389, 15
        %s393 = scalar_select %p392, %s389, 15
        %s394 = smul.addr %s391, 16
        %s395 = sadd.s32 %s393, %s394
        %s396 = smul.addr %s395, 4
        %s397 = scalar_lea.vmem %s3, %s396
      $region44: #{_lambda_.16} parent=39 // pred_fallthru
        _
    $region40: #{_lambda_.16} parent=5 // pred_fallthru
      _
  $region6: #{_lambda_.16} parent=0 // loop_footer
    %s13 = sadd.s32 1, %s9
  $region7: #{_lambda_.16} parent=0 // loop_footer_branch
    %8 = sbr.rel target = $region3
  $region8: #{_lambda_.16} parent=0 // loop_exit
    _

// kernel: _lambda_.17
$region0: #{_lambda_.17}
  #allocation0 [shape = 'u32[]', space=smem, size = 0x4, offset = 0x4, fixed_abs, tag = 'smem constant byte address 0x4 - core index']
  #allocation1 [shape = 'u32[144,128]{1,0:T(1,128)}', space=vmem, size = 0x12000, scoped, tag = 'internal scratch']
  %s0 = inlined_call_operand.vmem [shape: bf16[4,512,128], index: 0, kind: input, shape index: {}]
  %s1 = inlined_call_operand.vmem [shape: bf16[4,128,128], index: 1, kind: input, shape index: {}]
  %s2 = inlined_call_operand.vmem [shape: f32[4,512,128], index: 2, kind: output, shape index: {}]
  %s3 = sld [smem:[#allocation0]]
  $region41: #{_lambda_.17} parent=0
    _
  %s5 = ssub.s32 1, %s3
  %s6 = scalar_select 0, %s5, %s3
  loop: start=0, step=1, limit=6
  $region2: #{_lambda_.17} parent=0 // loop_pre_header
    _
  $region3: #{_lambda_.17} parent=0 // loop_header
    %s8 = sphi 0, %s12
    %p9 = scmp.ge.s32.totalorder %s8, 6
    %s15 = sphi 0, %s27
    %s16 = sphi 0, %s23
    %s17 = sphi 0, %s15
    %s18 = sphi 0, %s16
    %s19 = sphi 0, %s17
    %s20 = sphi 0, %s18
    %s32 = sphi 0, %s34
    %s35 = sphi 0, %s32
    %s36 = sphi 0, %s35
    %s52 = sphi 0, %s36
    %s58 = sphi 0, %s60
    %s61 = sphi 0, %s58
    %s62 = sphi 0, %s61
    %s78 = sphi 0, %s62
    %s86 = sphi 0, %s88
    %s89 = sphi 0, %s86
    %s90 = sphi 0, %s89
    %s106 = sphi 0, %s90
  $region4: #{_lambda_.17} parent=0 // loop_header_branch
    %11 = sbr.rel (%p9) target = $region8
  $region5: #{_lambda_.17} parent=0 // loop_body
    %s13 = ssub.s32 %s8, 1
    %s14 = ssub.s32 %s8, 2
    %s21 = sadd.s32 1, %s16
    %p22 = scmp.ge.s32.totalorder %s21, 1
    %s23 = scalar_select %p22, 0, %s21
    %s24 = sadd.s32 1, %s15
    %s25 = scalar_select %p22, %s24, %s15
    %p26 = scmp.ge.s32.totalorder %s25, 4
    %s27 = scalar_select %p26, 0, %s25
    %s28 = ssub.s32 %s15, %s27
    %s29 = ssub.s32 %s16, %s23
    %s30 = sor.u32 %s28, %s29
    %p31 = scmp.eq.s32.totalorder %s30, 0
    %s33 = sadd.s32 %s32, 1
    %s34 = scalar_select %p31, %s32, %s33
    %p37 = pneg %p31
    %p38 = scmp.eq.s32.totalorder %s8, 3
    %p39 = por %p37, %p38
    %p40 = scmp.ne.s32.totalorder %s32, %s35
    %p41 = scmp.eq.s32.totalorder %s8, 0
    %p42 = por %p40, %p41
    %p43 = scmp.ne.s32.totalorder %s32, %s35
    %p44 = scmp.eq.s32.totalorder %s13, 3
    %p45 = por %p43, %p44
    %p46 = scmp.ne.s32.totalorder %s35, %s36
    %p47 = scmp.eq.s32.totalorder %s13, 0
    %p48 = por %p46, %p47
    %p49 = scmp.ne.s32.totalorder %s35, %s36
    %p50 = scmp.eq.s32.totalorder %s14, 3
    %p51 = por %p49, %p50
    %p53 = scmp.ne.s32.totalorder %s36, %s52
    %p54 = scmp.eq.s32.totalorder %s14, 0
    %p55 = por %p53, %p54
    %s56 = ssub.s32 %s15, %s27
    %p57 = scmp.eq.s32.totalorder %s56, 0
    %s59 = sadd.s32 %s58, 1
    %s60 = scalar_select %p57, %s58, %s59
    %p63 = pneg %p57
    %p64 = scmp.eq.s32.totalorder %s8, 3
    %p65 = por %p63, %p64
    %p66 = scmp.ne.s32.totalorder %s58, %s61
    %p67 = scmp.eq.s32.totalorder %s8, 0
    %p68 = por %p66, %p67
    %p69 = scmp.ne.s32.totalorder %s58, %s61
    %p70 = scmp.eq.s32.totalorder %s13, 3
    %p71 = por %p69, %p70
    %p72 = scmp.ne.s32.totalorder %s61, %s62
    %p73 = scmp.eq.s32.totalorder %s13, 0
    %p74 = por %p72, %p73
    %p75 = scmp.ne.s32.totalorder %s61, %s62
    %p76 = scmp.eq.s32.totalorder %s14, 3
    %p77 = por %p75, %p76
    %p79 = scmp.ne.s32.totalorder %s62, %s78
    %p80 = scmp.eq.s32.totalorder %s14, 0
    %p81 = por %p79, %p80
    %s82 = ssub.s32 %s15, %s27
    %s83 = ssub.s32 %s16, %s23
    %s84 = sor.u32 %s82, %s83
    %p85 = scmp.eq.s32.totalorder %s84, 0
    %s87 = sadd.s32 %s86, 1
    %s88 = scalar_select %p85, %s86, %s87
    %p91 = pneg %p85
    %p92 = scmp.eq.s32.totalorder %s8, 3
    %p93 = por %p91, %p92
    %p94 = scmp.ne.s32.totalorder %s86, %s89
    %p95 = scmp.eq.s32.totalorder %s8, 0
    %p96 = por %p94, %p95
    %p97 = scmp.ne.s32.totalorder %s86, %s89
    %p98 = scmp.eq.s32.totalorder %s13, 3
    %p99 = por %p97, %p98
    %p100 = scmp.ne.s32.totalorder %s89, %s90
    %p101 = scmp.eq.s32.totalorder %s13, 0
    %p102 = por %p100, %p101
    %p103 = scmp.ne.s32.totalorder %s89, %s90
    %p104 = scmp.eq.s32.totalorder %s14, 3
    %p105 = por %p103, %p104
    %p107 = scmp.ne.s32.totalorder %s90, %s106
    %p108 = scmp.eq.s32.totalorder %s14, 0
    %p109 = por %p107, %p108
    %p110 = scmp.le.s32.totalorder 1, %s8
    %p111 = scmp.lt.s32.totalorder %s8, 5
    %p112 = pnand %p110, %p111
    %p113 = pneg %p112
    // Predicated region
    $region9: #{_lambda_.17} parent=5 // pred_check
      _
    $region10: #{_lambda_.17} parent=5 // pred_check_branch
      %115 = sbr.rel (%p112) target = $region12
    $region11: #{_lambda_.17} parent=5 // pred_region
      %s116 = ssub.s32 %s8, 1
    $region12: #{_lambda_.17} parent=5 // pred_fallthru
      _
    %p117 = scmp.lt.s32.totalorder %s8, 4
    // Predicated region
    $region13: #{_lambda_.17} parent=5 // pred_check
      %p118 = pneg %p117
    $region14: #{_lambda_.17} parent=5 // pred_check_branch
      %120 = sbr.rel (%p118) target = $region16
    $region15: #{_lambda_.17} parent=5 // pred_region
      // Predicated region
      $region17: #{_lambda_.17} parent=15 // pred_check
        %p121 = pneg %p42
      $region18: #{_lambda_.17} parent=15 // pred_check_branch
        %123 = sbr.rel (%p121) target = $region20
      $region19: #{_lambda_.17} parent=15 // pred_region
        %s124 = smul.u32 64, %s16
        %p125 = scmp.lt.s32.totalorder %s15, 3
        %s126 = scalar_select %p125, %s15, 3
        %p127 = scmp.lt.s32.totalorder %s124, 63
        %s128 = scalar_select %p127, %s124, 63
        %s129 = smul.addr %s126, 64
        %s130 = sadd.s32 %s128, %s129
        %s131 = smul.addr %s130, 4
        %s132 = scalar_lea.vmem %s0, %s131
        %s133 = smul.u32 64, %s16
      $region20: #{_lambda_.17} parent=15 // pred_fallthru
        _
      // Predicated region
      $region21: #{_lambda_.17} parent=15 // pred_check
        %p134 = pneg %p68
      $region22: #{_lambda_.17} parent=15 // pred_check_branch
        %136 = sbr.rel (%p134) target = $region24
      $region23: #{_lambda_.17} parent=15 // pred_region
        %p137 = scmp.lt.s32.totalorder %s15, 3
        %s138 = scalar_select %p137, %s15, 3
        %s139 = smul.addr %s138, 16
        %s140 = smul.addr %s139, 4
        %s141 = scalar_lea.vmem %s1, %s140
      $region24: #{_lambda_.17} parent=15 // pred_fallthru
        _
    $region16: #{_lambda_.17} parent=5 // pred_fallthru
      _
    %p142 = scmp.le.s32.totalorder 1, %s8
    %p143 = scmp.lt.s32.totalorder %s8, 5
    %p144 = pnand %p142, %p143
    %p145 = pneg %p144
    // Predicated region
    $region25: #{_lambda_.17} parent=5 // pred_check
      _
    $region26: #{_lambda_.17} parent=5 // pred_check_branch
      %147 = sbr.rel (%p144) target = $region28
    $region27: #{_lambda_.17} parent=5 // pred_region
      %s148 = ssub.s32 %s8, 1
      %s149 = smul.u32 64, %s18
      %p150 = scmp.lt.s32.totalorder %s17, 3
      %s151 = scalar_select %p150, %s17, 3
      %p152 = scmp.lt.s32.totalorder %s149, 63
      %s153 = scalar_select %p152, %s149, 63
      %s154 = smul.addr %s151, 64
      %s155 = sadd.s32 %s153, %s154
      %s156 = smul.addr %s155, 4
      %s157 = scalar_lea.vmem %s0, %s156
      %p158 = pneg %p48
      %p159 = pneg %p45
      %p160 = scmp.lt.s32.totalorder %s17, 3
      %s161 = scalar_select %p160, %s17, 3
      %s162 = smul.addr %s161, 16
      %s163 = smul.addr %s162, 4
      %s164 = scalar_lea.vmem %s1, %s163
      %p165 = pneg %p74
      %p166 = pneg %p71
      %p167 = pneg %p102
      %p168 = pneg %p99
      %s169 = smul.u32 64, %s18
      %p170 = scmp.lt.s32.totalorder %s17, 3
      %s171 = scalar_select %p170, %s17, 3
      %p172 = scmp.lt.s32.totalorder %s169, 63
      %s173 = scalar_select %p172, %s169, 63
      %s174 = smul.addr %s171, 64
      %s175 = sadd.s32 %s173, %s174
      %s176 = smul.addr %s175, 8
      %s177 = scalar_lea.vmem %s2, %s176
      %s178 = smul.u32 64, %s18
      %p179 = scmp.lt.s32.totalorder %s17, 3
      %s180 = scalar_select %p179, %s17, 3
      %p181 = scmp.lt.s32.totalorder %s178, 63
      %s182 = scalar_select %p181, %s178, 63
      %s183 = smul.addr %s180, 64
      %s184 = sadd.s32 %s182, %s183
      %s185 = smul.addr %s184, 4
      %s186 = scalar_lea.vmem %s0, %s185
      %s187 = smul.u32 64, %s18
      %p188 = scmp.lt.s32.totalorder %s17, 3
      %s189 = scalar_select %p188, %s17, 3
      %s190 = smul.addr %s189, 16
      %s191 = smul.addr %s190, 4
      %s192 = scalar_lea.vmem %s1, %s191
      %s193 = smul.u32 64, %s18
      %p194 = scmp.lt.s32.totalorder %s17, 3
      %s195 = scalar_select %p194, %s17, 3
      %p196 = scmp.lt.s32.totalorder %s193, 63
      %s197 = scalar_select %p196, %s193, 63
      %s198 = smul.addr %s195, 64
      %s199 = sadd.s32 %s197, %s198
      %s200 = smul.addr %s199, 8
      %s201 = scalar_lea.vmem %s2, %s200
      %s202 = smul.u32 64, %s18
      %v204 = vld [vmem:[%s186] sm:$0xf]
      %v205 = vld [vmem:[%s186 + $0x4] sm:$0xf]
      %v206 = vld [vmem:[%s186 + $0x8] sm:$0xf]
      %v207 = vld [vmem:[%s186 + $0xc] sm:$0xf]
      %v208 = vld [vmem:[%s186 + $0x10] sm:$0xf]
      %v209 = vld [vmem:[%s186 + $0x14] sm:$0xf]
      %v210 = vld [vmem:[%s186 + $0x18] sm:$0xf]
      %v211 = vld [vmem:[%s186 + $0x1c] sm:$0xf]
      %v212 = vld [vmem:[%s186 + $0x20] sm:$0xf]
      %v213 = vld [vmem:[%s186 + $0x24] sm:$0xf]
      %v214 = vld [vmem:[%s186 + $0x28] sm:$0xf]
      %v215 = vld [vmem:[%s186 + $0x2c] sm:$0xf]
      %v216 = vld [vmem:[%s186 + $0x30] sm:$0xf]
      %v217 = vld [vmem:[%s186 + $0x34] sm:$0xf]
      %v218 = vld [vmem:[%s186 + $0x38] sm:$0xf]
      %v219 = vld [vmem:[%s186 + $0x3c] sm:$0xf]
      %v220 = vld [vmem:[%s186 + $0x40] sm:$0xf]
      %v221 = vld [vmem:[%s186 + $0x44] sm:$0xf]
      %v222 = vld [vmem:[%s186 + $0x48] sm:$0xf]
      %v223 = vld [vmem:[%s186 + $0x4c] sm:$0xf]
      %v224 = vld [vmem:[%s186 + $0x50] sm:$0xf]
      %v225 = vld [vmem:[%s186 + $0x54] sm:$0xf]
      %v226 = vld [vmem:[%s186 + $0x58] sm:$0xf]
      %v227 = vld [vmem:[%s186 + $0x5c] sm:$0xf]
      %v228 = vld [vmem:[%s186 + $0x60] sm:$0xf]
      %v229 = vld [vmem:[%s186 + $0x64] sm:$0xf]
      %v230 = vld [vmem:[%s186 + $0x68] sm:$0xf]
      %v231 = vld [vmem:[%s186 + $0x6c] sm:$0xf]
      %v232 = vld [vmem:[%s186 + $0x70] sm:$0xf]
      %v233 = vld [vmem:[%s186 + $0x74] sm:$0xf]
      %v234 = vld [vmem:[%s186 + $0x78] sm:$0xf]
      %v235 = vld [vmem:[%s186 + $0x7c] sm:$0xf]
      %v236 = vld [vmem:[%s186 + $0x80] sm:$0xf]
      %v237 = vld [vmem:[%s186 + $0x84] sm:$0xf]
      %v238 = vld [vmem:[%s186 + $0x88] sm:$0xf]
      %v239 = vld [vmem:[%s186 + $0x8c] sm:$0xf]
      %v240 = vld [vmem:[%s186 + $0x90] sm:$0xf]
      %v241 = vld [vmem:[%s186 + $0x94] sm:$0xf]
      %v242 = vld [vmem:[%s186 + $0x98] sm:$0xf]
      %v243 = vld [vmem:[%s186 + $0x9c] sm:$0xf]
      %v244 = vld [vmem:[%s186 + $0xa0] sm:$0xf]
      %v245 = vld [vmem:[%s186 + $0xa4] sm:$0xf]
      %v246 = vld [vmem:[%s186 + $0xa8] sm:$0xf]
      %v247 = vld [vmem:[%s186 + $0xac] sm:$0xf]
      %v248 = vld [vmem:[%s186 + $0xb0] sm:$0xf]
      %v249 = vld [vmem:[%s186 + $0xb4] sm:$0xf]
      %v250 = vld [vmem:[%s186 + $0xb8] sm:$0xf]
      %v251 = vld [vmem:[%s186 + $0xbc] sm:$0xf]
      %v252 = vld [vmem:[%s186 + $0xc0] sm:$0xf]
      %v253 = vld [vmem:[%s186 + $0xc4] sm:$0xf]
      %v254 = vld [vmem:[%s186 + $0xc8] sm:$0xf]
      %v255 = vld [vmem:[%s186 + $0xcc] sm:$0xf]
      %v256 = vld [vmem:[%s186 + $0xd0] sm:$0xf]
      %v257 = vld [vmem:[%s186 + $0xd4] sm:$0xf]
      %v258 = vld [vmem:[%s186 + $0xd8] sm:$0xf]
      %v259 = vld [vmem:[%s186 + $0xdc] sm:$0xf]
      %v260 = vld [vmem:[%s186 + $0xe0] sm:$0xf]
      %v261 = vld [vmem:[%s186 + $0xe4] sm:$0xf]
      %v262 = vld [vmem:[%s186 + $0xe8] sm:$0xf]
      %v263 = vld [vmem:[%s186 + $0xec] sm:$0xf]
      %v264 = vld [vmem:[%s186 + $0xf0] sm:$0xf]
      %v265 = vld [vmem:[%s186 + $0xf4] sm:$0xf]
      %v266 = vld [vmem:[%s186 + $0xf8] sm:$0xf]
      %v267 = vld [vmem:[%s186 + $0xfc] sm:$0xf]
      %v268 = vld [vmem:[%s192] sm:$0xf]
      %v269 = vld [vmem:[%s192 + $0x4] sm:$0xf]
      %v270 = vld [vmem:[%s192 + $0x8] sm:$0xf]
      %v271 = vld [vmem:[%s192 + $0xc] sm:$0xf]
      %v272 = vld [vmem:[%s192 + $0x10] sm:$0xf]
      %v273 = vld [vmem:[%s192 + $0x14] sm:$0xf]
      %v274 = vld [vmem:[%s192 + $0x18] sm:$0xf]
      %v275 = vld [vmem:[%s192 + $0x1c] sm:$0xf]
      %v276 = vld [vmem:[%s192 + $0x20] sm:$0xf]
      %v277 = vld [vmem:[%s192 + $0x24] sm:$0xf]
      %v278 = vld [vmem:[%s192 + $0x28] sm:$0xf]
      %v279 = vld [vmem:[%s192 + $0x2c] sm:$0xf]
      %v280 = vld [vmem:[%s192 + $0x30] sm:$0xf]
      %v281 = vld [vmem:[%s192 + $0x34] sm:$0xf]
      %v282 = vld [vmem:[%s192 + $0x38] sm:$0xf]
      %v283 = vld [vmem:[%s192 + $0x3c] sm:$0xf]
      %v348 = vunpack.c.l.b16 %v204
      %v349 = vunpack.c.l.b16 %v205
      %v350 = vunpack.c.l.b16 %v206
      %v351 = vunpack.c.l.b16 %v207
      %v352 = vunpack.c.l.b16 %v208
      %v353 = vunpack.c.l.b16 %v209
      %v354 = vunpack.c.l.b16 %v210
      %v355 = vunpack.c.l.b16 %v211
      %v356 = vunpack.c.l.b16 %v212
      %v357 = vunpack.c.l.b16 %v213
      %v358 = vunpack.c.l.b16 %v214
      %v359 = vunpack.c.l.b16 %v215
      %v360 = vunpack.c.l.b16 %v216
      %v361 = vunpack.c.l.b16 %v217
      %v362 = vunpack.c.l.b16 %v218
      %v363 = vunpack.c.l.b16 %v219
      %v364 = vunpack.c.l.b16 %v220
      %v365 = vunpack.c.l.b16 %v221
      %v366 = vunpack.c.l.b16 %v222
      %v367 = vunpack.c.l.b16 %v223
      %v368 = vunpack.c.l.b16 %v224
      %v369 = vunpack.c.l.b16 %v225
      %v370 = vunpack.c.l.b16 %v226
      %v371 = vunpack.c.l.b16 %v227
      %v372 = vunpack.c.l.b16 %v228
      %v373 = vunpack.c.l.b16 %v229
      %v374 = vunpack.c.l.b16 %v230
      %v375 = vunpack.c.l.b16 %v231
      %v376 = vunpack.c.l.b16 %v232
      %v377 = vunpack.c.l.b16 %v233
      %v378 = vunpack.c.l.b16 %v234
      %v379 = vunpack.c.l.b16 %v235
      %v380 = vunpack.c.l.b16 %v236
      %v381 = vunpack.c.l.b16 %v237
      %v382 = vunpack.c.l.b16 %v238
      %v383 = vunpack.c.l.b16 %v239
      %v384 = vunpack.c.l.b16 %v240
      %v385 = vunpack.c.l.b16 %v241
      %v386 = vunpack.c.l.b16 %v242
      %v387 = vunpack.c.l.b16 %v243
      %v388 = vunpack.c.l.b16 %v244
      %v389 = vunpack.c.l.b16 %v245
      %v390 = vunpack.c.l.b16 %v246
      %v391 = vunpack.c.l.b16 %v247
      %v392 = vunpack.c.l.b16 %v248
      %v393 = vunpack.c.l.b16 %v249
      %v394 = vunpack.c.l.b16 %v250
      %v395 = vunpack.c.l.b16 %v251
      %v396 = vunpack.c.l.b16 %v252
      %v397 = vunpack.c.l.b16 %v253
      %v398 = vunpack.c.l.b16 %v254
      %v399 = vunpack.c.l.b16 %v255
      %v400 = vunpack.c.l.b16 %v256
      %v401 = vunpack.c.l.b16 %v257
      %v402 = vunpack.c.l.b16 %v258
      %v403 = vunpack.c.l.b16 %v259
      %v404 = vunpack.c.l.b16 %v260
      %v405 = vunpack.c.l.b16 %v261
      %v406 = vunpack.c.l.b16 %v262
      %v407 = vunpack.c.l.b16 %v263
      %v408 = vunpack.c.l.b16 %v264
      %v409 = vunpack.c.l.b16 %v265
      %v410 = vunpack.c.l.b16 %v266
      %v411 = vunpack.c.l.b16 %v267
      %v412 = vpack.c.b16 %v349, %v348
      %v413 = vpack.c.b16 %v351, %v350
      %v414 = vpack.c.b16 %v353, %v352
      %v415 = vpack.c.b16 %v355, %v354
      %v416 = vpack.c.b16 %v357, %v356
      %v417 = vpack.c.b16 %v359, %v358
      %v418 = vpack.c.b16 %v361, %v360
      %v419 = vpack.c.b16 %v363, %v362
      %v420 = vpack.c.b16 %v365, %v364
      %v421 = vpack.c.b16 %v367, %v366
      %v422 = vpack.c.b16 %v369, %v368
      %v423 = vpack.c.b16 %v371, %v370
      %v424 = vpack.c.b16 %v373, %v372
      %v425 = vpack.c.b16 %v375, %v374
      %v426 = vpack.c.b16 %v377, %v376
      %v427 = vpack.c.b16 %v379, %v378
      %v428 = vpack.c.b16 %v381, %v380
      %v429 = vpack.c.b16 %v383, %v382
      %v430 = vpack.c.b16 %v385, %v384
      %v431 = vpack.c.b16 %v387, %v386
      %v432 = vpack.c.b16 %v389, %v388
      %v433 = vpack.c.b16 %v391, %v390
      %v434 = vpack.c.b16 %v393, %v392
      %v435 = vpack.c.b16 %v395, %v394
      %v436 = vpack.c.b16 %v397, %v396
      %v437 = vpack.c.b16 %v399, %v398
      %v438 = vpack.c.b16 %v401, %v400
      %v439 = vpack.c.b16 %v403, %v402
      %v440 = vpack.c.b16 %v405, %v404
      %v441 = vpack.c.b16 %v407, %v406
      %v442 = vpack.c.b16 %v409, %v408
      %v443 = vpack.c.b16 %v411, %v410
      %v492 = vunpack.c.l.b16 %v268
      %v493 = vunpack.c.l.b16 %v269
      %v494 = vunpack.c.l.b16 %v270
      %v495 = vunpack.c.l.b16 %v271
      %v496 = vunpack.c.l.b16 %v272
      %v497 = vunpack.c.l.b16 %v273
      %v498 = vunpack.c.l.b16 %v274
      %v499 = vunpack.c.l.b16 %v275
      %v500 = vunpack.c.l.b16 %v276
      %v501 = vunpack.c.l.b16 %v277
      %v502 = vunpack.c.l.b16 %v278
      %v503 = vunpack.c.l.b16 %v279
      %v504 = vunpack.c.l.b16 %v280
      %v505 = vunpack.c.l.b16 %v281
      %v506 = vunpack.c.l.b16 %v282
      %v507 = vunpack.c.l.b16 %v283
      %v508 = vpack.c.b16 %v493, %v492
      %v509 = vpack.c.b16 %v495, %v494
      %v510 = vpack.c.b16 %v497, %v496
      %v511 = vpack.c.b16 %v499, %v498
      %v512 = vpack.c.b16 %v501, %v500
      %v513 = vpack.c.b16 %v503, %v502
      %v514 = vpack.c.b16 %v505, %v504
      %v515 = vpack.c.b16 %v507, %v506
      %524 = vmatprep.subr.bf16.mxu0 0
      %525 = vmatpush1.bf16.msra.mxu0 %v515
      %526 = vmatprep.subr.bf16.mxu0 0
      %527 = vmatpush1.bf16.msra.mxu0 %v514
      %528 = vmatprep.subr.bf16.mxu0 0
      %529 = vmatpush1.bf16.msra.mxu0 %v513
      %530 = vmatprep.subr.bf16.mxu0 0
      %531 = vmatpush1.bf16.msra.mxu0 %v512
      %532 = vmatprep.subr.bf16.mxu0 0
      %533 = vmatpush1.bf16.msra.mxu0 %v511
      %534 = vmatprep.subr.bf16.mxu0 0
      %535 = vmatpush1.bf16.msra.mxu0 %v510
      %536 = vmatprep.subr.bf16.mxu0 0
      %537 = vmatpush1.bf16.msra.mxu0 %v509
      %538 = vmatprep.subr.bf16.mxu0 0
      %539 = vmatpush1.bf16.msra.mxu0 %v508
      %540 = vmatprep.subr.bf16.mxu0 0
      %541 = vmatpush2.bf16.msra.mxu0 0
      %542 = vmatprep.subr.bf16.mxu0 0
      %543 = vmatpush2.bf16.msra.mxu0 0
      %544 = vmatprep.subr.bf16.mxu0 0
      %545 = vmatpush2.bf16.msra.mxu0 0
      %546 = vmatprep.subr.bf16.mxu0 0
      %547 = vmatpush2.bf16.msra.mxu0 0
      %548 = vmatprep.subr.bf16.mxu0 0
      %549 = vmatpush2.bf16.msra.mxu0 0
      %550 = vmatprep.subr.bf16.mxu0 0
      %551 = vmatpush2.bf16.msra.mxu0 0
      %552 = vmatprep.subr.bf16.mxu0 0
      %553 = vmatpush2.bf16.msra.mxu0 0
      %554 = vmatprep.subr.bf16.mxu0 0
      %555 = vmatpush2.bf16.msra.mxu0 0
      %556 = vmatprep.mubr.bf16.mxu0 0
      %557 = vmatmul.mubr.bf16.gmra.mxu0 %v412
      %v558 = vpop.f32.mrf.mxu0
      %v559 = vadd.f32 0.0, %v558
      %v560 = vpop.f32.mrf.mxu0
      %v561 = vpop.f32.mrf.mxu0
      %v562 = vadd.f32 0.0, %v561
      %v563 = vpop.f32.mrf.mxu0
      %564 = vmatprep.mubr.bf16.mxu0 0
      %565 = vmatmul.mubr.bf16.gmra.mxu0 %v413
      %v566 = vpop.f32.mrf.mxu0
      %v567 = vadd.f32 0.0, %v566
      %v568 = vpop.f32.mrf.mxu0
      %v569 = vpop.f32.mrf.mxu0
      %v570 = vadd.f32 0.0, %v569
      %v571 = vpop.f32.mrf.mxu0
      %572 = vmatprep.mubr.bf16.mxu0 0
      %573 = vmatmul.mubr.bf16.gmra.mxu0 %v414
      %v574 = vpop.f32.mrf.mxu0
      %v575 = vadd.f32 0.0, %v574
      %v576 = vpop.f32.mrf.mxu0
      %v577 = vpop.f32.mrf.mxu0
      %v578 = vadd.f32 0.0, %v577
      %v579 = vpop.f32.mrf.mxu0
      %580 = vmatprep.mubr.bf16.mxu0 0
      %581 = vmatmul.mubr.bf16.gmra.mxu0 %v415
      %v582 = vpop.f32.mrf.mxu0
      %v583 = vadd.f32 0.0, %v582
      %v584 = vpop.f32.mrf.mxu0
      %v585 = vpop.f32.mrf.mxu0
      %v586 = vadd.f32 0.0, %v585
      %v587 = vpop.f32.mrf.mxu0
      %588 = vmatprep.mubr.bf16.mxu0 0
      %589 = vmatmul.mubr.bf16.gmra.mxu0 %v416
      %v590 = vpop.f32.mrf.mxu0
      %v591 = vadd.f32 0.0, %v590
      %v592 = vpop.f32.mrf.mxu0
      %v593 = vpop.f32.mrf.mxu0
      %v594 = vadd.f32 0.0, %v593
      %v595 = vpop.f32.mrf.mxu0
      %596 = vmatprep.mubr.bf16.mxu0 0
      %597 = vmatmul.mubr.bf16.gmra.mxu0 %v417
      %v598 = vpop.f32.mrf.mxu0
      %v599 = vadd.f32 0.0, %v598
      %v600 = vpop.f32.mrf.mxu0
      %v601 = vpop.f32.mrf.mxu0
      %v602 = vadd.f32 0.0, %v601
      %v603 = vpop.f32.mrf.mxu0
      %604 = vmatprep.mubr.bf16.mxu0 0
      %605 = vmatmul.mubr.bf16.gmra.mxu0 %v418
      %v606 = vpop.f32.mrf.mxu0
      %v607 = vadd.f32 0.0, %v606
      %v608 = vpop.f32.mrf.mxu0
      %v609 = vpop.f32.mrf.mxu0
      %v610 = vadd.f32 0.0, %v609
      %v611 = vpop.f32.mrf.mxu0
      %612 = vmatprep.mubr.bf16.mxu0 0
      %613 = vmatmul.mubr.bf16.gmra.mxu0 %v419
      %v614 = vpop.f32.mrf.mxu0
      %v615 = vadd.f32 0.0, %v614
      %v616 = vpop.f32.mrf.mxu0
      %v617 = vpop.f32.mrf.mxu0
      %v618 = vadd.f32 0.0, %v617
      %v619 = vpop.f32.mrf.mxu0
      %620 = vmatprep.mubr.bf16.mxu0 0
      %621 = vmatmul.mubr.bf16.gmra.mxu0 %v420
      %v622 = vpop.f32.mrf.mxu0
      %v623 = vadd.f32 0.0, %v622
      %v624 = vpop.f32.mrf.mxu0
      %v625 = vpop.f32.mrf.mxu0
      %v626 = vadd.f32 0.0, %v625
      %v627 = vpop.f32.mrf.mxu0
      %628 = vmatprep.mubr.bf16.mxu0 0
      %629 = vmatmul.mubr.bf16.gmra.mxu0 %v421
      %v630 = vpop.f32.mrf.mxu0
      %v631 = vadd.f32 0.0, %v630
      %v632 = vpop.f32.mrf.mxu0
      %v633 = vpop.f32.mrf.mxu0
      %v634 = vadd.f32 0.0, %v633
      %v635 = vpop.f32.mrf.mxu0
      %636 = vmatprep.mubr.bf16.mxu0 0
      %637 = vmatmul.mubr.bf16.gmra.mxu0 %v422
      %v638 = vpop.f32.mrf.mxu0
      %v639 = vadd.f32 0.0, %v638
      %v640 = vpop.f32.mrf.mxu0
      %v641 = vpop.f32.mrf.mxu0
      %v642 = vadd.f32 0.0, %v641
      %v643 = vpop.f32.mrf.mxu0
      %644 = vmatprep.mubr.bf16.mxu0 0
      %645 = vmatmul.mubr.bf16.gmra.mxu0 %v423
      %v646 = vpop.f32.mrf.mxu0
      %v647 = vadd.f32 0.0, %v646
      %v648 = vpop.f32.mrf.mxu0
      %v649 = vpop.f32.mrf.mxu0
      %v650 = vadd.f32 0.0, %v649
      %v651 = vpop.f32.mrf.mxu0
      %652 = vmatprep.mubr.bf16.mxu0 0
      %653 = vmatmul.mubr.bf16.gmra.mxu0 %v424
      %v654 = vpop.f32.mrf.mxu0
      %v655 = vadd.f32 0.0, %v654
      %v656 = vpop.f32.mrf.mxu0
      %v657 = vpop.f32.mrf.mxu0
      %v658 = vadd.f32 0.0, %v657
      %v659 = vpop.f32.mrf.mxu0
      %660 = vmatprep.mubr.bf16.mxu0 0
      %661 = vmatmul.mubr.bf16.gmra.mxu0 %v425
      %v662 = vpop.f32.mrf.mxu0
      %v663 = vadd.f32 0.0, %v662
      %v664 = vpop.f32.mrf.mxu0
      %v665 = vpop.f32.mrf.mxu0
      %v666 = vadd.f32 0.0, %v665
      %v667 = vpop.f32.mrf.mxu0
      %668 = vmatprep.mubr.bf16.mxu0 0
      %669 = vmatmul.mubr.bf16.gmra.mxu0 %v426
      %v670 = vpop.f32.mrf.mxu0
      %v671 = vadd.f32 0.0, %v670
      %v672 = vpop.f32.mrf.mxu0
      %v673 = vpop.f32.mrf.mxu0
      %v674 = vadd.f32 0.0, %v673
      %v675 = vpop.f32.mrf.mxu0
      %676 = vmatprep.mubr.bf16.mxu0 0
      %677 = vmatmul.mubr.bf16.gmra.mxu0 %v427
      %v678 = vpop.f32.mrf.mxu0
      %v679 = vadd.f32 0.0, %v678
      %v680 = vpop.f32.mrf.mxu0
      %v681 = vpop.f32.mrf.mxu0
      %v682 = vadd.f32 0.0, %v681
      %v683 = vpop.f32.mrf.mxu0
      %684 = vmatprep.mubr.bf16.mxu0 0
      %685 = vmatmul.mubr.bf16.gmra.mxu0 %v428
      %v686 = vpop.f32.mrf.mxu0
      %v687 = vadd.f32 0.0, %v686
      %v688 = vpop.f32.mrf.mxu0
      %v689 = vpop.f32.mrf.mxu0
      %v690 = vadd.f32 0.0, %v689
      %v691 = vpop.f32.mrf.mxu0
      %692 = vmatprep.mubr.bf16.mxu0 0
      %693 = vmatmul.mubr.bf16.gmra.mxu0 %v429
      %v694 = vpop.f32.mrf.mxu0
      %v695 = vadd.f32 0.0, %v694
      %v696 = vpop.f32.mrf.mxu0
      %v697 = vpop.f32.mrf.mxu0
      %v698 = vadd.f32 0.0, %v697
      %v699 = vpop.f32.mrf.mxu0
      %700 = vmatprep.mubr.bf16.mxu0 0
      %701 = vmatmul.mubr.bf16.gmra.mxu0 %v430
      %v702 = vpop.f32.mrf.mxu0
      %v703 = vadd.f32 0.0, %v702
      %v704 = vpop.f32.mrf.mxu0
      %v705 = vpop.f32.mrf.mxu0
      %v706 = vadd.f32 0.0, %v705
      %v707 = vpop.f32.mrf.mxu0
      %708 = vmatprep.mubr.bf16.mxu0 0
      %709 = vmatmul.mubr.bf16.gmra.mxu0 %v431
      %v710 = vpop.f32.mrf.mxu0
      %v711 = vadd.f32 0.0, %v710
      %v712 = vpop.f32.mrf.mxu0
      %v713 = vpop.f32.mrf.mxu0
      %v714 = vadd.f32 0.0, %v713
      %v715 = vpop.f32.mrf.mxu0
      %716 = vmatprep.mubr.bf16.mxu0 0
      %717 = vmatmul.mubr.bf16.gmra.mxu0 %v432
      %v718 = vpop.f32.mrf.mxu0
      %v719 = vadd.f32 0.0, %v718
      %v720 = vpop.f32.mrf.mxu0
      %v721 = vpop.f32.mrf.mxu0
      %v722 = vadd.f32 0.0, %v721
      %v723 = vpop.f32.mrf.mxu0
      %724 = vmatprep.mubr.bf16.mxu0 0
      %725 = vmatmul.mubr.bf16.gmra.mxu0 %v433
      %v726 = vpop.f32.mrf.mxu0
      %v727 = vadd.f32 0.0, %v726
      %v728 = vpop.f32.mrf.mxu0
      %v729 = vpop.f32.mrf.mxu0
      %v730 = vadd.f32 0.0, %v729
      %v731 = vpop.f32.mrf.mxu0
      %732 = vmatprep.mubr.bf16.mxu0 0
      %733 = vmatmul.mubr.bf16.gmra.mxu0 %v434
      %v734 = vpop.f32.mrf.mxu0
      %v735 = vadd.f32 0.0, %v734
      %v736 = vpop.f32.mrf.mxu0
      %v737 = vpop.f32.mrf.mxu0
      %v738 = vadd.f32 0.0, %v737
      %v739 = vpop.f32.mrf.mxu0
      %740 = vmatprep.mubr.bf16.mxu0 0
      %741 = vmatmul.mubr.bf16.gmra.mxu0 %v435
      %v742 = vpop.f32.mrf.mxu0
      %v743 = vadd.f32 0.0, %v742
      %v744 = vpop.f32.mrf.mxu0
      %v745 = vpop.f32.mrf.mxu0
      %v746 = vadd.f32 0.0, %v745
      %v747 = vpop.f32.mrf.mxu0
      %748 = vmatprep.mubr.bf16.mxu0 0
      %749 = vmatmul.mubr.bf16.gmra.mxu0 %v436
      %v750 = vpop.f32.mrf.mxu0
      %v751 = vadd.f32 0.0, %v750
      %v752 = vpop.f32.mrf.mxu0
      %v753 = vpop.f32.mrf.mxu0
      %v754 = vadd.f32 0.0, %v753
      %v755 = vpop.f32.mrf.mxu0
      %756 = vmatprep.mubr.bf16.mxu0 0
      %757 = vmatmul.mubr.bf16.gmra.mxu0 %v437
      %v758 = vpop.f32.mrf.mxu0
      %v759 = vadd.f32 0.0, %v758
      %v760 = vpop.f32.mrf.mxu0
      %v761 = vpop.f32.mrf.mxu0
      %v762 = vadd.f32 0.0, %v761
      %v763 = vpop.f32.mrf.mxu0
      %764 = vmatprep.mubr.bf16.mxu0 0
      %765 = vmatmul.mubr.bf16.gmra.mxu0 %v438
      %v766 = vpop.f32.mrf.mxu0
      %v767 = vadd.f32 0.0, %v766
      %v768 = vpop.f32.mrf.mxu0
      %v769 = vpop.f32.mrf.mxu0
      %v770 = vadd.f32 0.0, %v769
      %v771 = vpop.f32.mrf.mxu0
      %772 = vmatprep.mubr.bf16.mxu0 0
      %773 = vmatmul.mubr.bf16.gmra.mxu0 %v439
      %v774 = vpop.f32.mrf.mxu0
      %v775 = vadd.f32 0.0, %v774
      %v776 = vpop.f32.mrf.mxu0
      %v777 = vpop.f32.mrf.mxu0
      %v778 = vadd.f32 0.0, %v777
      %v779 = vpop.f32.mrf.mxu0
      %780 = vmatprep.mubr.bf16.mxu0 0
      %781 = vmatmul.mubr.bf16.gmra.mxu0 %v440
      %v782 = vpop.f32.mrf.mxu0
      %v783 = vadd.f32 0.0, %v782
      %v784 = vpop.f32.mrf.mxu0
      %v785 = vpop.f32.mrf.mxu0
      %v786 = vadd.f32 0.0, %v785
      %v787 = vpop.f32.mrf.mxu0
      %788 = vmatprep.mubr.bf16.mxu0 0
      %789 = vmatmul.mubr.bf16.gmra.mxu0 %v441
      %v790 = vpop.f32.mrf.mxu0
      %v791 = vadd.f32 0.0, %v790
      %v792 = vpop.f32.mrf.mxu0
      %v793 = vpop.f32.mrf.mxu0
      %v794 = vadd.f32 0.0, %v793
      %v795 = vpop.f32.mrf.mxu0
      %796 = vmatprep.mubr.bf16.mxu0 0
      %797 = vmatmul.mubr.bf16.gmra.mxu0 %v442
      %v798 = vpop.f32.mrf.mxu0
      %v799 = vadd.f32 0.0, %v798
      %v800 = vpop.f32.mrf.mxu0
      %v801 = vpop.f32.mrf.mxu0
      %v802 = vadd.f32 0.0, %v801
      %v803 = vpop.f32.mrf.mxu0
      %804 = vmatprep.mubr.bf16.mxu0 0
      %805 = vmatmul.mubr.bf16.gmra.mxu0 %v443
      %v806 = vpop.f32.mrf.mxu0
      %v807 = vadd.f32 0.0, %v806
      %v808 = vpop.f32.mrf.mxu0
      %v809 = vpop.f32.mrf.mxu0
      %v810 = vadd.f32 0.0, %v809
      %v811 = vpop.f32.mrf.mxu0
      %812 = vdwg.mxu0
      %v813 = vtanh.pop %v559
      %v814 = vtanh.pop %v562
      %v815 = vtanh.pop %v567
      %v816 = vtanh.pop %v570
      %v817 = vtanh.pop %v575
      %v818 = vtanh.pop %v578
      %v819 = vtanh.pop %v583
      %v820 = vtanh.pop %v586
      %v821 = vtanh.pop %v591
      %v822 = vtanh.pop %v594
      %v823 = vtanh.pop %v599
      %v824 = vtanh.pop %v602
      %v825 = vtanh.pop %v607
      %v826 = vtanh.pop %v610
      %v827 = vtanh.pop %v615
      %v828 = vtanh.pop %v618
      %v829 = vtanh.pop %v623
      %v830 = vtanh.pop %v626
      %v831 = vtanh.pop %v631
      %v832 = vtanh.pop %v634
      %v833 = vtanh.pop %v639
      %v834 = vtanh.pop %v642
      %v835 = vtanh.pop %v647
      %v836 = vtanh.pop %v650
      %v837 = vtanh.pop %v655
      %v838 = vtanh.pop %v658
      %v839 = vtanh.pop %v663
      %v840 = vtanh.pop %v666
      %v841 = vtanh.pop %v671
      %v842 = vtanh.pop %v674
      %v843 = vtanh.pop %v679
      %v844 = vtanh.pop %v682
      %v845 = vtanh.pop %v687
      %v846 = vtanh.pop %v690
      %v847 = vtanh.pop %v695
      %v848 = vtanh.pop %v698
      %v849 = vtanh.pop %v703
      %v850 = vtanh.pop %v706
      %v851 = vtanh.pop %v711
      %v852 = vtanh.pop %v714
      %v853 = vtanh.pop %v719
      %v854 = vtanh.pop %v722
      %v855 = vtanh.pop %v727
      %v856 = vtanh.pop %v730
      %v857 = vtanh.pop %v735
      %v858 = vtanh.pop %v738
      %v859 = vtanh.pop %v743
      %v860 = vtanh.pop %v746
      %v861 = vtanh.pop %v751
      %v862 = vtanh.pop %v754
      %v863 = vtanh.pop %v759
      %v864 = vtanh.pop %v762
      %v865 = vtanh.pop %v767
      %v866 = vtanh.pop %v770
      %v867 = vtanh.pop %v775
      %v868 = vtanh.pop %v778
      %v869 = vtanh.pop %v783
      %v870 = vtanh.pop %v786
      %v871 = vtanh.pop %v791
      %v872 = vtanh.pop %v794
      %v873 = vtanh.pop %v799
      %v874 = vtanh.pop %v802
      %v875 = vtanh.pop %v807
      %v876 = vtanh.pop %v810
      %877 = vst [vmem:[%s201] sm:$0xff] %v813
      %878 = vst [vmem:[%s201 + $0x8] sm:$0xff] %v814
      %879 = vst [vmem:[%s201 + $0x10] sm:$0xff] %v815
      %880 = vst [vmem:[%s201 + $0x18] sm:$0xff] %v816
      %881 = vst [vmem:[%s201 + $0x20] sm:$0xff] %v817
      %882 = vst [vmem:[%s201 + $0x28] sm:$0xff] %v818
      %883 = vst [vmem:[%s201 + $0x30] sm:$0xff] %v819
      %884 = vst [vmem:[%s201 + $0x38] sm:$0xff] %v820
      %885 = vst [vmem:[%s201 + $0x40] sm:$0xff] %v821
      %886 = vst [vmem:[%s201 + $0x48] sm:$0xff] %v822
      %887 = vst [vmem:[%s201 + $0x50] sm:$0xff] %v823
      %888 = vst [vmem:[%s201 + $0x58] sm:$0xff] %v824
      %889 = vst [vmem:[%s201 + $0x60] sm:$0xff] %v825
      %890 = vst [vmem:[%s201 + $0x68] sm:$0xff] %v826
      %891 = vst [vmem:[%s201 + $0x70] sm:$0xff] %v827
      %892 = vst [vmem:[%s201 + $0x78] sm:$0xff] %v828
      %893 = vst [vmem:[%s201 + $0x80] sm:$0xff] %v829
      %894 = vst [vmem:[%s201 + $0x88] sm:$0xff] %v830
      %895 = vst [vmem:[%s201 + $0x90] sm:$0xff] %v831
      %896 = vst [vmem:[%s201 + $0x98] sm:$0xff] %v832
      %897 = vst [vmem:[%s201 + $0xa0] sm:$0xff] %v833
      %898 = vst [vmem:[%s201 + $0xa8] sm:$0xff] %v834
      %899 = vst [vmem:[%s201 + $0xb0] sm:$0xff] %v835
      %900 = vst [vmem:[%s201 + $0xb8] sm:$0xff] %v836
      %901 = vst [vmem:[%s201 + $0xc0] sm:$0xff] %v837
      %902 = vst [vmem:[%s201 + $0xc8] sm:$0xff] %v838
      %903 = vst [vmem:[%s201 + $0xd0] sm:$0xff] %v839
      %904 = vst [vmem:[%s201 + $0xd8] sm:$0xff] %v840
      %905 = vst [vmem:[%s201 + $0xe0] sm:$0xff] %v841
      %906 = vst [vmem:[%s201 + $0xe8] sm:$0xff] %v842
      %907 = vst [vmem:[%s201 + $0xf0] sm:$0xff] %v843
      %908 = vst [vmem:[%s201 + $0xf8] sm:$0xff] %v844
      %909 = vst [vmem:[%s201 + $0x100] sm:$0xff] %v845
      %910 = vst [vmem:[%s201 + $0x108] sm:$0xff] %v846
      %911 = vst [vmem:[%s201 + $0x110] sm:$0xff] %v847
      %912 = vst [vmem:[%s201 + $0x118] sm:$0xff] %v848
      %913 = vst [vmem:[%s201 + $0x120] sm:$0xff] %v849
      %914 = vst [vmem:[%s201 + $0x128] sm:$0xff] %v850
      %915 = vst [vmem:[%s201 + $0x130] sm:$0xff] %v851
      %916 = vst [vmem:[%s201 + $0x138] sm:$0xff] %v852
      %917 = vst [vmem:[%s201 + $0x140] sm:$0xff] %v853
      %918 = vst [vmem:[%s201 + $0x148] sm:$0xff] %v854
      %919 = vst [vmem:[%s201 + $0x150] sm:$0xff] %v855
      %920 = vst [vmem:[%s201 + $0x158] sm:$0xff] %v856
      %921 = vst [vmem:[%s201 + $0x160] sm:$0xff] %v857
      %922 = vst [vmem:[%s201 + $0x168] sm:$0xff] %v858
      %923 = vst [vmem:[%s201 + $0x170] sm:$0xff] %v859
      %924 = vst [vmem:[%s201 + $0x178] sm:$0xff] %v860
      %925 = vst [vmem:[%s201 + $0x180] sm:$0xff] %v861
      %926 = vst [vmem:[%s201 + $0x188] sm:$0xff] %v862
      %927 = vst [vmem:[%s201 + $0x190] sm:$0xff] %v863
      %928 = vst [vmem:[%s201 + $0x198] sm:$0xff] %v864
      %929 = vst [vmem:[%s201 + $0x1a0] sm:$0xff] %v865
      %930 = vst [vmem:[%s201 + $0x1a8] sm:$0xff] %v866
      %931 = vst [vmem:[%s201 + $0x1b0] sm:$0xff] %v867
      %932 = vst [vmem:[%s201 + $0x1b8] sm:$0xff] %v868
      %933 = vst [vmem:[%s201 + $0x1c0] sm:$0xff] %v869
      %934 = vst [vmem:[%s201 + $0x1c8] sm:$0xff] %v870
      %935 = vst [vmem:[%s201 + $0x1d0] sm:$0xff] %v871
      %936 = vst [vmem:[%s201 + $0x1d8] sm:$0xff] %v872
      %937 = vst [vmem:[%s201 + $0x1e0] sm:$0xff] %v873
      %938 = vst [vmem:[%s201 + $0x1e8] sm:$0xff] %v874
      %939 = vst [vmem:[%s201 + $0x1f0] sm:$0xff] %v875
      %940 = vst [vmem:[%s201 + $0x1f8] sm:$0xff] %v876
      %s941 = smul.u32 64, %s18
      %p942 = scmp.lt.s32.totalorder %s17, 3
      %s943 = scalar_select %p942, %s17, 3
      %p944 = scmp.lt.s32.totalorder %s941, 63
      %s945 = scalar_select %p944, %s941, 63
      %s946 = smul.addr %s943, 64
      %s947 = sadd.s32 %s945, %s946
      %s948 = smul.addr %s947, 8
      %s949 = scalar_lea.vmem %s2, %s948
      // Predicated region
      $region29: #{_lambda_.17} parent=27 // pred_check
        %p950 = pneg %p99
      $region30: #{_lambda_.17} parent=27 // pred_check_branch
        %952 = sbr.rel (%p950) target = $region32
      $region31: #{_lambda_.17} parent=27 // pred_region
        %s953 = smul.u32 64, %s18
      $region32: #{_lambda_.17} parent=27 // pred_fallthru
        _
    $region28: #{_lambda_.17} parent=5 // pred_fallthru
      _
    %p954 = scmp.le.s32.totalorder 2, %s8
    // Predicated region
    $region33: #{_lambda_.17} parent=5 // pred_check
      %p955 = pneg %p954
    $region34: #{_lambda_.17} parent=5 // pred_check_branch
      %957 = sbr.rel (%p955) target = $region36
    $region35: #{_lambda_.17} parent=5 // pred_region
      %s958 = ssub.s32 %s8, 2
      // Predicated region
      $region37: #{_lambda_.17} parent=35 // pred_check
        %p959 = pneg %p105
      $region38: #{_lambda_.17} parent=35 // pred_check_branch
        %961 = sbr.rel (%p959) target = $region40
      $region39: #{_lambda_.17} parent=35 // pred_region
        %s962 = smul.u32 64, %s20
        %p963 = scmp.lt.s32.totalorder %s19, 3
        %s964 = scalar_select %p963, %s19, 3
        %p965 = scmp.lt.s32.totalorder %s962, 63
        %s966 = scalar_select %p965, %s962, 63
        %s967 = smul.addr %s964, 64
        %s968 = sadd.s32 %s966, %s967
        %s969 = smul.addr %s968, 8
        %s970 = scalar_lea.vmem %s2, %s969
      $region40: #{_lambda_.17} parent=35 // pred_fallthru
        _
    $region36: #{_lambda_.17} parent=5 // pred_fallthru
      _
  $region6: #{_lambda_.17} parent=0 // loop_footer
    %s12 = sadd.s32 1, %s8
  $region7: #{_lambda_.17} parent=0 // loop_footer_branch
    %7 = sbr.rel target = $region3
  $region8: #{_lambda_.17} parent=0 // loop_exit
    _

</llo_original>
